<compile_context>
chip_gen: v5e
topology: v5e:2x2
jax: 0.10.0
libtpu: 0.0.40
codegen_flags: <defaults>
</compile_context>

<pallas_src>
import functools

import jax
import jax.numpy as jnp
from jax.experimental import pallas as pl
from jax.experimental.pallas import tpu as pltpu


def _gelu_tanh(x):
    # TODO(synk): nn.GELU() defaults to the exact erf form; erf lowering on Mosaic is not
    # guaranteed, so the tanh approximation (max abs deviation ~1e-3) is used instead.
    c = 0.7978845608028654  # sqrt(2/pi)
    return 0.5 * x * (1.0 + jnp.tanh(c * (x + 0.044715 * x * x * x)))


# -----------------------------------------------------------------------------
# Fused LeFF kernel (one grid step = one image).
#   x_ref   : (1, L, Cin)  bf16   tokens for this image
#   w1_ref  : (Cin, Ch)    bf16   fc1 weight          b1_ref : (1, Ch)  f32
#   wct_ref : (9, Ch)      f32    depthwise taps      bc_ref : (1, Ch)  f32
#   w2_ref  : (Ch, Cout)   bf16   fc2 weight          b2_ref : (1, Cout) f32
#   o_ref   : (1, L, Cout) f32
#   hp_ref  : (2*guard + L, Ch) f32 VMEM scratch, zero guard rows top & bottom
# -----------------------------------------------------------------------------
def _leff_kernel(x_ref, w1_ref, b1_ref, wct_ref, bc_ref, w2_ref, b2_ref,
                 o_ref, hp_ref, *, H, W, guard):
    L = H * W
    c_hid = hp_ref.shape[1]

    # ---- fc1 : (L, Cin) @ (Cin, Ch) on the MXU (bf16 in, f32 accumulate) ----
    h = jnp.dot(x_ref[0], w1_ref[...], preferred_element_type=jnp.float32)
    h = h + b1_ref[...]

    # ---- stage hidden feature map in the zero-guarded scratch ---------------
    # guard >= W and guard % 8 == 0: the data store is sublane-aligned and the
    # +/-W row-band reads below land in zeroed guard rows at the image borders.
    # NOTE: per-step zeroing is required - with "parallel" grid semantics a core
    # may start at n > 0 and would otherwise read stale VMEM from the guards.
    zeros_guard = jnp.zeros((guard, c_hid), jnp.float32)
    hp_ref[pl.ds(0, guard), :] = zeros_guard
    hp_ref[pl.ds(guard + L, guard), :] = zeros_guard
    hp_ref[pl.ds(guard, L), :] = h

    # ---- in-kernel column-wrap masks (no DMA, a couple of VPU ops) ----------
    if (W & (W - 1)) == 0:  # power-of-two width: col = token & (W-1)
        col = jax.lax.broadcasted_iota(jnp.int32, (L, 1), 0) & (W - 1)
        m_left = (col >= 1).astype(jnp.float32)
        m_right = (col <= W - 2).astype(jnp.float32)
    else:                    # general width: float divide + floor (exact for small ints)
        idx = jax.lax.broadcasted_iota(jnp.float32, (L, 1), 0)
        col = idx - float(W) * jnp.floor(idx / float(W))
        m_left = (col >= 0.5).astype(jnp.float32)
        m_right = (col <= float(W) - 1.5).astype(jnp.float32)

    # ---- depthwise 3x3 "same" conv: 3 aligned row-bands + sublane rolls ------
    # Band oh: band[l] = h[l + oh*W] (guard rows supply the top/bottom zeros).
    # ow = -1 tap reads band[l-1] -> roll(band, +1);  ow = +1 reads band[l+1] -> roll(band, L-1).
    # The single wrapped row of each roll lands on a column the mask zeroes anyway.
    w_taps = wct_ref[...]                     # (9, Ch), hoisted single read
    acc = jnp.zeros((L, c_hid), jnp.float32) + bc_ref[...]
    h_res = None
    for oh in (-1, 0, 1):
        band = hp_ref[pl.ds(guard + oh * W, L), :]   # aligned when W % 8 == 0
        if oh == 0:
            h_res = band                              # reuse center band as the residual
        left = pltpu.roll(band, 1, 0)                 # T[l] = band[l-1]   (ow = -1)
        right = pltpu.roll(band, L - 1, 0)            # T[l] = band[l+1]   (ow = +1)
        k = (oh + 1) * 3
        acc = acc + (m_left * left) * w_taps[k + 0, :]
        acc = acc + band * w_taps[k + 1, :]
        acc = acc + (m_right * right) * w_taps[k + 2, :]

    # ---- residual + GELU (f32) + fc2 (bf16 MXU) -------------------------------
    y = _gelu_tanh(acc + h_res)
    o_ref[0] = (jnp.dot(y.astype(jnp.bfloat16), w2_ref[...],
                        preferred_element_type=jnp.float32)
                + b2_ref[...]).astype(o_ref.dtype)


def leff_forward(x_nlc, hw_shape, params):
    """LeFF forward.  x_nlc: (N, L, Cin) float32, L == H*W."""
    H, W = hw_shape
    N, L, c_in = x_nlc.shape
    assert L == H * W, "seq_len does not match H, W"
    assert W >= 2, "image width must be >= 2"
    assert L % 8 == 0, "token count must be a multiple of 8"
    # Best performance when W % 8 == 0 (keeps the +/-W band reads sublane-aligned).
    w1, b1, wc, bc, w2, b2 = params
    c_hid = w1.shape[1]
    c_out = w2.shape[1]

    guard = ((W + 7) // 8) * 8   # 8-aligned zero-guard rows, >= W

    # (Ch,1,3,3) -> (9, Ch): row kh*3+kw holds the per-channel tap (kh, kw).
    wc_taps = jnp.transpose(wc[:, 0, :, :], (1, 2, 0)).reshape(9, c_hid).astype(jnp.float32)

    # bf16 MXU operands (in production the caller provides these pre-cast).
    x_bf = x_nlc.astype(jnp.bfloat16)
    w1_bf = w1.astype(jnp.bfloat16)
    w2_bf = w2.astype(jnp.bfloat16)

    kernel = functools.partial(_leff_kernel, H=H, W=W, guard=guard)

    # TODO(synk): single-buffer the constant-index weight/bias blocks
    # (pipeline_mode=pl.Buffered(1)) once that attribute is reliably honoured by the
    # classic pallas_call TPU pipeline; it halves weight-side VMEM for free.
    # TODO(synk): for production L, add an L-strip grid axis (strip a multiple of W and 8)
    # with a W-row halo in the x block / scratch, sized so scratch + ~3 live (strip,Ch)
    # f32 temporaries + double-buffered x/out blocks stay under ~48 MiB on v7x.
    return pl.pallas_call(
        kernel,
        out_shape=jax.ShapeDtypeStruct((N, L, c_out), jnp.float32),
        grid_spec=pltpu.PrefetchScalarGridSpec(
            num_scalar_prefetch=0,
            grid=(N,),
            in_specs=[
                pl.BlockSpec((1, L, c_in), lambda n: (n, 0, 0)),
                pl.BlockSpec((c_in, c_hid), lambda n: (0, 0)),
                pl.BlockSpec((1, c_hid), lambda n: (0, 0)),
                pl.BlockSpec((9, c_hid), lambda n: (0, 0)),
                pl.BlockSpec((1, c_hid), lambda n: (0, 0)),
                pl.BlockSpec((c_hid, c_out), lambda n: (0, 0)),
                pl.BlockSpec((1, c_out), lambda n: (0, 0)),
            ],
            out_specs=pl.BlockSpec((1, L, c_out), lambda n: (n, 0, 0)),
            scratch_shapes=[pltpu.VMEM((L + 2 * guard, c_hid), jnp.float32)],
        ),
        compiler_params=pltpu.CompilerParams(
            dimension_semantics=("parallel",),
            vmem_limit_bytes=48 * 1024 * 1024),
    )(x_bf, w1_bf, b1.reshape(1, c_hid).astype(jnp.float32), wc_taps,
      bc.reshape(1, c_hid).astype(jnp.float32), w2_bf,
      b2.reshape(1, c_out).astype(jnp.float32))


# -----------------------------------------------------------------------------
# Deterministic parameters + pure-JAX references.
#   mxu_bf16=True  : mirrors the kernel's bf16 MXU-operand rounding (structural check)
#   mxu_bf16=False : full-f32 LeFF semantics with the same tanh-approx GELU (dropout p=0)
# -----------------------------------------------------------------------------
def init_params(key, c_in, c_hid, c_out):
    ks = jax.random.split(key, 6)
    w1 = jax.random.normal(ks[0], (c_in, c_hid), jnp.float32) * 0.1
    b1 = jax.random.normal(ks[1], (c_hid,), jnp.float32) * 0.1
    wc = jax.random.normal(ks[2], (c_hid, 1, 3, 3), jnp.float32) * 0.1
    bc = jax.random.normal(ks[3], (c_hid,), jnp.float32) * 0.1
    w2 = jax.random.normal(ks[4], (c_hid, c_out), jnp.float32) * 0.1
    b2 = jax.random.normal(ks[5], (c_out,), jnp.float32) * 0.1
    return (w1, b1, wc, bc, w2, b2)


def _ref_forward(x_nlc, hw_shape, params, *, mxu_bf16=False):
    H, W = hw_shape
    N, L, _ = x_nlc.shape
    w1, b1, wc, bc, w2, b2 = params
    c_hid = w1.shape[1]
    if mxu_bf16:
        xm, w1m, w2m = (x_nlc.astype(jnp.bfloat16), w1.astype(jnp.bfloat16),
                        w2.astype(jnp.bfloat16))
    else:
        xm, w1m, w2m = x_nlc, w1, w2
    h = jnp.einsum("nlc,cd->nld", xm, w1m,
                   preferred_element_type=jnp.float32) + b1                   # fc1
    hc = jnp.transpose(h, (0, 2, 1)).reshape(N, c_hid, H, W)                  # nlc -> nchw
    conv = jax.lax.conv_general_dilated(
        hc, wc, window_strides=(1, 1), padding=[(1, 1), (1, 1)],
        feature_group_count=c_hid,
        dimension_numbers=("NCHW", "OIHW", "NCHW")) + bc[None, :, None, None]
    conv = jnp.transpose(conv.reshape(N, c_hid, L), (0, 2, 1))                # nchw -> nlc
    y = _gelu_tanh(conv + h)                                                  # residual + act
    if mxu_bf16:
        y = y.astype(jnp.bfloat16)
    return jnp.einsum("nld,do->nlo", y, w2m,
                      preferred_element_type=jnp.float32) + b2                # fc2


if __name__ == "__main__":
    key = jax.random.PRNGKey(0)
    kx, kp = jax.random.split(key)

    # LeFF: batch=2, tokens = 16x16 = 256.  Channel dims chosen >= 128 so every
    # block's last dim is lane-dense (full 128-lane vregs, unmasked stores).
    N, H, W = 2, 16, 16
    C_IN, C_HID, C_OUT = 128, 256, 128
    L = H * W

    x = jax.random.normal(kx, (N, L, C_IN), jnp.float32)
    params = init_params(kp, C_IN, C_HID, C_OUT)

    y = leff_forward(x, (H, W), params)
    y = jax.block_until_ready(y)
    assert y.shape == (N, L, C_OUT), y.shape

    # Structural check: reference reproducing the kernel's bf16 MXU-operand rounding.
    y_match = _ref_forward(x, (H, W), params, mxu_bf16=True)
    err_match = float(jnp.max(jnp.abs(y - y_match)))
    assert jnp.allclose(y, y_match, atol=2e-2, rtol=2e-2), \
        f"mismatch vs bf16-matched reference, max_abs_err={err_match}"

    # Semantic check: full-f32 LeFF reference (only bf16 rounding should differ).
    y_f32 = _ref_forward(x, (H, W), params, mxu_bf16=False)
    err_f32 = float(jnp.max(jnp.abs(y - y_f32)))
    assert jnp.allclose(y, y_f32, atol=1.5e-1, rtol=5e-2), \
        f"mismatch vs f32 reference, max_abs_err={err_f32}"

    print("KERNEL_OK")
</pallas_src>

<mosaic_0001>
module attributes {stable_mosaic.version = 11 : i64} {
  func.func @_leff_kernel(%arg0: i32, %arg1: memref<1x256x128xbf16, #tpu.memory_space<vmem>>, %arg2: memref<128x256xbf16, #tpu.memory_space<vmem>>, %arg3: memref<1x256xf32, #tpu.memory_space<vmem>>, %arg4: memref<9x256xf32, #tpu.memory_space<vmem>>, %arg5: memref<1x256xf32, #tpu.memory_space<vmem>>, %arg6: memref<256x128xbf16, #tpu.memory_space<vmem>>, %arg7: memref<1x128xf32, #tpu.memory_space<vmem>>, %arg8: memref<1x256x128xf32, #tpu.memory_space<vmem>>, %arg9: memref<288x256xf32, #tpu.memory_space<vmem>>) attributes {dimension_semantics = [#tpu.dimension_semantics<parallel>], iteration_bounds = array<i64: 2>, scalar_prefetch = 0 : i64, scratch_operands = 1 : i64, tpu.core_type = #tpu.core_type<tc>, window_params = [{transform_indices = @transform_0, window_bounds = array<i64: 1, 256, 128>}, {pipeline_mode = #tpu.pipeline_mode<synchronous>, transform_indices = @transform_1, window_bounds = array<i64: 128, 256>}, {pipeline_mode = #tpu.pipeline_mode<synchronous>, transform_indices = @transform_2, window_bounds = array<i64: 1, 256>}, {pipeline_mode = #tpu.pipeline_mode<synchronous>, transform_indices = @transform_3, window_bounds = array<i64: 9, 256>}, {pipeline_mode = #tpu.pipeline_mode<synchronous>, transform_indices = @transform_4, window_bounds = array<i64: 1, 256>}, {pipeline_mode = #tpu.pipeline_mode<synchronous>, transform_indices = @transform_5, window_bounds = array<i64: 256, 128>}, {pipeline_mode = #tpu.pipeline_mode<synchronous>, transform_indices = @transform_6, window_bounds = array<i64: 1, 128>}, {transform_indices = @transform_7, window_bounds = array<i64: 1, 256, 128>}]} {
    %c0 = arith.constant 0 : index
    %c0_0 = arith.constant 0 : index
    %c0_1 = arith.constant 0 : index
    %0 = vector.load %arg1[%c0, %c0_0, %c0_1] : memref<1x256x128xbf16, #tpu.memory_space<vmem>>, vector<1x256x128xbf16>
    %1 = vector.shape_cast %0 : vector<1x256x128xbf16> to vector<256x128xbf16>
    %c0_2 = arith.constant 0 : index
    %c0_3 = arith.constant 0 : index
    %2 = vector.load %arg2[%c0_2, %c0_3] : memref<128x256xbf16, #tpu.memory_space<vmem>>, vector<128x256xbf16>
    %cst = arith.constant dense<0.000000e+00> : vector<256x256xf32>
    %3 = tpu.matmul %1, %2, %cst {dimension_numbers = #tpu.dot_dimension_numbers<[1], [0], [0], [1], [0, 0, 1, 1], [], []>} : vector<256x128xbf16>, vector<128x256xbf16>, vector<256x256xf32> -> vector<256x256xf32>
    %c0_4 = arith.constant 0 : index
    %c0_5 = arith.constant 0 : index
    %4 = vector.load %arg3[%c0_4, %c0_5] : memref<1x256xf32, #tpu.memory_space<vmem>>, vector<1x256xf32>
    %5 = vector.broadcast %4 : vector<1x256xf32> to vector<256x256xf32>
    %6 = arith.addf %3, %5 : vector<256x256xf32>
    %cst_6 = arith.constant 0.000000e+00 : f32
    %7 = vector.broadcast %cst_6 : f32 to vector<16x256xf32>
    %c0_7 = arith.constant 0 : index
    %c0_8 = arith.constant 0 : index
    %8 = vector.load %arg9[%c0_7, %c0_8] : memref<288x256xf32, #tpu.memory_space<vmem>>, vector<16x256xf32>
    tpu.vector_store %arg9[%c0_7, %c0_8], %7 {strides = array<i32>} : memref<288x256xf32, #tpu.memory_space<vmem>>, vector<16x256xf32>,
    %c272 = arith.constant 272 : index
    %c0_9 = arith.constant 0 : index
    %9 = vector.load %arg9[%c272, %c0_9] : memref<288x256xf32, #tpu.memory_space<vmem>>, vector<16x256xf32>
    tpu.vector_store %arg9[%c272, %c0_9], %7 {strides = array<i32>} : memref<288x256xf32, #tpu.memory_space<vmem>>, vector<16x256xf32>,
    %c16 = arith.constant 16 : index
    %c0_10 = arith.constant 0 : index
    %10 = vector.load %arg9[%c16, %c0_10] : memref<288x256xf32, #tpu.memory_space<vmem>>, vector<256x256xf32>
    tpu.vector_store %arg9[%c16, %c0_10], %6 {strides = array<i32>} : memref<288x256xf32, #tpu.memory_space<vmem>>, vector<256x256xf32>,
    %11 = tpu.iota {dimensions = array<i32: 0>} : vector<256x1xi32>
    %c15_i32 = arith.constant 15 : i32
    %12 = vector.broadcast %c15_i32 : i32 to vector<256x1xi32>
    %13 = arith.andi %11, %12 : vector<256x1xi32>
    %c1_i32 = arith.constant 1 : i32
    %14 = vector.broadcast %c1_i32 : i32 to vector<256x1xi32>
    %15 = arith.cmpi sge, %13, %14 : vector<256x1xi32>
    %16 = arith.extui %15 : vector<256x1xi1> to vector<256x1xi32>
    %17 = arith.sitofp %16 : vector<256x1xi32> to vector<256x1xf32>
    %c14_i32 = arith.constant 14 : i32
    %18 = vector.broadcast %c14_i32 : i32 to vector<256x1xi32>
    %19 = arith.cmpi sle, %13, %18 : vector<256x1xi32>
    %20 = arith.extui %19 : vector<256x1xi1> to vector<256x1xi32>
    %21 = arith.sitofp %20 : vector<256x1xi32> to vector<256x1xf32>
    %c0_11 = arith.constant 0 : index
    %c0_12 = arith.constant 0 : index
    %22 = vector.load %arg4[%c0_11, %c0_12] : memref<9x256xf32, #tpu.memory_space<vmem>>, vector<9x256xf32>
    %cst_13 = arith.constant 0.000000e+00 : f32
    %23 = vector.broadcast %cst_13 : f32 to vector<256x256xf32>
    %c0_14 = arith.constant 0 : index
    %c0_15 = arith.constant 0 : index
    %24 = vector.load %arg5[%c0_14, %c0_15] : memref<1x256xf32, #tpu.memory_space<vmem>>, vector<1x256xf32>
    %25 = vector.broadcast %24 : vector<1x256xf32> to vector<256x256xf32>
    %26 = arith.addf %23, %25 : vector<256x256xf32>
    %c0_16 = arith.constant 0 : index
    %c0_17 = arith.constant 0 : index
    %27 = vector.load %arg9[%c0_16, %c0_17] : memref<288x256xf32, #tpu.memory_space<vmem>>, vector<256x256xf32>
    %c1_i32_18 = arith.constant 1 : i32
    %28 = tpu.dynamic_rotate %27 by %c1_i32_18 dim 0 : vector<256x256xf32>, i32 -> vector<256x256xf32>
    %c255_i32 = arith.constant 255 : i32
    %29 = tpu.dynamic_rotate %27 by %c255_i32 dim 0 : vector<256x256xf32>, i32 -> vector<256x256xf32>
    %30 = vector.broadcast %17 : vector<256x1xf32> to vector<256x256xf32>
    %31 = arith.mulf %30, %28 : vector<256x256xf32>
    %32 = vector.extract_strided_slice %22 {offsets = [0, 0], sizes = [1, 256], strides = [1, 1]} : vector<9x256xf32> to vector<1x256xf32>
    %33 = vector.shape_cast %32 : vector<1x256xf32> to vector<256xf32>
    %34 = vector.shape_cast %33 : vector<256xf32> to vector<1x256xf32>
    %35 = vector.broadcast %34 : vector<1x256xf32> to vector<256x256xf32>
    %36 = arith.mulf %31, %35 : vector<256x256xf32>
    %37 = arith.addf %26, %36 : vector<256x256xf32>
    %38 = vector.extract_strided_slice %22 {offsets = [1, 0], sizes = [1, 256], strides = [1, 1]} : vector<9x256xf32> to vector<1x256xf32>
    %39 = vector.shape_cast %38 : vector<1x256xf32> to vector<256xf32>
    %40 = vector.shape_cast %39 : vector<256xf32> to vector<1x256xf32>
    %41 = vector.broadcast %40 : vector<1x256xf32> to vector<256x256xf32>
    %42 = arith.mulf %27, %41 : vector<256x256xf32>
    %43 = arith.addf %37, %42 : vector<256x256xf32>
    %44 = vector.broadcast %21 : vector<256x1xf32> to vector<256x256xf32>
    %45 = arith.mulf %44, %29 : vector<256x256xf32>
    %46 = vector.extract_strided_slice %22 {offsets = [2, 0], sizes = [1, 256], strides = [1, 1]} : vector<9x256xf32> to vector<1x256xf32>
    %47 = vector.shape_cast %46 : vector<1x256xf32> to vector<256xf32>
    %48 = vector.shape_cast %47 : vector<256xf32> to vector<1x256xf32>
    %49 = vector.broadcast %48 : vector<1x256xf32> to vector<256x256xf32>
    %50 = arith.mulf %45, %49 : vector<256x256xf32>
    %51 = arith.addf %43, %50 : vector<256x256xf32>
    %c16_19 = arith.constant 16 : index
    %c0_20 = arith.constant 0 : index
    %52 = vector.load %arg9[%c16_19, %c0_20] : memref<288x256xf32, #tpu.memory_space<vmem>>, vector<256x256xf32>
    %c1_i32_21 = arith.constant 1 : i32
    %53 = tpu.dynamic_rotate %52 by %c1_i32_21 dim 0 : vector<256x256xf32>, i32 -> vector<256x256xf32>
    %c255_i32_22 = arith.constant 255 : i32
    %54 = tpu.dynamic_rotate %52 by %c255_i32_22 dim 0 : vector<256x256xf32>, i32 -> vector<256x256xf32>
    %55 = vector.broadcast %17 : vector<256x1xf32> to vector<256x256xf32>
    %56 = arith.mulf %55, %53 : vector<256x256xf32>
    %57 = vector.extract_strided_slice %22 {offsets = [3, 0], sizes = [1, 256], strides = [1, 1]} : vector<9x256xf32> to vector<1x256xf32>
    %58 = vector.shape_cast %57 : vector<1x256xf32> to vector<256xf32>
    %59 = vector.shape_cast %58 : vector<256xf32> to vector<1x256xf32>
    %60 = vector.broadcast %59 : vector<1x256xf32> to vector<256x256xf32>
    %61 = arith.mulf %56, %60 : vector<256x256xf32>
    %62 = arith.addf %51, %61 : vector<256x256xf32>
    %63 = vector.extract_strided_slice %22 {offsets = [4, 0], sizes = [1, 256], strides = [1, 1]} : vector<9x256xf32> to vector<1x256xf32>
    %64 = vector.shape_cast %63 : vector<1x256xf32> to vector<256xf32>
    %65 = vector.shape_cast %64 : vector<256xf32> to vector<1x256xf32>
    %66 = vector.broadcast %65 : vector<1x256xf32> to vector<256x256xf32>
    %67 = arith.mulf %52, %66 : vector<256x256xf32>
    %68 = arith.addf %62, %67 : vector<256x256xf32>
    %69 = vector.broadcast %21 : vector<256x1xf32> to vector<256x256xf32>
    %70 = arith.mulf %69, %54 : vector<256x256xf32>
    %71 = vector.extract_strided_slice %22 {offsets = [5, 0], sizes = [1, 256], strides = [1, 1]} : vector<9x256xf32> to vector<1x256xf32>
    %72 = vector.shape_cast %71 : vector<1x256xf32> to vector<256xf32>
    %73 = vector.shape_cast %72 : vector<256xf32> to vector<1x256xf32>
    %74 = vector.broadcast %73 : vector<1x256xf32> to vector<256x256xf32>
    %75 = arith.mulf %70, %74 : vector<256x256xf32>
    %76 = arith.addf %68, %75 : vector<256x256xf32>
    %c32 = arith.constant 32 : index
    %c0_23 = arith.constant 0 : index
    %77 = vector.load %arg9[%c32, %c0_23] : memref<288x256xf32, #tpu.memory_space<vmem>>, vector<256x256xf32>
    %c1_i32_24 = arith.constant 1 : i32
    %78 = tpu.dynamic_rotate %77 by %c1_i32_24 dim 0 : vector<256x256xf32>, i32 -> vector<256x256xf32>
    %c255_i32_25 = arith.constant 255 : i32
    %79 = tpu.dynamic_rotate %77 by %c255_i32_25 dim 0 : vector<256x256xf32>, i32 -> vector<256x256xf32>
    %80 = vector.broadcast %17 : vector<256x1xf32> to vector<256x256xf32>
    %81 = arith.mulf %80, %78 : vector<256x256xf32>
    %82 = vector.extract_strided_slice %22 {offsets = [6, 0], sizes = [1, 256], strides = [1, 1]} : vector<9x256xf32> to vector<1x256xf32>
    %83 = vector.shape_cast %82 : vector<1x256xf32> to vector<256xf32>
    %84 = vector.shape_cast %83 : vector<256xf32> to vector<1x256xf32>
    %85 = vector.broadcast %84 : vector<1x256xf32> to vector<256x256xf32>
    %86 = arith.mulf %81, %85 : vector<256x256xf32>
    %87 = arith.addf %76, %86 : vector<256x256xf32>
    %88 = vector.extract_strided_slice %22 {offsets = [7, 0], sizes = [1, 256], strides = [1, 1]} : vector<9x256xf32> to vector<1x256xf32>
    %89 = vector.shape_cast %88 : vector<1x256xf32> to vector<256xf32>
    %90 = vector.shape_cast %89 : vector<256xf32> to vector<1x256xf32>
    %91 = vector.broadcast %90 : vector<1x256xf32> to vector<256x256xf32>
    %92 = arith.mulf %77, %91 : vector<256x256xf32>
    %93 = arith.addf %87, %92 : vector<256x256xf32>
    %94 = vector.broadcast %21 : vector<256x1xf32> to vector<256x256xf32>
    %95 = arith.mulf %94, %79 : vector<256x256xf32>
    %96 = vector.extract_strided_slice %22 {offsets = [8, 0], sizes = [1, 256], strides = [1, 1]} : vector<9x256xf32> to vector<1x256xf32>
    %97 = vector.shape_cast %96 : vector<1x256xf32> to vector<256xf32>
    %98 = vector.shape_cast %97 : vector<256xf32> to vector<1x256xf32>
    %99 = vector.broadcast %98 : vector<1x256xf32> to vector<256x256xf32>
    %100 = arith.mulf %95, %99 : vector<256x256xf32>
    %101 = arith.addf %93, %100 : vector<256x256xf32>
    %102 = arith.addf %101, %52 : vector<256x256xf32>
    %cst_26 = arith.constant 5.000000e-01 : f32
    %103 = vector.broadcast %cst_26 : f32 to vector<256x256xf32>
    %104 = arith.mulf %103, %102 : vector<256x256xf32>
    %cst_27 = arith.constant 4.471500e-02 : f32
    %105 = vector.broadcast %cst_27 : f32 to vector<256x256xf32>
    %106 = arith.mulf %105, %102 : vector<256x256xf32>
    %107 = arith.mulf %106, %102 : vector<256x256xf32>
    %108 = arith.mulf %107, %102 : vector<256x256xf32>
    %109 = arith.addf %102, %108 : vector<256x256xf32>
    %cst_28 = arith.constant 0.797884583 : f32
    %110 = vector.broadcast %cst_28 : f32 to vector<256x256xf32>
    %111 = arith.mulf %110, %109 : vector<256x256xf32>
    %112 = math.tanh %111 : vector<256x256xf32>
    %cst_29 = arith.constant 1.000000e+00 : f32
    %113 = vector.broadcast %cst_29 : f32 to vector<256x256xf32>
    %114 = arith.addf %113, %112 : vector<256x256xf32>
    %115 = arith.mulf %104, %114 : vector<256x256xf32>
    %116 = arith.truncf %115 : vector<256x256xf32> to vector<256x256xbf16>
    %c0_30 = arith.constant 0 : index
    %c0_31 = arith.constant 0 : index
    %117 = vector.load %arg6[%c0_30, %c0_31] : memref<256x128xbf16, #tpu.memory_space<vmem>>, vector<256x128xbf16>
    %cst_32 = arith.constant dense<0.000000e+00> : vector<256x128xf32>
    %118 = tpu.matmul %116, %117, %cst_32 {dimension_numbers = #tpu.dot_dimension_numbers<[1], [0], [0], [1], [0, 0, 1, 1], [], []>} : vector<256x256xbf16>, vector<256x128xbf16>, vector<256x128xf32> -> vector<256x128xf32>
    %c0_33 = arith.constant 0 : index
    %c0_34 = arith.constant 0 : index
    %119 = vector.load %arg7[%c0_33, %c0_34] : memref<1x128xf32, #tpu.memory_space<vmem>>, vector<1x128xf32>
    %120 = vector.broadcast %119 : vector<1x128xf32> to vector<256x128xf32>
    %121 = arith.addf %118, %120 : vector<256x128xf32>
    %c0_35 = arith.constant 0 : index
    %c0_36 = arith.constant 0 : index
    %c0_37 = arith.constant 0 : index
    %122 = vector.load %arg8[%c0_35, %c0_36, %c0_37] : memref<1x256x128xf32, #tpu.memory_space<vmem>>, vector<1x256x128xf32>
    %123 = vector.shape_cast %122 : vector<1x256x128xf32> to vector<256x128xf32>
    %124 = vector.shape_cast %121 : vector<256x128xf32> to vector<1x256x128xf32>
    tpu.vector_store %arg8[%c0_35, %c0_36, %c0_37], %124 {strides = array<i32>} : memref<1x256x128xf32, #tpu.memory_space<vmem>>, vector<1x256x128xf32>,
    return
  }
  func.func @transform_0(%arg0: i32) -> (i32, i32, i32) {
    %c0_i32 = arith.constant 0 : i32
    %c0_i32_0 = arith.constant 0 : i32
    %c0_i32_1 = arith.constant 0 : i32
    return %arg0, %c0_i32, %c0_i32_0 : i32, i32, i32
  }
  func.func @transform_1(%arg0: i32) -> (i32, i32) {
    %c0_i32 = arith.constant 0 : i32
    %c0_i32_0 = arith.constant 0 : i32
    %c0_i32_1 = arith.constant 0 : i32
    return %c0_i32, %c0_i32_0 : i32, i32
  }
  func.func @transform_2(%arg0: i32) -> (i32, i32) {
    %c0_i32 = arith.constant 0 : i32
    %c0_i32_0 = arith.constant 0 : i32
    %c0_i32_1 = arith.constant 0 : i32
    return %c0_i32, %c0_i32_0 : i32, i32
  }
  func.func @transform_3(%arg0: i32) -> (i32, i32) {
    %c0_i32 = arith.constant 0 : i32
    %c0_i32_0 = arith.constant 0 : i32
    %c0_i32_1 = arith.constant 0 : i32
    return %c0_i32, %c0_i32_0 : i32, i32
  }
  func.func @transform_4(%arg0: i32) -> (i32, i32) {
    %c0_i32 = arith.constant 0 : i32
    %c0_i32_0 = arith.constant 0 : i32
    %c0_i32_1 = arith.constant 0 : i32
    return %c0_i32, %c0_i32_0 : i32, i32
  }
  func.func @transform_5(%arg0: i32) -> (i32, i32) {
    %c0_i32 = arith.constant 0 : i32
    %c0_i32_0 = arith.constant 0 : i32
    %c0_i32_1 = arith.constant 0 : i32
    return %c0_i32, %c0_i32_0 : i32, i32
  }
  func.func @transform_6(%arg0: i32) -> (i32, i32) {
    %c0_i32 = arith.constant 0 : i32
    %c0_i32_0 = arith.constant 0 : i32
    %c0_i32_1 = arith.constant 0 : i32
    return %c0_i32, %c0_i32_0 : i32, i32
  }
  func.func @transform_7(%arg0: i32) -> (i32, i32, i32) {
    %c0_i32 = arith.constant 0 : i32
    %c0_i32_0 = arith.constant 0 : i32
    %c0_i32_1 = arith.constant 0 : i32
    return %arg0, %c0_i32, %c0_i32_0 : i32, i32, i32
  }
}

</mosaic_0001>

<llo_original>
// kernel: tpu_custom_call.1
$region0: #{tpu_custom_call.1}
  #allocation0 [shape = 'u32[]', space=smem, size = 0x4, offset = 0x4, fixed_abs, tag = 'smem constant byte address 0x4 - core index']
  #allocation1 [shape = 'u32[72,128]{1,0:T(1,128)}', space=vmem, size = 0x9000, scoped, tag = 'internal scratch']
  #allocation2 [shape = 'f32[288,256]{1,0:T(8,128)}', space=vmem, size = 0x48000, scoped, tag = 'scratch operand']
  %s0 = inlined_call_operand.hbm [shape: bf16[2,256,128], index: 0, kind: input, shape index: {}]
  %s1 = inlined_call_operand.hbm [shape: bf16[128,256], index: 1, kind: input, shape index: {}]
  %s2 = inlined_call_operand.hbm [shape: f32[1,256], index: 2, kind: input, shape index: {}]
  %s3 = inlined_call_operand.hbm [shape: f32[9,256], index: 3, kind: input, shape index: {}]
  %s4 = inlined_call_operand.vmem [shape: f32[1,256], index: 4, kind: input, shape index: {}]
  %s5 = inlined_call_operand.hbm [shape: bf16[256,128], index: 5, kind: input, shape index: {}]
  %s6 = inlined_call_operand.vmem [shape: f32[1,128], index: 6, kind: input, shape index: {}]
  %s7 = inlined_call_operand.hbm [shape: f32[2,256,128], index: 7, kind: output, shape index: {}]
  %s8 = sld [smem:[#allocation0]]
  $region81: #{tpu_custom_call.1} parent=0
    _
  %s10 = ssub.s32 1, %s8
  %s11 = scalar_select 0, %s10, %s8
  $region1: #{tpu_custom_call.1} parent=0
    #allocation3 [shape = 'u8[131072]{0}', space=vmem, size = 0x20000, scoped, tag = 'input window, operand 0']
    #allocation4 [shape = 's32[2]{0}', space=sflag, size = 0x8, scoped, tag = 'scoped memory for tpu_custom_call.1']
    #allocation5 [shape = 's32[2]{0}', space=sflag, size = 0x8, scoped, tag = 'scoped memory for tpu_custom_call.1']
    #allocation6 [shape = 'u8[65536]{0}', space=vmem, size = 0x10000, scoped, tag = 'input window, operand 1, single buffered']
    #allocation7 [shape = 's32[1]{0}', space=sflag, size = 0x4, scoped, tag = 'scoped memory for tpu_custom_call.1']
    #allocation8 [shape = 'u8[1024]{0}', space=vmem, size = 0x400, scoped, tag = 'input window, operand 2, single buffered']
    #allocation9 [shape = 'u8[16384]{0}', space=vmem, size = 0x4000, scoped, tag = 'input window, operand 3, single buffered']
    #allocation10 [shape = 's32[1]{0}', space=sflag, size = 0x4, scoped, tag = 'scoped memory for tpu_custom_call.1']
    #allocation11 [shape = 'u8[65536]{0}', space=vmem, size = 0x10000, scoped, tag = 'input window, operand 5, single buffered']
    #allocation12 [shape = 'u8[262144]{0}', space=vmem, size = 0x40000, scoped, tag = 'output window, operand 0']
    %12 = vsyncpa [#allocation4], 0
    %s13 = scalar_lea.sflag [#allocation4], 1
    %14 = vsyncpa %s13, 0
    %15 = vsyncpa [#allocation7], 0
    %16 = vsyncpa [#allocation10], 0
    %17 = vsyncpa [#allocation5], 0
    %s18 = scalar_lea.sflag [#allocation5], 1
    %19 = vsyncpa %s18, 0
    loop: start=0, step=1, limit=4
    $region2: #{tpu_custom_call.1} parent=1 // loop_pre_header
      _
    $region3: #{tpu_custom_call.1} parent=1 // loop_header
      %s21 = sphi 0, %s25
      %p22 = scmp.ge.s32.totalorder %s21, 4
      %s31 = sphi 0, %s33
      %s34 = sphi 0, %s31
      %s35 = sphi 0, %s34
      %s51 = sphi 0, %s35
      %s55 = sphi 0, %s55
      %s57 = sphi 0, %s55
      %s58 = sphi 0, %s57
      %s72 = sphi 0, %s58
      %s76 = sphi 0, %s76
      %s78 = sphi 0, %s76
      %s79 = sphi 0, %s78
      %s93 = sphi 0, %s79
      %s97 = sphi 0, %s97
      %s99 = sphi 0, %s97
      %s100 = sphi 0, %s99
      %s114 = sphi 0, %s100
      %s118 = sphi 0, %s118
      %s120 = sphi 0, %s118
      %s121 = sphi 0, %s120
      %s135 = sphi 0, %s121
      %s139 = sphi 0, %s139
      %s141 = sphi 0, %s139
      %s142 = sphi 0, %s141
      %s156 = sphi 0, %s142
      %s160 = sphi 0, %s160
      %s162 = sphi 0, %s160
      %s163 = sphi 0, %s162
      %s177 = sphi 0, %s163
      %s183 = sphi 0, %s185
      %s186 = sphi 0, %s183
      %s187 = sphi 0, %s186
      %s203 = sphi 0, %s187
    $region4: #{tpu_custom_call.1} parent=1 // loop_header_branch
      %24 = sbr.rel (%p22) target = $region8
    $region5: #{tpu_custom_call.1} parent=1 // loop_body
      %s26 = ssub.s32 %s21, 1
      %s27 = ssub.s32 %s21, 2
      %s28 = sadd.s32 %s21, 1
      %s29 = ssub.s32 %s21, %s28
      %p30 = scmp.eq.s32.totalorder %s29, 0
      %s32 = sadd.s32 %s31, 1
      %s33 = scalar_select %p30, %s31, %s32
      %p36 = pneg %p30
      %p37 = scmp.eq.s32.totalorder %s21, 1
      %p38 = por %p36, %p37
      %p39 = scmp.ne.s32.totalorder %s31, %s34
      %p40 = scmp.eq.s32.totalorder %s21, 0
      %p41 = por %p39, %p40
      %p42 = scmp.ne.s32.totalorder %s31, %s34
      %p43 = scmp.eq.s32.totalorder %s26, 1
      %p44 = por %p42, %p43
      %p45 = scmp.ne.s32.totalorder %s34, %s35
      %p46 = scmp.eq.s32.totalorder %s26, 0
      %p47 = por %p45, %p46
      %p48 = scmp.ne.s32.totalorder %s34, %s35
      %p49 = scmp.eq.s32.totalorder %s27, 1
      %p50 = por %p48, %p49
      %p52 = scmp.ne.s32.totalorder %s35, %s51
      %p53 = scmp.eq.s32.totalorder %s27, 0
      %p54 = por %p52, %p53
      %s56 = sadd.s32 %s55, 1
      %p59 = scmp.eq.s32.totalorder %s21, 1
      %p60 = scmp.ne.s32.totalorder %s55, %s57
      %p61 = scmp.eq.s32.totalorder %s21, 0
      %p62 = por %p60, %p61
      %p63 = scmp.ne.s32.totalorder %s55, %s57
      %p64 = scmp.eq.s32.totalorder %s26, 1
      %p65 = por %p63, %p64
      %p66 = scmp.ne.s32.totalorder %s57, %s58
      %p67 = scmp.eq.s32.totalorder %s26, 0
      %p68 = por %p66, %p67
      %p69 = scmp.ne.s32.totalorder %s57, %s58
      %p70 = scmp.eq.s32.totalorder %s27, 1
      %p71 = por %p69, %p70
      %p73 = scmp.ne.s32.totalorder %s58, %s72
      %p74 = scmp.eq.s32.totalorder %s27, 0
      %p75 = por %p73, %p74
      %s77 = sadd.s32 %s76, 1
      %p80 = scmp.eq.s32.totalorder %s21, 1
      %p81 = scmp.ne.s32.totalorder %s76, %s78
      %p82 = scmp.eq.s32.totalorder %s21, 0
      %p83 = por %p81, %p82
      %p84 = scmp.ne.s32.totalorder %s76, %s78
      %p85 = scmp.eq.s32.totalorder %s26, 1
      %p86 = por %p84, %p85
      %p87 = scmp.ne.s32.totalorder %s78, %s79
      %p88 = scmp.eq.s32.totalorder %s26, 0
      %p89 = por %p87, %p88
      %p90 = scmp.ne.s32.totalorder %s78, %s79
      %p91 = scmp.eq.s32.totalorder %s27, 1
      %p92 = por %p90, %p91
      %p94 = scmp.ne.s32.totalorder %s79, %s93
      %p95 = scmp.eq.s32.totalorder %s27, 0
      %p96 = por %p94, %p95
      %s98 = sadd.s32 %s97, 1
      %p101 = scmp.eq.s32.totalorder %s21, 1
      %p102 = scmp.ne.s32.totalorder %s97, %s99
      %p103 = scmp.eq.s32.totalorder %s21, 0
      %p104 = por %p102, %p103
      %p105 = scmp.ne.s32.totalorder %s97, %s99
      %p106 = scmp.eq.s32.totalorder %s26, 1
      %p107 = por %p105, %p106
      %p108 = scmp.ne.s32.totalorder %s99, %s100
      %p109 = scmp.eq.s32.totalorder %s26, 0
      %p110 = por %p108, %p109
      %p111 = scmp.ne.s32.totalorder %s99, %s100
      %p112 = scmp.eq.s32.totalorder %s27, 1
      %p113 = por %p111, %p112
      %p115 = scmp.ne.s32.totalorder %s100, %s114
      %p116 = scmp.eq.s32.totalorder %s27, 0
      %p117 = por %p115, %p116
      %s119 = sadd.s32 %s118, 1
      %p122 = scmp.eq.s32.totalorder %s21, 1
      %p123 = scmp.ne.s32.totalorder %s118, %s120
      %p124 = scmp.eq.s32.totalorder %s21, 0
      %p125 = por %p123, %p124
      %p126 = scmp.ne.s32.totalorder %s118, %s120
      %p127 = scmp.eq.s32.totalorder %s26, 1
      %p128 = por %p126, %p127
      %p129 = scmp.ne.s32.totalorder %s120, %s121
      %p130 = scmp.eq.s32.totalorder %s26, 0
      %p131 = por %p129, %p130
      %p132 = scmp.ne.s32.totalorder %s120, %s121
      %p133 = scmp.eq.s32.totalorder %s27, 1
      %p134 = por %p132, %p133
      %p136 = scmp.ne.s32.totalorder %s121, %s135
      %p137 = scmp.eq.s32.totalorder %s27, 0
      %p138 = por %p136, %p137
      %s140 = sadd.s32 %s139, 1
      %p143 = scmp.eq.s32.totalorder %s21, 1
      %p144 = scmp.ne.s32.totalorder %s139, %s141
      %p145 = scmp.eq.s32.totalorder %s21, 0
      %p146 = por %p144, %p145
      %p147 = scmp.ne.s32.totalorder %s139, %s141
      %p148 = scmp.eq.s32.totalorder %s26, 1
      %p149 = por %p147, %p148
      %p150 = scmp.ne.s32.totalorder %s141, %s142
      %p151 = scmp.eq.s32.totalorder %s26, 0
      %p152 = por %p150, %p151
      %p153 = scmp.ne.s32.totalorder %s141, %s142
      %p154 = scmp.eq.s32.totalorder %s27, 1
      %p155 = por %p153, %p154
      %p157 = scmp.ne.s32.totalorder %s142, %s156
      %p158 = scmp.eq.s32.totalorder %s27, 0
      %p159 = por %p157, %p158
      %s161 = sadd.s32 %s160, 1
      %p164 = scmp.eq.s32.totalorder %s21, 1
      %p165 = scmp.ne.s32.totalorder %s160, %s162
      %p166 = scmp.eq.s32.totalorder %s21, 0
      %p167 = por %p165, %p166
      %p168 = scmp.ne.s32.totalorder %s160, %s162
      %p169 = scmp.eq.s32.totalorder %s26, 1
      %p170 = por %p168, %p169
      %p171 = scmp.ne.s32.totalorder %s162, %s163
      %p172 = scmp.eq.s32.totalorder %s26, 0
      %p173 = por %p171, %p172
      %p174 = scmp.ne.s32.totalorder %s162, %s163
      %p175 = scmp.eq.s32.totalorder %s27, 1
      %p176 = por %p174, %p175
      %p178 = scmp.ne.s32.totalorder %s163, %s177
      %p179 = scmp.eq.s32.totalorder %s27, 0
      %p180 = por %p178, %p179
      %s181 = ssub.s32 %s21, %s28
      %p182 = scmp.eq.s32.totalorder %s181, 0
      %s184 = sadd.s32 %s183, 1
      %s185 = scalar_select %p182, %s183, %s184
      %p188 = pneg %p182
      %p189 = scmp.eq.s32.totalorder %s21, 1
      %p190 = por %p188, %p189
      %p191 = scmp.ne.s32.totalorder %s183, %s186
      %p192 = scmp.eq.s32.totalorder %s21, 0
      %p193 = por %p191, %p192
      %p194 = scmp.ne.s32.totalorder %s183, %s186
      %p195 = scmp.eq.s32.totalorder %s26, 1
      %p196 = por %p194, %p195
      %p197 = scmp.ne.s32.totalorder %s186, %s187
      %p198 = scmp.eq.s32.totalorder %s26, 0
      %p199 = por %p197, %p198
      %p200 = scmp.ne.s32.totalorder %s186, %s187
      %p201 = scmp.eq.s32.totalorder %s27, 1
      %p202 = por %p200, %p201
      %p204 = scmp.ne.s32.totalorder %s187, %s203
      %p205 = scmp.eq.s32.totalorder %s27, 0
      %p206 = por %p204, %p205
      %p207 = scmp.le.s32.totalorder 1, %s21
      %p208 = scmp.lt.s32.totalorder %s21, 3
      %p209 = pnand %p207, %p208
      %p210 = pneg %p209
      // Predicated region
      $region9: #{tpu_custom_call.1} parent=5 // pred_check
        _
      $region10: #{tpu_custom_call.1} parent=5 // pred_check_branch
        %212 = sbr.rel (%p209) target = $region12
      $region11: #{tpu_custom_call.1} parent=5 // pred_region
        %s213 = ssub.s32 %s21, 1
        // Predicated region
        $region13: #{tpu_custom_call.1} parent=11 // pred_check
          %p214 = pneg %p68
        $region14: #{tpu_custom_call.1} parent=11 // pred_check_branch
          %216 = sbr.rel (%p214) target = $region16
        $region15: #{tpu_custom_call.1} parent=11 // pred_region
          %218 = vsyncadd [#allocation7], 0
          %s219 = sshll.u32 %s1, 4
          %s220 = int_to_ptr.hbm [resolvable:$true] %s219
          %s221 = sshll.u32 [#allocation6], 4
          %s222 = int_to_ptr.vmem [resolvable:$true] %s221
          %227 = dma.hbm_to_vmem [thread:$0]  %s220, 2048, %s222, [#allocation7], 128, 128, 8
        $region16: #{tpu_custom_call.1} parent=11 // pred_fallthru
          _
        // Predicated region
        $region17: #{tpu_custom_call.1} parent=11 // pred_check
          %p228 = pneg %p89
        $region18: #{tpu_custom_call.1} parent=11 // pred_check_branch
          %230 = sbr.rel (%p228) target = $region20
        $region19: #{tpu_custom_call.1} parent=11 // pred_region
          %232 = vsyncadd [#allocation7], 0
          %s234 = sshll.u32 %s2, 4
          %s235 = int_to_ptr.hbm [resolvable:$true] %s234
          %s236 = sshll.u32 [#allocation8], 4
          %s237 = int_to_ptr.vmem [resolvable:$true] %s236
          %239 = dma.hbm_to_vmem [thread:$0]  %s235, 32, %s237, [#allocation7]
        $region20: #{tpu_custom_call.1} parent=11 // pred_fallthru
          _
        // Predicated region
        $region21: #{tpu_custom_call.1} parent=11 // pred_check
          %p240 = pneg %p110
        $region22: #{tpu_custom_call.1} parent=11 // pred_check_branch
          %242 = sbr.rel (%p240) target = $region24
        $region23: #{tpu_custom_call.1} parent=11 // pred_region
          %244 = vsyncadd [#allocation10], 0
          %s245 = sshll.u32 %s3, 4
          %s246 = int_to_ptr.hbm [resolvable:$true] %s245
          %s247 = sshll.u32 [#allocation9], 4
          %s248 = int_to_ptr.vmem [resolvable:$true] %s247
          %253 = dma.hbm_to_vmem [thread:$0]  %s246, 512, %s248, [#allocation10], 256, 256, 16
        $region24: #{tpu_custom_call.1} parent=11 // pred_fallthru
          _
        // Predicated region
        $region25: #{tpu_custom_call.1} parent=11 // pred_check
          %p254 = pneg %p131
        $region26: #{tpu_custom_call.1} parent=11 // pred_check_branch
          %256 = sbr.rel (%p254) target = $region28
        $region27: #{tpu_custom_call.1} parent=11 // pred_region
          _
        $region28: #{tpu_custom_call.1} parent=11 // pred_fallthru
          _
        // Predicated region
        $region29: #{tpu_custom_call.1} parent=11 // pred_check
          %p257 = pneg %p152
        $region30: #{tpu_custom_call.1} parent=11 // pred_check_branch
          %259 = sbr.rel (%p257) target = $region32
        $region31: #{tpu_custom_call.1} parent=11 // pred_region
          %261 = vsyncadd [#allocation10], 0
          %s262 = sshll.u32 %s5, 4
          %s263 = int_to_ptr.hbm [resolvable:$true] %s262
          %s264 = sshll.u32 [#allocation11], 4
          %s265 = int_to_ptr.vmem [resolvable:$true] %s264
          %270 = dma.hbm_to_vmem [thread:$0]  %s263, 2048, %s265, [#allocation10], 64, 64, 4
        $region32: #{tpu_custom_call.1} parent=11 // pred_fallthru
          _
        // Predicated region
        $region33: #{tpu_custom_call.1} parent=11 // pred_check
          %p271 = pneg %p173
        $region34: #{tpu_custom_call.1} parent=11 // pred_check_branch
          %273 = sbr.rel (%p271) target = $region36
        $region35: #{tpu_custom_call.1} parent=11 // pred_region
          _
        $region36: #{tpu_custom_call.1} parent=11 // pred_fallthru
          _
      $region12: #{tpu_custom_call.1} parent=5 // pred_fallthru
        _
      %p274 = scmp.lt.s32.totalorder %s21, 2
      // Predicated region
      $region37: #{tpu_custom_call.1} parent=5 // pred_check
        %p275 = pneg %p274
      $region38: #{tpu_custom_call.1} parent=5 // pred_check_branch
        %277 = sbr.rel (%p275) target = $region40
      $region39: #{tpu_custom_call.1} parent=5 // pred_region
        // Predicated region
        $region41: #{tpu_custom_call.1} parent=39 // pred_check
          %p278 = pneg %p41
        $region42: #{tpu_custom_call.1} parent=39 // pred_check_branch
          %280 = sbr.rel (%p278) target = $region44
        $region43: #{tpu_custom_call.1} parent=39 // pred_region
          %s281 = sand.u32 %s31, 1
          %s282 = scalar_lea.sflag [#allocation4], %s281
          %s283 = sand.u32 %s31, 1
          %s284 = smul.addr %s283, 128
          %s285 = scalar_lea.vmem [#allocation3], %s284
          %287 = vsyncadd %s282, 0
          %s288 = smul.addr %s21, 32
          %s289 = smul.addr %s288, 4
          %s290 = scalar_lea.hbm %s0, %s289
          %s291 = sshll.u32 %s290, 4
          %s292 = int_to_ptr.hbm [resolvable:$true] %s291
          %s293 = sshll.u32 %s285, 4
          %s294 = int_to_ptr.vmem [resolvable:$true] %s293
          %299 = dma.hbm_to_vmem [thread:$0]  %s292, 2048, %s294, %s282, 64, 64, 4
        $region44: #{tpu_custom_call.1} parent=39 // pred_fallthru
          _
      $region40: #{tpu_custom_call.1} parent=5 // pred_fallthru
        _
      %p300 = scmp.le.s32.totalorder 1, %s21
      %p301 = scmp.lt.s32.totalorder %s21, 3
      %p302 = pnand %p300, %p301
      %p303 = pneg %p302
      // Predicated region
      $region45: #{tpu_custom_call.1} parent=5 // pred_check
        _
      $region46: #{tpu_custom_call.1} parent=5 // pred_check_branch
        %305 = sbr.rel (%p302) target = $region48
      $region47: #{tpu_custom_call.1} parent=5 // pred_region
        %s306 = ssub.s32 %s21, 1
        %s307 = sand.u32 %s34, 1
        %s308 = scalar_lea.sflag [#allocation4], %s307
        %s309 = sand.u32 %s34, 1
        %s310 = smul.addr %s309, 128
        %s311 = scalar_lea.vmem [#allocation3], %s310
        // Predicated region
        $region49: #{tpu_custom_call.1} parent=47 // pred_check
          %p312 = pneg %p47
        $region50: #{tpu_custom_call.1} parent=47 // pred_check_branch
          %314 = sbr.rel (%p312) target = $region52
        $region51: #{tpu_custom_call.1} parent=47 // pred_region
          %316 = dma.done %s308, 2048
        $region52: #{tpu_custom_call.1} parent=47 // pred_fallthru
          _
        // Predicated region
        $region53: #{tpu_custom_call.1} parent=47 // pred_check
          %p317 = pneg %p68
        $region54: #{tpu_custom_call.1} parent=47 // pred_check_branch
          %319 = sbr.rel (%p317) target = $region56
        $region55: #{tpu_custom_call.1} parent=47 // pred_region
          %321 = dma.done [#allocation7], 2048
        $region56: #{tpu_custom_call.1} parent=47 // pred_fallthru
          _
        // Predicated region
        $region57: #{tpu_custom_call.1} parent=47 // pred_check
          %p322 = pneg %p89
        $region58: #{tpu_custom_call.1} parent=47 // pred_check_branch
          %324 = sbr.rel (%p322) target = $region60
        $region59: #{tpu_custom_call.1} parent=47 // pred_region
          %326 = dma.done [#allocation7], 32
        $region60: #{tpu_custom_call.1} parent=47 // pred_fallthru
          _
        // Predicated region
        $region61: #{tpu_custom_call.1} parent=47 // pred_check
          %p327 = pneg %p110
        $region62: #{tpu_custom_call.1} parent=47 // pred_check_branch
          %329 = sbr.rel (%p327) target = $region64
        $region63: #{tpu_custom_call.1} parent=47 // pred_region
          %331 = dma.done [#allocation10], 512
        $region64: #{tpu_custom_call.1} parent=47 // pred_fallthru
          _
        // Predicated region
        $region65: #{tpu_custom_call.1} parent=47 // pred_check
          %p332 = pneg %p152
        $region66: #{tpu_custom_call.1} parent=47 // pred_check_branch
          %334 = sbr.rel (%p332) target = $region68
        $region67: #{tpu_custom_call.1} parent=47 // pred_region
          %336 = dma.done [#allocation10], 2048
        $region68: #{tpu_custom_call.1} parent=47 // pred_fallthru
          _
        %s337 = sand.u32 %s34, 1
        %s338 = scalar_lea.sflag [#allocation4], %s337
        %s339 = sand.u32 %s34, 1
        %s340 = smul.addr %s339, 128
        %s341 = scalar_lea.vmem [#allocation3], %s340
        %p342 = pneg %p47
        %p343 = pneg %p44
        %p344 = pneg %p68
        %p345 = pneg %p65
        %p346 = pneg %p89
        %p347 = pneg %p86
        %p348 = pneg %p110
        %p349 = pneg %p107
        %p350 = pneg %p131
        %p351 = pneg %p128
        %p352 = pneg %p152
        %p353 = pneg %p149
        %p354 = pneg %p173
        %p355 = pneg %p170
        %p356 = pneg %p199
        %p357 = pneg %p196
        %s358 = sand.u32 %s186, 1
        %s359 = scalar_lea.sflag [#allocation5], %s358
        %s360 = sand.u32 %s186, 1
        %s361 = smul.addr %s360, 256
        %s362 = scalar_lea.vmem [#allocation12], %s361
        %v363 = vld [vmem:[%s311] sm:$0xf]
        %v364 = vld [vmem:[%s311 + $0x4] sm:$0xf]
        %v365 = vld [vmem:[%s311 + $0x8] sm:$0xf]
        %v366 = vld [vmem:[%s311 + $0xc] sm:$0xf]
        %v367 = vld [vmem:[%s311 + $0x10] sm:$0xf]
        %v368 = vld [vmem:[%s311 + $0x14] sm:$0xf]
        %v369 = vld [vmem:[%s311 + $0x18] sm:$0xf]
        %v370 = vld [vmem:[%s311 + $0x1c] sm:$0xf]
        %v371 = vld [vmem:[%s311 + $0x20] sm:$0xf]
        %v372 = vld [vmem:[%s311 + $0x24] sm:$0xf]
        %v373 = vld [vmem:[%s311 + $0x28] sm:$0xf]
        %v374 = vld [vmem:[%s311 + $0x2c] sm:$0xf]
        %v375 = vld [vmem:[%s311 + $0x30] sm:$0xf]
        %v376 = vld [vmem:[%s311 + $0x34] sm:$0xf]
        %v377 = vld [vmem:[%s311 + $0x38] sm:$0xf]
        %v378 = vld [vmem:[%s311 + $0x3c] sm:$0xf]
        %v379 = vld [vmem:[%s311 + $0x40] sm:$0xf]
        %v380 = vld [vmem:[%s311 + $0x44] sm:$0xf]
        %v381 = vld [vmem:[%s311 + $0x48] sm:$0xf]
        %v382 = vld [vmem:[%s311 + $0x4c] sm:$0xf]
        %v383 = vld [vmem:[%s311 + $0x50] sm:$0xf]
        %v384 = vld [vmem:[%s311 + $0x54] sm:$0xf]
        %v385 = vld [vmem:[%s311 + $0x58] sm:$0xf]
        %v386 = vld [vmem:[%s311 + $0x5c] sm:$0xf]
        %v387 = vld [vmem:[%s311 + $0x60] sm:$0xf]
        %v388 = vld [vmem:[%s311 + $0x64] sm:$0xf]
        %v389 = vld [vmem:[%s311 + $0x68] sm:$0xf]
        %v390 = vld [vmem:[%s311 + $0x6c] sm:$0xf]
        %v391 = vld [vmem:[%s311 + $0x70] sm:$0xf]
        %v392 = vld [vmem:[%s311 + $0x74] sm:$0xf]
        %v393 = vld [vmem:[%s311 + $0x78] sm:$0xf]
        %v394 = vld [vmem:[%s311 + $0x7c] sm:$0xf]
        %v395 = vld [vmem:[#allocation6] sm:$0xff]
        %v396 = vld [vmem:[#allocation6 + $0x8] sm:$0xff]
        %v397 = vld [vmem:[#allocation6 + $0x10] sm:$0xff]
        %v398 = vld [vmem:[#allocation6 + $0x18] sm:$0xff]
        %v399 = vld [vmem:[#allocation6 + $0x20] sm:$0xff]
        %v400 = vld [vmem:[#allocation6 + $0x28] sm:$0xff]
        %v401 = vld [vmem:[#allocation6 + $0x30] sm:$0xff]
        %v402 = vld [vmem:[#allocation6 + $0x38] sm:$0xff]
        %v403 = vld [vmem:[#allocation6 + $0x40] sm:$0xff]
        %v404 = vld [vmem:[#allocation6 + $0x48] sm:$0xff]
        %v405 = vld [vmem:[#allocation6 + $0x50] sm:$0xff]
        %v406 = vld [vmem:[#allocation6 + $0x58] sm:$0xff]
        %v407 = vld [vmem:[#allocation6 + $0x60] sm:$0xff]
        %v408 = vld [vmem:[#allocation6 + $0x68] sm:$0xff]
        %v409 = vld [vmem:[#allocation6 + $0x70] sm:$0xff]
        %v410 = vld [vmem:[#allocation6 + $0x78] sm:$0xff]
        %v411 = vld [vmem:[#allocation8] sm:$0x3]
        %v413 = vperm.slane %v411, 0
        %v414 = vperm.slane %v411, 1
        %v449 = vunpack.c.l.b16 %v363
        %v450 = vunpack.c.l.b16 %v364
        %v451 = vunpack.c.l.b16 %v365
        %v452 = vunpack.c.l.b16 %v366
        %v453 = vunpack.c.l.b16 %v367
        %v454 = vunpack.c.l.b16 %v368
        %v455 = vunpack.c.l.b16 %v369
        %v456 = vunpack.c.l.b16 %v370
        %v457 = vunpack.c.l.b16 %v371
        %v458 = vunpack.c.l.b16 %v372
        %v459 = vunpack.c.l.b16 %v373
        %v460 = vunpack.c.l.b16 %v374
        %v461 = vunpack.c.l.b16 %v375
        %v462 = vunpack.c.l.b16 %v376
        %v463 = vunpack.c.l.b16 %v377
        %v464 = vunpack.c.l.b16 %v378
        %v465 = vunpack.c.l.b16 %v379
        %v466 = vunpack.c.l.b16 %v380
        %v467 = vunpack.c.l.b16 %v381
        %v468 = vunpack.c.l.b16 %v382
        %v469 = vunpack.c.l.b16 %v383
        %v470 = vunpack.c.l.b16 %v384
        %v471 = vunpack.c.l.b16 %v385
        %v472 = vunpack.c.l.b16 %v386
        %v473 = vunpack.c.l.b16 %v387
        %v474 = vunpack.c.l.b16 %v388
        %v475 = vunpack.c.l.b16 %v389
        %v476 = vunpack.c.l.b16 %v390
        %v477 = vunpack.c.l.b16 %v391
        %v478 = vunpack.c.l.b16 %v392
        %v479 = vunpack.c.l.b16 %v393
        %v480 = vunpack.c.l.b16 %v394
        %v481 = vpack.c.b16 %v450, %v449
        %v482 = vpack.c.b16 %v452, %v451
        %v483 = vpack.c.b16 %v454, %v453
        %v484 = vpack.c.b16 %v456, %v455
        %v485 = vpack.c.b16 %v458, %v457
        %v486 = vpack.c.b16 %v460, %v459
        %v487 = vpack.c.b16 %v462, %v461
        %v488 = vpack.c.b16 %v464, %v463
        %v489 = vpack.c.b16 %v466, %v465
        %v490 = vpack.c.b16 %v468, %v467
        %v491 = vpack.c.b16 %v470, %v469
        %v492 = vpack.c.b16 %v472, %v471
        %v493 = vpack.c.b16 %v474, %v473
        %v494 = vpack.c.b16 %v476, %v475
        %v495 = vpack.c.b16 %v478, %v477
        %v496 = vpack.c.b16 %v480, %v479
        %v529 = vunpack.c.l.b16 %v395
        %v530 = vunpack.c.h.b16 %v395
        %v531 = vunpack.c.l.b16 %v396
        %v532 = vunpack.c.h.b16 %v396
        %v533 = vunpack.c.l.b16 %v397
        %v534 = vunpack.c.h.b16 %v397
        %v535 = vunpack.c.l.b16 %v398
        %v536 = vunpack.c.h.b16 %v398
        %v537 = vunpack.c.l.b16 %v399
        %v538 = vunpack.c.h.b16 %v399
        %v539 = vunpack.c.l.b16 %v400
        %v540 = vunpack.c.h.b16 %v400
        %v541 = vunpack.c.l.b16 %v401
        %v542 = vunpack.c.h.b16 %v401
        %v543 = vunpack.c.l.b16 %v402
        %v544 = vunpack.c.h.b16 %v402
        %v545 = vunpack.c.l.b16 %v403
        %v546 = vunpack.c.h.b16 %v403
        %v547 = vunpack.c.l.b16 %v404
        %v548 = vunpack.c.h.b16 %v404
        %v549 = vunpack.c.l.b16 %v405
        %v550 = vunpack.c.h.b16 %v405
        %v551 = vunpack.c.l.b16 %v406
        %v552 = vunpack.c.h.b16 %v406
        %v553 = vunpack.c.l.b16 %v407
        %v554 = vunpack.c.h.b16 %v407
        %v555 = vunpack.c.l.b16 %v408
        %v556 = vunpack.c.h.b16 %v408
        %v557 = vunpack.c.l.b16 %v409
        %v558 = vunpack.c.h.b16 %v409
        %v559 = vunpack.c.l.b16 %v410
        %v560 = vunpack.c.h.b16 %v410
        %v561 = vpack.c.b16 %v531, %v529
        %v562 = vpack.c.b16 %v532, %v530
        %v563 = vpack.c.b16 %v535, %v533
        %v564 = vpack.c.b16 %v536, %v534
        %v565 = vpack.c.b16 %v539, %v537
        %v566 = vpack.c.b16 %v540, %v538
        %v567 = vpack.c.b16 %v543, %v541
        %v568 = vpack.c.b16 %v544, %v542
        %v569 = vpack.c.b16 %v547, %v545
        %v570 = vpack.c.b16 %v548, %v546
        %v571 = vpack.c.b16 %v551, %v549
        %v572 = vpack.c.b16 %v552, %v550
        %v573 = vpack.c.b16 %v555, %v553
        %v574 = vpack.c.b16 %v556, %v554
        %v575 = vpack.c.b16 %v559, %v557
        %v576 = vpack.c.b16 %v560, %v558
        %593 = vmatpush.bf16.msra.mxu0 %v575
        %594 = vmatpush.bf16.msra.mxu0 %v573
        %595 = vmatpush.bf16.msra.mxu0 %v571
        %596 = vmatpush.bf16.msra.mxu0 %v569
        %597 = vmatpush.bf16.msra.mxu0 %v567
        %598 = vmatpush.bf16.msra.mxu0 %v565
        %599 = vmatpush.bf16.msra.mxu0 %v563
        %600 = vmatpush.bf16.msra.mxu0 %v561
        %601 = vmatmul.bf16.gmra.mxu0 %v481
        %v602 = vpop.f32.mrf.mxu0
        %v603 = vadd.f32 %v413, %v602
        %v604 = vpop.f32.mrf.mxu0
        %v605 = vadd.f32 %v413, %v604
        %606 = vmatmul.bf16.gmra.mxu0 %v482
        %v607 = vpop.f32.mrf.mxu0
        %v608 = vadd.f32 %v413, %v607
        %v609 = vpop.f32.mrf.mxu0
        %v610 = vadd.f32 %v413, %v609
        %611 = vmatmul.bf16.gmra.mxu0 %v483
        %v612 = vpop.f32.mrf.mxu0
        %v613 = vadd.f32 %v413, %v612
        %v614 = vpop.f32.mrf.mxu0
        %v615 = vadd.f32 %v413, %v614
        %616 = vmatmul.bf16.gmra.mxu0 %v484
        %v617 = vpop.f32.mrf.mxu0
        %v618 = vadd.f32 %v413, %v617
        %v619 = vpop.f32.mrf.mxu0
        %v620 = vadd.f32 %v413, %v619
        %621 = vmatmul.bf16.gmra.mxu0 %v485
        %v622 = vpop.f32.mrf.mxu0
        %v623 = vadd.f32 %v413, %v622
        %v624 = vpop.f32.mrf.mxu0
        %v625 = vadd.f32 %v413, %v624
        %626 = vmatmul.bf16.gmra.mxu0 %v486
        %v627 = vpop.f32.mrf.mxu0
        %v628 = vadd.f32 %v413, %v627
        %v629 = vpop.f32.mrf.mxu0
        %v630 = vadd.f32 %v413, %v629
        %631 = vmatmul.bf16.gmra.mxu0 %v487
        %v632 = vpop.f32.mrf.mxu0
        %v633 = vadd.f32 %v413, %v632
        %v634 = vpop.f32.mrf.mxu0
        %v635 = vadd.f32 %v413, %v634
        %636 = vmatmul.bf16.gmra.mxu0 %v488
        %v637 = vpop.f32.mrf.mxu0
        %v638 = vadd.f32 %v413, %v637
        %v639 = vpop.f32.mrf.mxu0
        %v640 = vadd.f32 %v413, %v639
        %641 = vmatmul.bf16.gmra.mxu0 %v489
        %v642 = vpop.f32.mrf.mxu0
        %v643 = vadd.f32 %v413, %v642
        %v644 = vpop.f32.mrf.mxu0
        %v645 = vadd.f32 %v413, %v644
        %646 = vmatmul.bf16.gmra.mxu0 %v490
        %v647 = vpop.f32.mrf.mxu0
        %v648 = vadd.f32 %v413, %v647
        %v649 = vpop.f32.mrf.mxu0
        %v650 = vadd.f32 %v413, %v649
        %651 = vmatmul.bf16.gmra.mxu0 %v491
        %v652 = vpop.f32.mrf.mxu0
        %v653 = vadd.f32 %v413, %v652
        %v654 = vpop.f32.mrf.mxu0
        %v655 = vadd.f32 %v413, %v654
        %656 = vmatmul.bf16.gmra.mxu0 %v492
        %v657 = vpop.f32.mrf.mxu0
        %v658 = vadd.f32 %v413, %v657
        %v659 = vpop.f32.mrf.mxu0
        %v660 = vadd.f32 %v413, %v659
        %661 = vmatmul.bf16.gmra.mxu0 %v493
        %v662 = vpop.f32.mrf.mxu0
        %v663 = vadd.f32 %v413, %v662
        %v664 = vpop.f32.mrf.mxu0
        %v665 = vadd.f32 %v413, %v664
        %666 = vmatmul.bf16.gmra.mxu0 %v494
        %v667 = vpop.f32.mrf.mxu0
        %v668 = vadd.f32 %v413, %v667
        %v669 = vpop.f32.mrf.mxu0
        %v670 = vadd.f32 %v413, %v669
        %671 = vmatmul.bf16.gmra.mxu0 %v495
        %v672 = vpop.f32.mrf.mxu0
        %v673 = vadd.f32 %v413, %v672
        %v674 = vpop.f32.mrf.mxu0
        %v675 = vadd.f32 %v413, %v674
        %676 = vmatmul.bf16.gmra.mxu0 %v496
        %v677 = vpop.f32.mrf.mxu0
        %v678 = vadd.f32 %v413, %v677
        %v679 = vpop.f32.mrf.mxu0
        %v680 = vadd.f32 %v413, %v679
        %681 = vdwg.mxu0
        %682 = vmatpush.bf16.msra.mxu0 %v576
        %683 = vmatpush.bf16.msra.mxu0 %v574
        %684 = vmatpush.bf16.msra.mxu0 %v572
        %685 = vmatpush.bf16.msra.mxu0 %v570
        %686 = vmatpush.bf16.msra.mxu0 %v568
        %687 = vmatpush.bf16.msra.mxu0 %v566
        %688 = vmatpush.bf16.msra.mxu0 %v564
        %689 = vmatpush.bf16.msra.mxu0 %v562
        %690 = vmatmul.bf16.gmra.mxu0 %v481
        %v691 = vpop.f32.mrf.mxu0
        %v692 = vadd.f32 %v414, %v691
        %v693 = vpop.f32.mrf.mxu0
        %v694 = vadd.f32 %v414, %v693
        %695 = vmatmul.bf16.gmra.mxu0 %v482
        %v696 = vpop.f32.mrf.mxu0
        %v697 = vadd.f32 %v414, %v696
        %v698 = vpop.f32.mrf.mxu0
        %v699 = vadd.f32 %v414, %v698
        %700 = vmatmul.bf16.gmra.mxu0 %v483
        %v701 = vpop.f32.mrf.mxu0
        %v702 = vadd.f32 %v414, %v701
        %v703 = vpop.f32.mrf.mxu0
        %v704 = vadd.f32 %v414, %v703
        %705 = vmatmul.bf16.gmra.mxu0 %v484
        %v706 = vpop.f32.mrf.mxu0
        %v707 = vadd.f32 %v414, %v706
        %v708 = vpop.f32.mrf.mxu0
        %v709 = vadd.f32 %v414, %v708
        %710 = vmatmul.bf16.gmra.mxu0 %v485
        %v711 = vpop.f32.mrf.mxu0
        %v712 = vadd.f32 %v414, %v711
        %v713 = vpop.f32.mrf.mxu0
        %v714 = vadd.f32 %v414, %v713
        %715 = vmatmul.bf16.gmra.mxu0 %v486
        %v716 = vpop.f32.mrf.mxu0
        %v717 = vadd.f32 %v414, %v716
        %v718 = vpop.f32.mrf.mxu0
        %v719 = vadd.f32 %v414, %v718
        %720 = vmatmul.bf16.gmra.mxu0 %v487
        %v721 = vpop.f32.mrf.mxu0
        %v722 = vadd.f32 %v414, %v721
        %v723 = vpop.f32.mrf.mxu0
        %v724 = vadd.f32 %v414, %v723
        %725 = vmatmul.bf16.gmra.mxu0 %v488
        %v726 = vpop.f32.mrf.mxu0
        %v727 = vadd.f32 %v414, %v726
        %v728 = vpop.f32.mrf.mxu0
        %v729 = vadd.f32 %v414, %v728
        %730 = vmatmul.bf16.gmra.mxu0 %v489
        %v731 = vpop.f32.mrf.mxu0
        %v732 = vadd.f32 %v414, %v731
        %v733 = vpop.f32.mrf.mxu0
        %v734 = vadd.f32 %v414, %v733
        %735 = vmatmul.bf16.gmra.mxu0 %v490
        %v736 = vpop.f32.mrf.mxu0
        %v737 = vadd.f32 %v414, %v736
        %v738 = vpop.f32.mrf.mxu0
        %v739 = vadd.f32 %v414, %v738
        %740 = vmatmul.bf16.gmra.mxu0 %v491
        %v741 = vpop.f32.mrf.mxu0
        %v742 = vadd.f32 %v414, %v741
        %v743 = vpop.f32.mrf.mxu0
        %v744 = vadd.f32 %v414, %v743
        %745 = vmatmul.bf16.gmra.mxu0 %v492
        %v746 = vpop.f32.mrf.mxu0
        %v747 = vadd.f32 %v414, %v746
        %v748 = vpop.f32.mrf.mxu0
        %v749 = vadd.f32 %v414, %v748
        %750 = vmatmul.bf16.gmra.mxu0 %v493
        %v751 = vpop.f32.mrf.mxu0
        %v752 = vadd.f32 %v414, %v751
        %v753 = vpop.f32.mrf.mxu0
        %v754 = vadd.f32 %v414, %v753
        %755 = vmatmul.bf16.gmra.mxu0 %v494
        %v756 = vpop.f32.mrf.mxu0
        %v757 = vadd.f32 %v414, %v756
        %v758 = vpop.f32.mrf.mxu0
        %v759 = vadd.f32 %v414, %v758
        %760 = vmatmul.bf16.gmra.mxu0 %v495
        %v761 = vpop.f32.mrf.mxu0
        %v762 = vadd.f32 %v414, %v761
        %v763 = vpop.f32.mrf.mxu0
        %v764 = vadd.f32 %v414, %v763
        %765 = vmatmul.bf16.gmra.mxu0 %v496
        %v766 = vpop.f32.mrf.mxu0
        %v767 = vadd.f32 %v414, %v766
        %v768 = vpop.f32.mrf.mxu0
        %v769 = vadd.f32 %v414, %v768
        %770 = vdwg.mxu0
        %771 = vst [vmem:[#allocation2] sm:$0xff] 0.0
        %772 = vst [vmem:[#allocation2 + $0x8] sm:$0xff] 0.0
        %773 = vst [vmem:[#allocation2 + $0x10] sm:$0xff] 0.0
        %774 = vst [vmem:[#allocation2 + $0x18] sm:$0xff] 0.0
        %775 = vst [vmem:[#allocation2 + $0x220] sm:$0xff] 0.0
        %776 = vst [vmem:[#allocation2 + $0x228] sm:$0xff] 0.0
        %777 = vst [vmem:[#allocation2 + $0x230] sm:$0xff] 0.0
        %778 = vst [vmem:[#allocation2 + $0x238] sm:$0xff] 0.0
        %779 = vst [vmem:[#allocation2 + $0x20] sm:$0xff] %v603
        %780 = vst [vmem:[#allocation2 + $0x28] sm:$0xff] %v692
        %781 = vst [vmem:[#allocation2 + $0x30] sm:$0xff] %v605
        %782 = vst [vmem:[#allocation2 + $0x38] sm:$0xff] %v694
        %783 = vst [vmem:[#allocation2 + $0x40] sm:$0xff] %v608
        %784 = vst [vmem:[#allocation2 + $0x48] sm:$0xff] %v697
        %785 = vst [vmem:[#allocation2 + $0x50] sm:$0xff] %v610
        %786 = vst [vmem:[#allocation2 + $0x58] sm:$0xff] %v699
        %787 = vst [vmem:[#allocation2 + $0x60] sm:$0xff] %v613
        %788 = vst [vmem:[#allocation2 + $0x68] sm:$0xff] %v702
        %789 = vst [vmem:[#allocation2 + $0x70] sm:$0xff] %v615
        %790 = vst [vmem:[#allocation2 + $0x78] sm:$0xff] %v704
        %791 = vst [vmem:[#allocation2 + $0x80] sm:$0xff] %v618
        %792 = vst [vmem:[#allocation2 + $0x88] sm:$0xff] %v707
        %793 = vst [vmem:[#allocation2 + $0x90] sm:$0xff] %v620
        %794 = vst [vmem:[#allocation2 + $0x98] sm:$0xff] %v709
        %795 = vst [vmem:[#allocation2 + $0xa0] sm:$0xff] %v623
        %796 = vst [vmem:[#allocation2 + $0xa8] sm:$0xff] %v712
        %797 = vst [vmem:[#allocation2 + $0xb0] sm:$0xff] %v625
        %798 = vst [vmem:[#allocation2 + $0xb8] sm:$0xff] %v714
        %799 = vst [vmem:[#allocation2 + $0xc0] sm:$0xff] %v628
        %800 = vst [vmem:[#allocation2 + $0xc8] sm:$0xff] %v717
        %801 = vst [vmem:[#allocation2 + $0xd0] sm:$0xff] %v630
        %802 = vst [vmem:[#allocation2 + $0xd8] sm:$0xff] %v719
        %803 = vst [vmem:[#allocation2 + $0xe0] sm:$0xff] %v633
        %804 = vst [vmem:[#allocation2 + $0xe8] sm:$0xff] %v722
        %805 = vst [vmem:[#allocation2 + $0xf0] sm:$0xff] %v635
        %806 = vst [vmem:[#allocation2 + $0xf8] sm:$0xff] %v724
        %807 = vst [vmem:[#allocation2 + $0x100] sm:$0xff] %v638
        %808 = vst [vmem:[#allocation2 + $0x108] sm:$0xff] %v727
        %809 = vst [vmem:[#allocation2 + $0x110] sm:$0xff] %v640
        %810 = vst [vmem:[#allocation2 + $0x118] sm:$0xff] %v729
        %811 = vst [vmem:[#allocation2 + $0x120] sm:$0xff] %v643
        %812 = vst [vmem:[#allocation2 + $0x128] sm:$0xff] %v732
        %813 = vst [vmem:[#allocation2 + $0x130] sm:$0xff] %v645
        %814 = vst [vmem:[#allocation2 + $0x138] sm:$0xff] %v734
        %815 = vst [vmem:[#allocation2 + $0x140] sm:$0xff] %v648
        %816 = vst [vmem:[#allocation2 + $0x148] sm:$0xff] %v737
        %817 = vst [vmem:[#allocation2 + $0x150] sm:$0xff] %v650
        %818 = vst [vmem:[#allocation2 + $0x158] sm:$0xff] %v739
        %819 = vst [vmem:[#allocation2 + $0x160] sm:$0xff] %v653
        %820 = vst [vmem:[#allocation2 + $0x168] sm:$0xff] %v742
        %821 = vst [vmem:[#allocation2 + $0x170] sm:$0xff] %v655
        %822 = vst [vmem:[#allocation2 + $0x178] sm:$0xff] %v744
        %823 = vst [vmem:[#allocation2 + $0x180] sm:$0xff] %v658
        %824 = vst [vmem:[#allocation2 + $0x188] sm:$0xff] %v747
        %825 = vst [vmem:[#allocation2 + $0x190] sm:$0xff] %v660
        %826 = vst [vmem:[#allocation2 + $0x198] sm:$0xff] %v749
        %827 = vst [vmem:[#allocation2 + $0x1a0] sm:$0xff] %v663
        %828 = vst [vmem:[#allocation2 + $0x1a8] sm:$0xff] %v752
        %829 = vst [vmem:[#allocation2 + $0x1b0] sm:$0xff] %v665
        %830 = vst [vmem:[#allocation2 + $0x1b8] sm:$0xff] %v754
        %831 = vst [vmem:[#allocation2 + $0x1c0] sm:$0xff] %v668
        %832 = vst [vmem:[#allocation2 + $0x1c8] sm:$0xff] %v757
        %833 = vst [vmem:[#allocation2 + $0x1d0] sm:$0xff] %v670
        %834 = vst [vmem:[#allocation2 + $0x1d8] sm:$0xff] %v759
        %835 = vst [vmem:[#allocation2 + $0x1e0] sm:$0xff] %v673
        %836 = vst [vmem:[#allocation2 + $0x1e8] sm:$0xff] %v762
        %837 = vst [vmem:[#allocation2 + $0x1f0] sm:$0xff] %v675
        %838 = vst [vmem:[#allocation2 + $0x1f8] sm:$0xff] %v764
        %839 = vst [vmem:[#allocation2 + $0x200] sm:$0xff] %v678
        %840 = vst [vmem:[#allocation2 + $0x208] sm:$0xff] %v767
        %841 = vst [vmem:[#allocation2 + $0x210] sm:$0xff] %v680
        %842 = vst [vmem:[#allocation2 + $0x218] sm:$0xff] %v769
        %v843 = vlaneseq
        %v844 = vshrl.u32 %v843, 7
        %v845 = vadd.s32 %v844, 8
        %v846 = vadd.s32 %v844, 16
        %v847 = vadd.s32 %v844, 24
        %v848 = vadd.s32 %v844, 32
        %v849 = vadd.s32 %v844, 40
        %v850 = vadd.s32 %v844, 48
        %v851 = vadd.s32 %v844, 56
        %v852 = vadd.s32 %v844, 64
        %v853 = vadd.s32 %v844, 72
        %v854 = vadd.s32 %v844, 80
        %v855 = vadd.s32 %v844, 88
        %v856 = vadd.s32 %v844, 96
        %v857 = vadd.s32 %v844, 104
        %v858 = vadd.s32 %v844, 112
        %v859 = vadd.s32 %v844, 120
        %v860 = vadd.s32 %v844, 128
        %v861 = vadd.s32 %v844, 136
        %v862 = vadd.s32 %v844, 144
        %v863 = vadd.s32 %v844, 152
        %v864 = vadd.s32 %v844, 160
        %v865 = vadd.s32 %v844, 168
        %v866 = vadd.s32 %v844, 176
        %v867 = vadd.s32 %v844, 184
        %v868 = vadd.s32 %v844, 192
        %v869 = vadd.s32 %v844, 200
        %v870 = vadd.s32 %v844, 208
        %v871 = vadd.s32 %v844, 216
        %v872 = vadd.s32 %v844, 224
        %v873 = vadd.s32 %v844, 232
        %v874 = vadd.s32 %v844, 240
        %v875 = vadd.s32 %v844, 248
        %v876 = vand.u32 %v844, 15
        %v877 = vand.u32 %v845, 15
        %v878 = vand.u32 %v846, 15
        %v879 = vand.u32 %v847, 15
        %v880 = vand.u32 %v848, 15
        %v881 = vand.u32 %v849, 15
        %v882 = vand.u32 %v850, 15
        %v883 = vand.u32 %v851, 15
        %v884 = vand.u32 %v852, 15
        %v885 = vand.u32 %v853, 15
        %v886 = vand.u32 %v854, 15
        %v887 = vand.u32 %v855, 15
        %v888 = vand.u32 %v856, 15
        %v889 = vand.u32 %v857, 15
        %v890 = vand.u32 %v858, 15
        %v891 = vand.u32 %v859, 15
        %v892 = vand.u32 %v860, 15
        %v893 = vand.u32 %v861, 15
        %v894 = vand.u32 %v862, 15
        %v895 = vand.u32 %v863, 15
        %v896 = vand.u32 %v864, 15
        %v897 = vand.u32 %v865, 15
        %v898 = vand.u32 %v866, 15
        %v899 = vand.u32 %v867, 15
        %v900 = vand.u32 %v868, 15
        %v901 = vand.u32 %v869, 15
        %v902 = vand.u32 %v870, 15
        %v903 = vand.u32 %v871, 15
        %v904 = vand.u32 %v872, 15
        %v905 = vand.u32 %v873, 15
        %v906 = vand.u32 %v874, 15
        %v907 = vand.u32 %v875, 15
        %vm908 = vcmp.ge.s32.totalorder %v876, 1
        %vm909 = vcmp.ge.s32.totalorder %v877, 1
        %vm910 = vcmp.ge.s32.totalorder %v878, 1
        %vm911 = vcmp.ge.s32.totalorder %v879, 1
        %vm912 = vcmp.ge.s32.totalorder %v880, 1
        %vm913 = vcmp.ge.s32.totalorder %v881, 1
        %vm914 = vcmp.ge.s32.totalorder %v882, 1
        %vm915 = vcmp.ge.s32.totalorder %v883, 1
        %vm916 = vcmp.ge.s32.totalorder %v884, 1
        %vm917 = vcmp.ge.s32.totalorder %v885, 1
        %vm918 = vcmp.ge.s32.totalorder %v886, 1
        %vm919 = vcmp.ge.s32.totalorder %v887, 1
        %vm920 = vcmp.ge.s32.totalorder %v888, 1
        %vm921 = vcmp.ge.s32.totalorder %v889, 1
        %vm922 = vcmp.ge.s32.totalorder %v890, 1
        %vm923 = vcmp.ge.s32.totalorder %v891, 1
        %vm924 = vcmp.ge.s32.totalorder %v892, 1
        %vm925 = vcmp.ge.s32.totalorder %v893, 1
        %vm926 = vcmp.ge.s32.totalorder %v894, 1
        %vm927 = vcmp.ge.s32.totalorder %v895, 1
        %vm928 = vcmp.ge.s32.totalorder %v896, 1
        %vm929 = vcmp.ge.s32.totalorder %v897, 1
        %vm930 = vcmp.ge.s32.totalorder %v898, 1
        %vm931 = vcmp.ge.s32.totalorder %v899, 1
        %vm932 = vcmp.ge.s32.totalorder %v900, 1
        %vm933 = vcmp.ge.s32.totalorder %v901, 1
        %vm934 = vcmp.ge.s32.totalorder %v902, 1
        %vm935 = vcmp.ge.s32.totalorder %v903, 1
        %vm936 = vcmp.ge.s32.totalorder %v904, 1
        %vm937 = vcmp.ge.s32.totalorder %v905, 1
        %vm938 = vcmp.ge.s32.totalorder %v906, 1
        %vm939 = vcmp.ge.s32.totalorder %v907, 1
        %v940 = vsel %vm908, 1, 0
        %v941 = vsel %vm909, 1, 0
        %v942 = vsel %vm910, 1, 0
        %v943 = vsel %vm911, 1, 0
        %v944 = vsel %vm912, 1, 0
        %v945 = vsel %vm913, 1, 0
        %v946 = vsel %vm914, 1, 0
        %v947 = vsel %vm915, 1, 0
        %v948 = vsel %vm916, 1, 0
        %v949 = vsel %vm917, 1, 0
        %v950 = vsel %vm918, 1, 0
        %v951 = vsel %vm919, 1, 0
        %v952 = vsel %vm920, 1, 0
        %v953 = vsel %vm921, 1, 0
        %v954 = vsel %vm922, 1, 0
        %v955 = vsel %vm923, 1, 0
        %v956 = vsel %vm924, 1, 0
        %v957 = vsel %vm925, 1, 0
        %v958 = vsel %vm926, 1, 0
        %v959 = vsel %vm927, 1, 0
        %v960 = vsel %vm928, 1, 0
        %v961 = vsel %vm929, 1, 0
        %v962 = vsel %vm930, 1, 0
        %v963 = vsel %vm931, 1, 0
        %v964 = vsel %vm932, 1, 0
        %v965 = vsel %vm933, 1, 0
        %v966 = vsel %vm934, 1, 0
        %v967 = vsel %vm935, 1, 0
        %v968 = vsel %vm936, 1, 0
        %v969 = vsel %vm937, 1, 0
        %v970 = vsel %vm938, 1, 0
        %v971 = vsel %vm939, 1, 0
        %v972 = vcvt.s32.f32 %v940
        %v973 = vcvt.s32.f32 %v941
        %v974 = vcvt.s32.f32 %v942
        %v975 = vcvt.s32.f32 %v943
        %v976 = vcvt.s32.f32 %v944
        %v977 = vcvt.s32.f32 %v945
        %v978 = vcvt.s32.f32 %v946
        %v979 = vcvt.s32.f32 %v947
        %v980 = vcvt.s32.f32 %v948
        %v981 = vcvt.s32.f32 %v949
        %v982 = vcvt.s32.f32 %v950
        %v983 = vcvt.s32.f32 %v951
        %v984 = vcvt.s32.f32 %v952
        %v985 = vcvt.s32.f32 %v953
        %v986 = vcvt.s32.f32 %v954
        %v987 = vcvt.s32.f32 %v955
        %v988 = vcvt.s32.f32 %v956
        %v989 = vcvt.s32.f32 %v957
        %v990 = vcvt.s32.f32 %v958
        %v991 = vcvt.s32.f32 %v959
        %v992 = vcvt.s32.f32 %v960
        %v993 = vcvt.s32.f32 %v961
        %v994 = vcvt.s32.f32 %v962
        %v995 = vcvt.s32.f32 %v963
        %v996 = vcvt.s32.f32 %v964
        %v997 = vcvt.s32.f32 %v965
        %v998 = vcvt.s32.f32 %v966
        %v999 = vcvt.s32.f32 %v967
        %v1000 = vcvt.s32.f32 %v968
        %v1001 = vcvt.s32.f32 %v969
        %v1002 = vcvt.s32.f32 %v970
        %v1003 = vcvt.s32.f32 %v971
        %vm1004 = vcmp.le.s32.totalorder %v876, 14
        %vm1005 = vcmp.le.s32.totalorder %v877, 14
        %vm1006 = vcmp.le.s32.totalorder %v878, 14
        %vm1007 = vcmp.le.s32.totalorder %v879, 14
        %vm1008 = vcmp.le.s32.totalorder %v880, 14
        %vm1009 = vcmp.le.s32.totalorder %v881, 14
        %vm1010 = vcmp.le.s32.totalorder %v882, 14
        %vm1011 = vcmp.le.s32.totalorder %v883, 14
        %vm1012 = vcmp.le.s32.totalorder %v884, 14
        %vm1013 = vcmp.le.s32.totalorder %v885, 14
        %vm1014 = vcmp.le.s32.totalorder %v886, 14
        %vm1015 = vcmp.le.s32.totalorder %v887, 14
        %vm1016 = vcmp.le.s32.totalorder %v888, 14
        %vm1017 = vcmp.le.s32.totalorder %v889, 14
        %vm1018 = vcmp.le.s32.totalorder %v890, 14
        %vm1019 = vcmp.le.s32.totalorder %v891, 14
        %vm1020 = vcmp.le.s32.totalorder %v892, 14
        %vm1021 = vcmp.le.s32.totalorder %v893, 14
        %vm1022 = vcmp.le.s32.totalorder %v894, 14
        %vm1023 = vcmp.le.s32.totalorder %v895, 14
        %vm1024 = vcmp.le.s32.totalorder %v896, 14
        %vm1025 = vcmp.le.s32.totalorder %v897, 14
        %vm1026 = vcmp.le.s32.totalorder %v898, 14
        %vm1027 = vcmp.le.s32.totalorder %v899, 14
        %vm1028 = vcmp.le.s32.totalorder %v900, 14
        %vm1029 = vcmp.le.s32.totalorder %v901, 14
        %vm1030 = vcmp.le.s32.totalorder %v902, 14
        %vm1031 = vcmp.le.s32.totalorder %v903, 14
        %vm1032 = vcmp.le.s32.totalorder %v904, 14
        %vm1033 = vcmp.le.s32.totalorder %v905, 14
        %vm1034 = vcmp.le.s32.totalorder %v906, 14
        %vm1035 = vcmp.le.s32.totalorder %v907, 14
        %v1036 = vsel %vm1004, 1, 0
        %v1037 = vsel %vm1005, 1, 0
        %v1038 = vsel %vm1006, 1, 0
        %v1039 = vsel %vm1007, 1, 0
        %v1040 = vsel %vm1008, 1, 0
        %v1041 = vsel %vm1009, 1, 0
        %v1042 = vsel %vm1010, 1, 0
        %v1043 = vsel %vm1011, 1, 0
        %v1044 = vsel %vm1012, 1, 0
        %v1045 = vsel %vm1013, 1, 0
        %v1046 = vsel %vm1014, 1, 0
        %v1047 = vsel %vm1015, 1, 0
        %v1048 = vsel %vm1016, 1, 0
        %v1049 = vsel %vm1017, 1, 0
        %v1050 = vsel %vm1018, 1, 0
        %v1051 = vsel %vm1019, 1, 0
        %v1052 = vsel %vm1020, 1, 0
        %v1053 = vsel %vm1021, 1, 0
        %v1054 = vsel %vm1022, 1, 0
        %v1055 = vsel %vm1023, 1, 0
        %v1056 = vsel %vm1024, 1, 0
        %v1057 = vsel %vm1025, 1, 0
        %v1058 = vsel %vm1026, 1, 0
        %v1059 = vsel %vm1027, 1, 0
        %v1060 = vsel %vm1028, 1, 0
        %v1061 = vsel %vm1029, 1, 0
        %v1062 = vsel %vm1030, 1, 0
        %v1063 = vsel %vm1031, 1, 0
        %v1064 = vsel %vm1032, 1, 0
        %v1065 = vsel %vm1033, 1, 0
        %v1066 = vsel %vm1034, 1, 0
        %v1067 = vsel %vm1035, 1, 0
        %v1068 = vcvt.s32.f32 %v1036
        %v1069 = vcvt.s32.f32 %v1037
        %v1070 = vcvt.s32.f32 %v1038
        %v1071 = vcvt.s32.f32 %v1039
        %v1072 = vcvt.s32.f32 %v1040
        %v1073 = vcvt.s32.f32 %v1041
        %v1074 = vcvt.s32.f32 %v1042
        %v1075 = vcvt.s32.f32 %v1043
        %v1076 = vcvt.s32.f32 %v1044
        %v1077 = vcvt.s32.f32 %v1045
        %v1078 = vcvt.s32.f32 %v1046
        %v1079 = vcvt.s32.f32 %v1047
        %v1080 = vcvt.s32.f32 %v1048
        %v1081 = vcvt.s32.f32 %v1049
        %v1082 = vcvt.s32.f32 %v1050
        %v1083 = vcvt.s32.f32 %v1051
        %v1084 = vcvt.s32.f32 %v1052
        %v1085 = vcvt.s32.f32 %v1053
        %v1086 = vcvt.s32.f32 %v1054
        %v1087 = vcvt.s32.f32 %v1055
        %v1088 = vcvt.s32.f32 %v1056
        %v1089 = vcvt.s32.f32 %v1057
        %v1090 = vcvt.s32.f32 %v1058
        %v1091 = vcvt.s32.f32 %v1059
        %v1092 = vcvt.s32.f32 %v1060
        %v1093 = vcvt.s32.f32 %v1061
        %v1094 = vcvt.s32.f32 %v1062
        %v1095 = vcvt.s32.f32 %v1063
        %v1096 = vcvt.s32.f32 %v1064
        %v1097 = vcvt.s32.f32 %v1065
        %v1098 = vcvt.s32.f32 %v1066
        %v1099 = vcvt.s32.f32 %v1067
        %v1100 = vld [vmem:[#allocation9] sm:$0xff]
        %v1101 = vld [vmem:[#allocation9 + $0x8] sm:$0xff]
        %v1102 = vld [vmem:[#allocation9 + $0x10] sm:$0x1]
        %v1103 = vld [vmem:[#allocation9 + $0x18] sm:$0x1]
        %v1104 = vld [vmem:[%s4] sm:$0x3]
        %v1106 = vperm.slane %v1104, 0
        %v1107 = vperm.slane %v1104, 1
        %v1110 = vadd.f32 %v1106, 0.0
        %v1111 = vadd.f32 %v1107, 0.0
        %v1112 = vld [vmem:[#allocation2] sm:$0xff]
        %v1113 = vld [vmem:[#allocation2 + $0x8] sm:$0xff]
        %v1114 = vld [vmem:[#allocation2 + $0x10] sm:$0xff]
        %v1115 = vld [vmem:[#allocation2 + $0x18] sm:$0xff]
        %v1116 = vld [vmem:[#allocation2 + $0x20] sm:$0xff]
        %v1117 = vld [vmem:[#allocation2 + $0x28] sm:$0xff]
        %v1118 = vld [vmem:[#allocation2 + $0x30] sm:$0xff]
        %v1119 = vld [vmem:[#allocation2 + $0x38] sm:$0xff]
        %v1120 = vld [vmem:[#allocation2 + $0x40] sm:$0xff]
        %v1121 = vld [vmem:[#allocation2 + $0x48] sm:$0xff]
        %v1122 = vld [vmem:[#allocation2 + $0x50] sm:$0xff]
        %v1123 = vld [vmem:[#allocation2 + $0x58] sm:$0xff]
        %v1124 = vld [vmem:[#allocation2 + $0x60] sm:$0xff]
        %v1125 = vld [vmem:[#allocation2 + $0x68] sm:$0xff]
        %v1126 = vld [vmem:[#allocation2 + $0x70] sm:$0xff]
        %v1127 = vld [vmem:[#allocation2 + $0x78] sm:$0xff]
        %v1128 = vld [vmem:[#allocation2 + $0x80] sm:$0xff]
        %v1129 = vld [vmem:[#allocation2 + $0x88] sm:$0xff]
        %v1130 = vld [vmem:[#allocation2 + $0x90] sm:$0xff]
        %v1131 = vld [vmem:[#allocation2 + $0x98] sm:$0xff]
        %v1132 = vld [vmem:[#allocation2 + $0xa0] sm:$0xff]
        %v1133 = vld [vmem:[#allocation2 + $0xa8] sm:$0xff]
        %v1134 = vld [vmem:[#allocation2 + $0xb0] sm:$0xff]
        %v1135 = vld [vmem:[#allocation2 + $0xb8] sm:$0xff]
        %v1136 = vld [vmem:[#allocation2 + $0xc0] sm:$0xff]
        %v1137 = vld [vmem:[#allocation2 + $0xc8] sm:$0xff]
        %v1138 = vld [vmem:[#allocation2 + $0xd0] sm:$0xff]
        %v1139 = vld [vmem:[#allocation2 + $0xd8] sm:$0xff]
        %v1140 = vld [vmem:[#allocation2 + $0xe0] sm:$0xff]
        %v1141 = vld [vmem:[#allocation2 + $0xe8] sm:$0xff]
        %v1142 = vld [vmem:[#allocation2 + $0xf0] sm:$0xff]
        %v1143 = vld [vmem:[#allocation2 + $0xf8] sm:$0xff]
        %v1144 = vld [vmem:[#allocation2 + $0x100] sm:$0xff]
        %v1145 = vld [vmem:[#allocation2 + $0x108] sm:$0xff]
        %v1146 = vld [vmem:[#allocation2 + $0x110] sm:$0xff]
        %v1147 = vld [vmem:[#allocation2 + $0x118] sm:$0xff]
        %v1148 = vld [vmem:[#allocation2 + $0x120] sm:$0xff]
        %v1149 = vld [vmem:[#allocation2 + $0x128] sm:$0xff]
        %v1150 = vld [vmem:[#allocation2 + $0x130] sm:$0xff]
        %v1151 = vld [vmem:[#allocation2 + $0x138] sm:$0xff]
        %v1152 = vld [vmem:[#allocation2 + $0x140] sm:$0xff]
        %v1153 = vld [vmem:[#allocation2 + $0x148] sm:$0xff]
        %v1154 = vld [vmem:[#allocation2 + $0x150] sm:$0xff]
        %v1155 = vld [vmem:[#allocation2 + $0x158] sm:$0xff]
        %v1156 = vld [vmem:[#allocation2 + $0x160] sm:$0xff]
        %v1157 = vld [vmem:[#allocation2 + $0x168] sm:$0xff]
        %v1158 = vld [vmem:[#allocation2 + $0x170] sm:$0xff]
        %v1159 = vld [vmem:[#allocation2 + $0x178] sm:$0xff]
        %v1160 = vld [vmem:[#allocation2 + $0x180] sm:$0xff]
        %v1161 = vld [vmem:[#allocation2 + $0x188] sm:$0xff]
        %v1162 = vld [vmem:[#allocation2 + $0x190] sm:$0xff]
        %v1163 = vld [vmem:[#allocation2 + $0x198] sm:$0xff]
        %v1164 = vld [vmem:[#allocation2 + $0x1a0] sm:$0xff]
        %v1165 = vld [vmem:[#allocation2 + $0x1a8] sm:$0xff]
        %v1166 = vld [vmem:[#allocation2 + $0x1b0] sm:$0xff]
        %v1167 = vld [vmem:[#allocation2 + $0x1b8] sm:$0xff]
        %v1168 = vld [vmem:[#allocation2 + $0x1c0] sm:$0xff]
        %v1169 = vld [vmem:[#allocation2 + $0x1c8] sm:$0xff]
        %v1170 = vld [vmem:[#allocation2 + $0x1d0] sm:$0xff]
        %v1171 = vld [vmem:[#allocation2 + $0x1d8] sm:$0xff]
        %v1172 = vld [vmem:[#allocation2 + $0x1e0] sm:$0xff]
        %v1173 = vld [vmem:[#allocation2 + $0x1e8] sm:$0xff]
        %v1174 = vld [vmem:[#allocation2 + $0x1f0] sm:$0xff]
        %v1175 = vld [vmem:[#allocation2 + $0x1f8] sm:$0xff]
        %v1176 = vrot.slane %v1112, 7
        %v1177 = vrot.slane %v1113, 7
        %v1178 = vrot.slane %v1114, 7
        %v1179 = vrot.slane %v1115, 7
        %v1180 = vrot.slane %v1116, 7
        %v1181 = vrot.slane %v1117, 7
        %v1182 = vrot.slane %v1118, 7
        %v1183 = vrot.slane %v1119, 7
        %v1184 = vrot.slane %v1120, 7
        %v1185 = vrot.slane %v1121, 7
        %v1186 = vrot.slane %v1122, 7
        %v1187 = vrot.slane %v1123, 7
        %v1188 = vrot.slane %v1124, 7
        %v1189 = vrot.slane %v1125, 7
        %v1190 = vrot.slane %v1126, 7
        %v1191 = vrot.slane %v1127, 7
        %v1192 = vrot.slane %v1128, 7
        %v1193 = vrot.slane %v1129, 7
        %v1194 = vrot.slane %v1130, 7
        %v1195 = vrot.slane %v1131, 7
        %v1196 = vrot.slane %v1132, 7
        %v1197 = vrot.slane %v1133, 7
        %v1198 = vrot.slane %v1134, 7
        %v1199 = vrot.slane %v1135, 7
        %v1200 = vrot.slane %v1136, 7
        %v1201 = vrot.slane %v1137, 7
        %v1202 = vrot.slane %v1138, 7
        %v1203 = vrot.slane %v1139, 7
        %v1204 = vrot.slane %v1140, 7
        %v1205 = vrot.slane %v1141, 7
        %v1206 = vrot.slane %v1142, 7
        %v1207 = vrot.slane %v1143, 7
        %v1208 = vrot.slane %v1144, 7
        %v1209 = vrot.slane %v1145, 7
        %v1210 = vrot.slane %v1146, 7
        %v1211 = vrot.slane %v1147, 7
        %v1212 = vrot.slane %v1148, 7
        %v1213 = vrot.slane %v1149, 7
        %v1214 = vrot.slane %v1150, 7
        %v1215 = vrot.slane %v1151, 7
        %v1216 = vrot.slane %v1152, 7
        %v1217 = vrot.slane %v1153, 7
        %v1218 = vrot.slane %v1154, 7
        %v1219 = vrot.slane %v1155, 7
        %v1220 = vrot.slane %v1156, 7
        %v1221 = vrot.slane %v1157, 7
        %v1222 = vrot.slane %v1158, 7
        %v1223 = vrot.slane %v1159, 7
        %v1224 = vrot.slane %v1160, 7
        %v1225 = vrot.slane %v1161, 7
        %v1226 = vrot.slane %v1162, 7
        %v1227 = vrot.slane %v1163, 7
        %v1228 = vrot.slane %v1164, 7
        %v1229 = vrot.slane %v1165, 7
        %v1230 = vrot.slane %v1166, 7
        %v1231 = vrot.slane %v1167, 7
        %v1232 = vrot.slane %v1168, 7
        %v1233 = vrot.slane %v1169, 7
        %v1234 = vrot.slane %v1170, 7
        %v1235 = vrot.slane %v1171, 7
        %v1236 = vrot.slane %v1172, 7
        %v1237 = vrot.slane %v1173, 7
        %v1238 = vrot.slane %v1174, 7
        %v1239 = vrot.slane %v1175, 7
        %vm1240 = vcmp.lt.s32.totalorder %v844, 1
        %v1241 = vsel %vm1240, %v1236, %v1238
        %v1242 = vsel %vm1240, %v1237, %v1239
        %v1243 = vsel %vm1240, %v1234, %v1236
        %v1244 = vsel %vm1240, %v1235, %v1237
        %v1245 = vsel %vm1240, %v1232, %v1234
        %v1246 = vsel %vm1240, %v1233, %v1235
        %v1247 = vsel %vm1240, %v1230, %v1232
        %v1248 = vsel %vm1240, %v1231, %v1233
        %v1249 = vsel %vm1240, %v1228, %v1230
        %v1250 = vsel %vm1240, %v1229, %v1231
        %v1251 = vsel %vm1240, %v1226, %v1228
        %v1252 = vsel %vm1240, %v1227, %v1229
        %v1253 = vsel %vm1240, %v1224, %v1226
        %v1254 = vsel %vm1240, %v1225, %v1227
        %v1255 = vsel %vm1240, %v1222, %v1224
        %v1256 = vsel %vm1240, %v1223, %v1225
        %v1257 = vsel %vm1240, %v1220, %v1222
        %v1258 = vsel %vm1240, %v1221, %v1223
        %v1259 = vsel %vm1240, %v1218, %v1220
        %v1260 = vsel %vm1240, %v1219, %v1221
        %v1261 = vsel %vm1240, %v1216, %v1218
        %v1262 = vsel %vm1240, %v1217, %v1219
        %v1263 = vsel %vm1240, %v1214, %v1216
        %v1264 = vsel %vm1240, %v1215, %v1217
        %v1265 = vsel %vm1240, %v1212, %v1214
        %v1266 = vsel %vm1240, %v1213, %v1215
        %v1267 = vsel %vm1240, %v1210, %v1212
        %v1268 = vsel %vm1240, %v1211, %v1213
        %v1269 = vsel %vm1240, %v1208, %v1210
        %v1270 = vsel %vm1240, %v1209, %v1211
        %v1271 = vsel %vm1240, %v1206, %v1208
        %v1272 = vsel %vm1240, %v1207, %v1209
        %v1273 = vsel %vm1240, %v1204, %v1206
        %v1274 = vsel %vm1240, %v1205, %v1207
        %v1275 = vsel %vm1240, %v1202, %v1204
        %v1276 = vsel %vm1240, %v1203, %v1205
        %v1277 = vsel %vm1240, %v1200, %v1202
        %v1278 = vsel %vm1240, %v1201, %v1203
        %v1279 = vsel %vm1240, %v1198, %v1200
        %v1280 = vsel %vm1240, %v1199, %v1201
        %v1281 = vsel %vm1240, %v1196, %v1198
        %v1282 = vsel %vm1240, %v1197, %v1199
        %v1283 = vsel %vm1240, %v1194, %v1196
        %v1284 = vsel %vm1240, %v1195, %v1197
        %v1285 = vsel %vm1240, %v1192, %v1194
        %v1286 = vsel %vm1240, %v1193, %v1195
        %v1287 = vsel %vm1240, %v1190, %v1192
        %v1288 = vsel %vm1240, %v1191, %v1193
        %v1289 = vsel %vm1240, %v1188, %v1190
        %v1290 = vsel %vm1240, %v1189, %v1191
        %v1291 = vsel %vm1240, %v1186, %v1188
        %v1292 = vsel %vm1240, %v1187, %v1189
        %v1293 = vsel %vm1240, %v1184, %v1186
        %v1294 = vsel %vm1240, %v1185, %v1187
        %v1295 = vsel %vm1240, %v1182, %v1184
        %v1296 = vsel %vm1240, %v1183, %v1185
        %v1297 = vsel %vm1240, %v1180, %v1182
        %v1298 = vsel %vm1240, %v1181, %v1183
        %v1299 = vsel %vm1240, %v1178, %v1180
        %v1300 = vsel %vm1240, %v1179, %v1181
        %v1301 = vsel %vm1240, %v1176, %v1178
        %v1302 = vsel %vm1240, %v1177, %v1179
        %v1303 = vsel %vm1240, %v1238, %v1176
        %v1304 = vsel %vm1240, %v1239, %v1177
        %v1305 = vrot.slane %v1112, 1
        %v1306 = vrot.slane %v1113, 1
        %v1307 = vrot.slane %v1114, 1
        %v1308 = vrot.slane %v1115, 1
        %v1309 = vrot.slane %v1116, 1
        %v1310 = vrot.slane %v1117, 1
        %v1311 = vrot.slane %v1118, 1
        %v1312 = vrot.slane %v1119, 1
        %v1313 = vrot.slane %v1120, 1
        %v1314 = vrot.slane %v1121, 1
        %v1315 = vrot.slane %v1122, 1
        %v1316 = vrot.slane %v1123, 1
        %v1317 = vrot.slane %v1124, 1
        %v1318 = vrot.slane %v1125, 1
        %v1319 = vrot.slane %v1126, 1
        %v1320 = vrot.slane %v1127, 1
        %v1321 = vrot.slane %v1128, 1
        %v1322 = vrot.slane %v1129, 1
        %v1323 = vrot.slane %v1130, 1
        %v1324 = vrot.slane %v1131, 1
        %v1325 = vrot.slane %v1132, 1
        %v1326 = vrot.slane %v1133, 1
        %v1327 = vrot.slane %v1134, 1
        %v1328 = vrot.slane %v1135, 1
        %v1329 = vrot.slane %v1136, 1
        %v1330 = vrot.slane %v1137, 1
        %v1331 = vrot.slane %v1138, 1
        %v1332 = vrot.slane %v1139, 1
        %v1333 = vrot.slane %v1140, 1
        %v1334 = vrot.slane %v1141, 1
        %v1335 = vrot.slane %v1142, 1
        %v1336 = vrot.slane %v1143, 1
        %v1337 = vrot.slane %v1144, 1
        %v1338 = vrot.slane %v1145, 1
        %v1339 = vrot.slane %v1146, 1
        %v1340 = vrot.slane %v1147, 1
        %v1341 = vrot.slane %v1148, 1
        %v1342 = vrot.slane %v1149, 1
        %v1343 = vrot.slane %v1150, 1
        %v1344 = vrot.slane %v1151, 1
        %v1345 = vrot.slane %v1152, 1
        %v1346 = vrot.slane %v1153, 1
        %v1347 = vrot.slane %v1154, 1
        %v1348 = vrot.slane %v1155, 1
        %v1349 = vrot.slane %v1156, 1
        %v1350 = vrot.slane %v1157, 1
        %v1351 = vrot.slane %v1158, 1
        %v1352 = vrot.slane %v1159, 1
        %v1353 = vrot.slane %v1160, 1
        %v1354 = vrot.slane %v1161, 1
        %v1355 = vrot.slane %v1162, 1
        %v1356 = vrot.slane %v1163, 1
        %v1357 = vrot.slane %v1164, 1
        %v1358 = vrot.slane %v1165, 1
        %v1359 = vrot.slane %v1166, 1
        %v1360 = vrot.slane %v1167, 1
        %v1361 = vrot.slane %v1168, 1
        %v1362 = vrot.slane %v1169, 1
        %v1363 = vrot.slane %v1170, 1
        %v1364 = vrot.slane %v1171, 1
        %v1365 = vrot.slane %v1172, 1
        %v1366 = vrot.slane %v1173, 1
        %v1367 = vrot.slane %v1174, 1
        %v1368 = vrot.slane %v1175, 1
        %vm1369 = vcmp.lt.s32.totalorder %v844, 7
        %v1370 = vsel %vm1369, %v1365, %v1367
        %v1371 = vsel %vm1369, %v1366, %v1368
        %v1372 = vsel %vm1369, %v1363, %v1365
        %v1373 = vsel %vm1369, %v1364, %v1366
        %v1374 = vsel %vm1369, %v1361, %v1363
        %v1375 = vsel %vm1369, %v1362, %v1364
        %v1376 = vsel %vm1369, %v1359, %v1361
        %v1377 = vsel %vm1369, %v1360, %v1362
        %v1378 = vsel %vm1369, %v1357, %v1359
        %v1379 = vsel %vm1369, %v1358, %v1360
        %v1380 = vsel %vm1369, %v1355, %v1357
        %v1381 = vsel %vm1369, %v1356, %v1358
        %v1382 = vsel %vm1369, %v1353, %v1355
        %v1383 = vsel %vm1369, %v1354, %v1356
        %v1384 = vsel %vm1369, %v1351, %v1353
        %v1385 = vsel %vm1369, %v1352, %v1354
        %v1386 = vsel %vm1369, %v1349, %v1351
        %v1387 = vsel %vm1369, %v1350, %v1352
        %v1388 = vsel %vm1369, %v1347, %v1349
        %v1389 = vsel %vm1369, %v1348, %v1350
        %v1390 = vsel %vm1369, %v1345, %v1347
        %v1391 = vsel %vm1369, %v1346, %v1348
        %v1392 = vsel %vm1369, %v1343, %v1345
        %v1393 = vsel %vm1369, %v1344, %v1346
        %v1394 = vsel %vm1369, %v1341, %v1343
        %v1395 = vsel %vm1369, %v1342, %v1344
        %v1396 = vsel %vm1369, %v1339, %v1341
        %v1397 = vsel %vm1369, %v1340, %v1342
        %v1398 = vsel %vm1369, %v1337, %v1339
        %v1399 = vsel %vm1369, %v1338, %v1340
        %v1400 = vsel %vm1369, %v1335, %v1337
        %v1401 = vsel %vm1369, %v1336, %v1338
        %v1402 = vsel %vm1369, %v1333, %v1335
        %v1403 = vsel %vm1369, %v1334, %v1336
        %v1404 = vsel %vm1369, %v1331, %v1333
        %v1405 = vsel %vm1369, %v1332, %v1334
        %v1406 = vsel %vm1369, %v1329, %v1331
        %v1407 = vsel %vm1369, %v1330, %v1332
        %v1408 = vsel %vm1369, %v1327, %v1329
        %v1409 = vsel %vm1369, %v1328, %v1330
        %v1410 = vsel %vm1369, %v1325, %v1327
        %v1411 = vsel %vm1369, %v1326, %v1328
        %v1412 = vsel %vm1369, %v1323, %v1325
        %v1413 = vsel %vm1369, %v1324, %v1326
        %v1414 = vsel %vm1369, %v1321, %v1323
        %v1415 = vsel %vm1369, %v1322, %v1324
        %v1416 = vsel %vm1369, %v1319, %v1321
        %v1417 = vsel %vm1369, %v1320, %v1322
        %v1418 = vsel %vm1369, %v1317, %v1319
        %v1419 = vsel %vm1369, %v1318, %v1320
        %v1420 = vsel %vm1369, %v1315, %v1317
        %v1421 = vsel %vm1369, %v1316, %v1318
        %v1422 = vsel %vm1369, %v1313, %v1315
        %v1423 = vsel %vm1369, %v1314, %v1316
        %v1424 = vsel %vm1369, %v1311, %v1313
        %v1425 = vsel %vm1369, %v1312, %v1314
        %v1426 = vsel %vm1369, %v1309, %v1311
        %v1427 = vsel %vm1369, %v1310, %v1312
        %v1428 = vsel %vm1369, %v1307, %v1309
        %v1429 = vsel %vm1369, %v1308, %v1310
        %v1430 = vsel %vm1369, %v1305, %v1307
        %v1431 = vsel %vm1369, %v1306, %v1308
        %v1432 = vsel %vm1369, %v1367, %v1305
        %v1433 = vsel %vm1369, %v1368, %v1306
        %v1434 = vmul.f32 %v972, %v1303
        %v1435 = vmul.f32 %v972, %v1304
        %v1436 = vmul.f32 %v973, %v1301
        %v1437 = vmul.f32 %v973, %v1302
        %v1438 = vmul.f32 %v974, %v1299
        %v1439 = vmul.f32 %v974, %v1300
        %v1440 = vmul.f32 %v975, %v1297
        %v1441 = vmul.f32 %v975, %v1298
        %v1442 = vmul.f32 %v976, %v1295
        %v1443 = vmul.f32 %v976, %v1296
        %v1444 = vmul.f32 %v977, %v1293
        %v1445 = vmul.f32 %v977, %v1294
        %v1446 = vmul.f32 %v978, %v1291
        %v1447 = vmul.f32 %v978, %v1292
        %v1448 = vmul.f32 %v979, %v1289
        %v1449 = vmul.f32 %v979, %v1290
        %v1450 = vmul.f32 %v980, %v1287
        %v1451 = vmul.f32 %v980, %v1288
        %v1452 = vmul.f32 %v981, %v1285
        %v1453 = vmul.f32 %v981, %v1286
        %v1454 = vmul.f32 %v982, %v1283
        %v1455 = vmul.f32 %v982, %v1284
        %v1456 = vmul.f32 %v983, %v1281
        %v1457 = vmul.f32 %v983, %v1282
        %v1458 = vmul.f32 %v984, %v1279
        %v1459 = vmul.f32 %v984, %v1280
        %v1460 = vmul.f32 %v985, %v1277
        %v1461 = vmul.f32 %v985, %v1278
        %v1462 = vmul.f32 %v986, %v1275
        %v1463 = vmul.f32 %v986, %v1276
        %v1464 = vmul.f32 %v987, %v1273
        %v1465 = vmul.f32 %v987, %v1274
        %v1466 = vmul.f32 %v988, %v1271
        %v1467 = vmul.f32 %v988, %v1272
        %v1468 = vmul.f32 %v989, %v1269
        %v1469 = vmul.f32 %v989, %v1270
        %v1470 = vmul.f32 %v990, %v1267
        %v1471 = vmul.f32 %v990, %v1268
        %v1472 = vmul.f32 %v991, %v1265
        %v1473 = vmul.f32 %v991, %v1266
        %v1474 = vmul.f32 %v992, %v1263
        %v1475 = vmul.f32 %v992, %v1264
        %v1476 = vmul.f32 %v993, %v1261
        %v1477 = vmul.f32 %v993, %v1262
        %v1478 = vmul.f32 %v994, %v1259
        %v1479 = vmul.f32 %v994, %v1260
        %v1480 = vmul.f32 %v995, %v1257
        %v1481 = vmul.f32 %v995, %v1258
        %v1482 = vmul.f32 %v996, %v1255
        %v1483 = vmul.f32 %v996, %v1256
        %v1484 = vmul.f32 %v997, %v1253
        %v1485 = vmul.f32 %v997, %v1254
        %v1486 = vmul.f32 %v998, %v1251
        %v1487 = vmul.f32 %v998, %v1252
        %v1488 = vmul.f32 %v999, %v1249
        %v1489 = vmul.f32 %v999, %v1250
        %v1490 = vmul.f32 %v1000, %v1247
        %v1491 = vmul.f32 %v1000, %v1248
        %v1492 = vmul.f32 %v1001, %v1245
        %v1493 = vmul.f32 %v1001, %v1246
        %v1494 = vmul.f32 %v1002, %v1243
        %v1495 = vmul.f32 %v1002, %v1244
        %v1496 = vmul.f32 %v1003, %v1241
        %v1497 = vmul.f32 %v1003, %v1242
        %v1498 = vperm.slane %v1100, 0
        %v1499 = vperm.slane %v1101, 0
        %v1500 = vmul.f32 %v1434, %v1498
        %v1501 = vmul.f32 %v1435, %v1499
        %v1502 = vmul.f32 %v1436, %v1498
        %v1503 = vmul.f32 %v1437, %v1499
        %v1504 = vmul.f32 %v1438, %v1498
        %v1505 = vmul.f32 %v1439, %v1499
        %v1506 = vmul.f32 %v1440, %v1498
        %v1507 = vmul.f32 %v1441, %v1499
        %v1508 = vmul.f32 %v1442, %v1498
        %v1509 = vmul.f32 %v1443, %v1499
        %v1510 = vmul.f32 %v1444, %v1498
        %v1511 = vmul.f32 %v1445, %v1499
        %v1512 = vmul.f32 %v1446, %v1498
        %v1513 = vmul.f32 %v1447, %v1499
        %v1514 = vmul.f32 %v1448, %v1498
        %v1515 = vmul.f32 %v1449, %v1499
        %v1516 = vmul.f32 %v1450, %v1498
        %v1517 = vmul.f32 %v1451, %v1499
        %v1518 = vmul.f32 %v1452, %v1498
        %v1519 = vmul.f32 %v1453, %v1499
        %v1520 = vmul.f32 %v1454, %v1498
        %v1521 = vmul.f32 %v1455, %v1499
        %v1522 = vmul.f32 %v1456, %v1498
        %v1523 = vmul.f32 %v1457, %v1499
        %v1524 = vmul.f32 %v1458, %v1498
        %v1525 = vmul.f32 %v1459, %v1499
        %v1526 = vmul.f32 %v1460, %v1498
        %v1527 = vmul.f32 %v1461, %v1499
        %v1528 = vmul.f32 %v1462, %v1498
        %v1529 = vmul.f32 %v1463, %v1499
        %v1530 = vmul.f32 %v1464, %v1498
        %v1531 = vmul.f32 %v1465, %v1499
        %v1532 = vmul.f32 %v1466, %v1498
        %v1533 = vmul.f32 %v1467, %v1499
        %v1534 = vmul.f32 %v1468, %v1498
        %v1535 = vmul.f32 %v1469, %v1499
        %v1536 = vmul.f32 %v1470, %v1498
        %v1537 = vmul.f32 %v1471, %v1499
        %v1538 = vmul.f32 %v1472, %v1498
        %v1539 = vmul.f32 %v1473, %v1499
        %v1540 = vmul.f32 %v1474, %v1498
        %v1541 = vmul.f32 %v1475, %v1499
        %v1542 = vmul.f32 %v1476, %v1498
        %v1543 = vmul.f32 %v1477, %v1499
        %v1544 = vmul.f32 %v1478, %v1498
        %v1545 = vmul.f32 %v1479, %v1499
        %v1546 = vmul.f32 %v1480, %v1498
        %v1547 = vmul.f32 %v1481, %v1499
        %v1548 = vmul.f32 %v1482, %v1498
        %v1549 = vmul.f32 %v1483, %v1499
        %v1550 = vmul.f32 %v1484, %v1498
        %v1551 = vmul.f32 %v1485, %v1499
        %v1552 = vmul.f32 %v1486, %v1498
        %v1553 = vmul.f32 %v1487, %v1499
        %v1554 = vmul.f32 %v1488, %v1498
        %v1555 = vmul.f32 %v1489, %v1499
        %v1556 = vmul.f32 %v1490, %v1498
        %v1557 = vmul.f32 %v1491, %v1499
        %v1558 = vmul.f32 %v1492, %v1498
        %v1559 = vmul.f32 %v1493, %v1499
        %v1560 = vmul.f32 %v1494, %v1498
        %v1561 = vmul.f32 %v1495, %v1499
        %v1562 = vmul.f32 %v1496, %v1498
        %v1563 = vmul.f32 %v1497, %v1499
        %v1564 = vadd.f32 %v1110, %v1500
        %v1565 = vadd.f32 %v1111, %v1501
        %v1566 = vadd.f32 %v1110, %v1502
        %v1567 = vadd.f32 %v1111, %v1503
        %v1568 = vadd.f32 %v1110, %v1504
        %v1569 = vadd.f32 %v1111, %v1505
        %v1570 = vadd.f32 %v1110, %v1506
        %v1571 = vadd.f32 %v1111, %v1507
        %v1572 = vadd.f32 %v1110, %v1508
        %v1573 = vadd.f32 %v1111, %v1509
        %v1574 = vadd.f32 %v1110, %v1510
        %v1575 = vadd.f32 %v1111, %v1511
        %v1576 = vadd.f32 %v1110, %v1512
        %v1577 = vadd.f32 %v1111, %v1513
        %v1578 = vadd.f32 %v1110, %v1514
        %v1579 = vadd.f32 %v1111, %v1515
        %v1580 = vadd.f32 %v1110, %v1516
        %v1581 = vadd.f32 %v1111, %v1517
        %v1582 = vadd.f32 %v1110, %v1518
        %v1583 = vadd.f32 %v1111, %v1519
        %v1584 = vadd.f32 %v1110, %v1520
        %v1585 = vadd.f32 %v1111, %v1521
        %v1586 = vadd.f32 %v1110, %v1522
        %v1587 = vadd.f32 %v1111, %v1523
        %v1588 = vadd.f32 %v1110, %v1524
        %v1589 = vadd.f32 %v1111, %v1525
        %v1590 = vadd.f32 %v1110, %v1526
        %v1591 = vadd.f32 %v1111, %v1527
        %v1592 = vadd.f32 %v1110, %v1528
        %v1593 = vadd.f32 %v1111, %v1529
        %v1594 = vadd.f32 %v1110, %v1530
        %v1595 = vadd.f32 %v1111, %v1531
        %v1596 = vadd.f32 %v1110, %v1532
        %v1597 = vadd.f32 %v1111, %v1533
        %v1598 = vadd.f32 %v1110, %v1534
        %v1599 = vadd.f32 %v1111, %v1535
        %v1600 = vadd.f32 %v1110, %v1536
        %v1601 = vadd.f32 %v1111, %v1537
        %v1602 = vadd.f32 %v1110, %v1538
        %v1603 = vadd.f32 %v1111, %v1539
        %v1604 = vadd.f32 %v1110, %v1540
        %v1605 = vadd.f32 %v1111, %v1541
        %v1606 = vadd.f32 %v1110, %v1542
        %v1607 = vadd.f32 %v1111, %v1543
        %v1608 = vadd.f32 %v1110, %v1544
        %v1609 = vadd.f32 %v1111, %v1545
        %v1610 = vadd.f32 %v1110, %v1546
        %v1611 = vadd.f32 %v1111, %v1547
        %v1612 = vadd.f32 %v1110, %v1548
        %v1613 = vadd.f32 %v1111, %v1549
        %v1614 = vadd.f32 %v1110, %v1550
        %v1615 = vadd.f32 %v1111, %v1551
        %v1616 = vadd.f32 %v1110, %v1552
        %v1617 = vadd.f32 %v1111, %v1553
        %v1618 = vadd.f32 %v1110, %v1554
        %v1619 = vadd.f32 %v1111, %v1555
        %v1620 = vadd.f32 %v1110, %v1556
        %v1621 = vadd.f32 %v1111, %v1557
        %v1622 = vadd.f32 %v1110, %v1558
        %v1623 = vadd.f32 %v1111, %v1559
        %v1624 = vadd.f32 %v1110, %v1560
        %v1625 = vadd.f32 %v1111, %v1561
        %v1626 = vadd.f32 %v1110, %v1562
        %v1627 = vadd.f32 %v1111, %v1563
        %v1628 = vperm.slane %v1100, 1
        %v1629 = vperm.slane %v1101, 1
        %v1630 = vmul.f32 %v1112, %v1628
        %v1631 = vmul.f32 %v1113, %v1629
        %v1632 = vmul.f32 %v1114, %v1628
        %v1633 = vmul.f32 %v1115, %v1629
        %v1634 = vmul.f32 %v1116, %v1628
        %v1635 = vmul.f32 %v1117, %v1629
        %v1636 = vmul.f32 %v1118, %v1628
        %v1637 = vmul.f32 %v1119, %v1629
        %v1638 = vmul.f32 %v1120, %v1628
        %v1639 = vmul.f32 %v1121, %v1629
        %v1640 = vmul.f32 %v1122, %v1628
        %v1641 = vmul.f32 %v1123, %v1629
        %v1642 = vmul.f32 %v1124, %v1628
        %v1643 = vmul.f32 %v1125, %v1629
        %v1644 = vmul.f32 %v1126, %v1628
        %v1645 = vmul.f32 %v1127, %v1629
        %v1646 = vmul.f32 %v1128, %v1628
        %v1647 = vmul.f32 %v1129, %v1629
        %v1648 = vmul.f32 %v1130, %v1628
        %v1649 = vmul.f32 %v1131, %v1629
        %v1650 = vmul.f32 %v1132, %v1628
        %v1651 = vmul.f32 %v1133, %v1629
        %v1652 = vmul.f32 %v1134, %v1628
        %v1653 = vmul.f32 %v1135, %v1629
        %v1654 = vmul.f32 %v1136, %v1628
        %v1655 = vmul.f32 %v1137, %v1629
        %v1656 = vmul.f32 %v1138, %v1628
        %v1657 = vmul.f32 %v1139, %v1629
        %v1658 = vmul.f32 %v1140, %v1628
        %v1659 = vmul.f32 %v1141, %v1629
        %v1660 = vmul.f32 %v1142, %v1628
        %v1661 = vmul.f32 %v1143, %v1629
        %v1662 = vmul.f32 %v1144, %v1628
        %v1663 = vmul.f32 %v1145, %v1629
        %v1664 = vmul.f32 %v1146, %v1628
        %v1665 = vmul.f32 %v1147, %v1629
        %v1666 = vmul.f32 %v1148, %v1628
        %v1667 = vmul.f32 %v1149, %v1629
        %v1668 = vmul.f32 %v1150, %v1628
        %v1669 = vmul.f32 %v1151, %v1629
        %v1670 = vmul.f32 %v1152, %v1628
        %v1671 = vmul.f32 %v1153, %v1629
        %v1672 = vmul.f32 %v1154, %v1628
        %v1673 = vmul.f32 %v1155, %v1629
        %v1674 = vmul.f32 %v1156, %v1628
        %v1675 = vmul.f32 %v1157, %v1629
        %v1676 = vmul.f32 %v1158, %v1628
        %v1677 = vmul.f32 %v1159, %v1629
        %v1678 = vmul.f32 %v1160, %v1628
        %v1679 = vmul.f32 %v1161, %v1629
        %v1680 = vmul.f32 %v1162, %v1628
        %v1681 = vmul.f32 %v1163, %v1629
        %v1682 = vmul.f32 %v1164, %v1628
        %v1683 = vmul.f32 %v1165, %v1629
        %v1684 = vmul.f32 %v1166, %v1628
        %v1685 = vmul.f32 %v1167, %v1629
        %v1686 = vmul.f32 %v1168, %v1628
        %v1687 = vmul.f32 %v1169, %v1629
        %v1688 = vmul.f32 %v1170, %v1628
        %v1689 = vmul.f32 %v1171, %v1629
        %v1690 = vmul.f32 %v1172, %v1628
        %v1691 = vmul.f32 %v1173, %v1629
        %v1692 = vmul.f32 %v1174, %v1628
        %v1693 = vmul.f32 %v1175, %v1629
        %v1694 = vadd.f32 %v1564, %v1630
        %v1695 = vadd.f32 %v1565, %v1631
        %v1696 = vadd.f32 %v1566, %v1632
        %v1697 = vadd.f32 %v1567, %v1633
        %v1698 = vadd.f32 %v1568, %v1634
        %v1699 = vadd.f32 %v1569, %v1635
        %v1700 = vadd.f32 %v1570, %v1636
        %v1701 = vadd.f32 %v1571, %v1637
        %v1702 = vadd.f32 %v1572, %v1638
        %v1703 = vadd.f32 %v1573, %v1639
        %v1704 = vadd.f32 %v1574, %v1640
        %v1705 = vadd.f32 %v1575, %v1641
        %v1706 = vadd.f32 %v1576, %v1642
        %v1707 = vadd.f32 %v1577, %v1643
        %v1708 = vadd.f32 %v1578, %v1644
        %v1709 = vadd.f32 %v1579, %v1645
        %v1710 = vadd.f32 %v1580, %v1646
        %v1711 = vadd.f32 %v1581, %v1647
        %v1712 = vadd.f32 %v1582, %v1648
        %v1713 = vadd.f32 %v1583, %v1649
        %v1714 = vadd.f32 %v1584, %v1650
        %v1715 = vadd.f32 %v1585, %v1651
        %v1716 = vadd.f32 %v1586, %v1652
        %v1717 = vadd.f32 %v1587, %v1653
        %v1718 = vadd.f32 %v1588, %v1654
        %v1719 = vadd.f32 %v1589, %v1655
        %v1720 = vadd.f32 %v1590, %v1656
        %v1721 = vadd.f32 %v1591, %v1657
        %v1722 = vadd.f32 %v1592, %v1658
        %v1723 = vadd.f32 %v1593, %v1659
        %v1724 = vadd.f32 %v1594, %v1660
        %v1725 = vadd.f32 %v1595, %v1661
        %v1726 = vadd.f32 %v1596, %v1662
        %v1727 = vadd.f32 %v1597, %v1663
        %v1728 = vadd.f32 %v1598, %v1664
        %v1729 = vadd.f32 %v1599, %v1665
        %v1730 = vadd.f32 %v1600, %v1666
        %v1731 = vadd.f32 %v1601, %v1667
        %v1732 = vadd.f32 %v1602, %v1668
        %v1733 = vadd.f32 %v1603, %v1669
        %v1734 = vadd.f32 %v1604, %v1670
        %v1735 = vadd.f32 %v1605, %v1671
        %v1736 = vadd.f32 %v1606, %v1672
        %v1737 = vadd.f32 %v1607, %v1673
        %v1738 = vadd.f32 %v1608, %v1674
        %v1739 = vadd.f32 %v1609, %v1675
        %v1740 = vadd.f32 %v1610, %v1676
        %v1741 = vadd.f32 %v1611, %v1677
        %v1742 = vadd.f32 %v1612, %v1678
        %v1743 = vadd.f32 %v1613, %v1679
        %v1744 = vadd.f32 %v1614, %v1680
        %v1745 = vadd.f32 %v1615, %v1681
        %v1746 = vadd.f32 %v1616, %v1682
        %v1747 = vadd.f32 %v1617, %v1683
        %v1748 = vadd.f32 %v1618, %v1684
        %v1749 = vadd.f32 %v1619, %v1685
        %v1750 = vadd.f32 %v1620, %v1686
        %v1751 = vadd.f32 %v1621, %v1687
        %v1752 = vadd.f32 %v1622, %v1688
        %v1753 = vadd.f32 %v1623, %v1689
        %v1754 = vadd.f32 %v1624, %v1690
        %v1755 = vadd.f32 %v1625, %v1691
        %v1756 = vadd.f32 %v1626, %v1692
        %v1757 = vadd.f32 %v1627, %v1693
        %v1758 = vmul.f32 %v1068, %v1430
        %v1759 = vmul.f32 %v1068, %v1431
        %v1760 = vmul.f32 %v1069, %v1428
        %v1761 = vmul.f32 %v1069, %v1429
        %v1762 = vmul.f32 %v1070, %v1426
        %v1763 = vmul.f32 %v1070, %v1427
        %v1764 = vmul.f32 %v1071, %v1424
        %v1765 = vmul.f32 %v1071, %v1425
        %v1766 = vmul.f32 %v1072, %v1422
        %v1767 = vmul.f32 %v1072, %v1423
        %v1768 = vmul.f32 %v1073, %v1420
        %v1769 = vmul.f32 %v1073, %v1421
        %v1770 = vmul.f32 %v1074, %v1418
        %v1771 = vmul.f32 %v1074, %v1419
        %v1772 = vmul.f32 %v1075, %v1416
        %v1773 = vmul.f32 %v1075, %v1417
        %v1774 = vmul.f32 %v1076, %v1414
        %v1775 = vmul.f32 %v1076, %v1415
        %v1776 = vmul.f32 %v1077, %v1412
        %v1777 = vmul.f32 %v1077, %v1413
        %v1778 = vmul.f32 %v1078, %v1410
        %v1779 = vmul.f32 %v1078, %v1411
        %v1780 = vmul.f32 %v1079, %v1408
        %v1781 = vmul.f32 %v1079, %v1409
        %v1782 = vmul.f32 %v1080, %v1406
        %v1783 = vmul.f32 %v1080, %v1407
        %v1784 = vmul.f32 %v1081, %v1404
        %v1785 = vmul.f32 %v1081, %v1405
        %v1786 = vmul.f32 %v1082, %v1402
        %v1787 = vmul.f32 %v1082, %v1403
        %v1788 = vmul.f32 %v1083, %v1400
        %v1789 = vmul.f32 %v1083, %v1401
        %v1790 = vmul.f32 %v1084, %v1398
        %v1791 = vmul.f32 %v1084, %v1399
        %v1792 = vmul.f32 %v1085, %v1396
        %v1793 = vmul.f32 %v1085, %v1397
        %v1794 = vmul.f32 %v1086, %v1394
        %v1795 = vmul.f32 %v1086, %v1395
        %v1796 = vmul.f32 %v1087, %v1392
        %v1797 = vmul.f32 %v1087, %v1393
        %v1798 = vmul.f32 %v1088, %v1390
        %v1799 = vmul.f32 %v1088, %v1391
        %v1800 = vmul.f32 %v1089, %v1388
        %v1801 = vmul.f32 %v1089, %v1389
        %v1802 = vmul.f32 %v1090, %v1386
        %v1803 = vmul.f32 %v1090, %v1387
        %v1804 = vmul.f32 %v1091, %v1384
        %v1805 = vmul.f32 %v1091, %v1385
        %v1806 = vmul.f32 %v1092, %v1382
        %v1807 = vmul.f32 %v1092, %v1383
        %v1808 = vmul.f32 %v1093, %v1380
        %v1809 = vmul.f32 %v1093, %v1381
        %v1810 = vmul.f32 %v1094, %v1378
        %v1811 = vmul.f32 %v1094, %v1379
        %v1812 = vmul.f32 %v1095, %v1376
        %v1813 = vmul.f32 %v1095, %v1377
        %v1814 = vmul.f32 %v1096, %v1374
        %v1815 = vmul.f32 %v1096, %v1375
        %v1816 = vmul.f32 %v1097, %v1372
        %v1817 = vmul.f32 %v1097, %v1373
        %v1818 = vmul.f32 %v1098, %v1370
        %v1819 = vmul.f32 %v1098, %v1371
        %v1820 = vmul.f32 %v1099, %v1432
        %v1821 = vmul.f32 %v1099, %v1433
        %v1822 = vperm.slane %v1100, 2
        %v1823 = vperm.slane %v1101, 2
        %v1824 = vmul.f32 %v1758, %v1822
        %v1825 = vmul.f32 %v1759, %v1823
        %v1826 = vmul.f32 %v1760, %v1822
        %v1827 = vmul.f32 %v1761, %v1823
        %v1828 = vmul.f32 %v1762, %v1822
        %v1829 = vmul.f32 %v1763, %v1823
        %v1830 = vmul.f32 %v1764, %v1822
        %v1831 = vmul.f32 %v1765, %v1823
        %v1832 = vmul.f32 %v1766, %v1822
        %v1833 = vmul.f32 %v1767, %v1823
        %v1834 = vmul.f32 %v1768, %v1822
        %v1835 = vmul.f32 %v1769, %v1823
        %v1836 = vmul.f32 %v1770, %v1822
        %v1837 = vmul.f32 %v1771, %v1823
        %v1838 = vmul.f32 %v1772, %v1822
        %v1839 = vmul.f32 %v1773, %v1823
        %v1840 = vmul.f32 %v1774, %v1822
        %v1841 = vmul.f32 %v1775, %v1823
        %v1842 = vmul.f32 %v1776, %v1822
        %v1843 = vmul.f32 %v1777, %v1823
        %v1844 = vmul.f32 %v1778, %v1822
        %v1845 = vmul.f32 %v1779, %v1823
        %v1846 = vmul.f32 %v1780, %v1822
        %v1847 = vmul.f32 %v1781, %v1823
        %v1848 = vmul.f32 %v1782, %v1822
        %v1849 = vmul.f32 %v1783, %v1823
        %v1850 = vmul.f32 %v1784, %v1822
        %v1851 = vmul.f32 %v1785, %v1823
        %v1852 = vmul.f32 %v1786, %v1822
        %v1853 = vmul.f32 %v1787, %v1823
        %v1854 = vmul.f32 %v1788, %v1822
        %v1855 = vmul.f32 %v1789, %v1823
        %v1856 = vmul.f32 %v1790, %v1822
        %v1857 = vmul.f32 %v1791, %v1823
        %v1858 = vmul.f32 %v1792, %v1822
        %v1859 = vmul.f32 %v1793, %v1823
        %v1860 = vmul.f32 %v1794, %v1822
        %v1861 = vmul.f32 %v1795, %v1823
        %v1862 = vmul.f32 %v1796, %v1822
        %v1863 = vmul.f32 %v1797, %v1823
        %v1864 = vmul.f32 %v1798, %v1822
        %v1865 = vmul.f32 %v1799, %v1823
        %v1866 = vmul.f32 %v1800, %v1822
        %v1867 = vmul.f32 %v1801, %v1823
        %v1868 = vmul.f32 %v1802, %v1822
        %v1869 = vmul.f32 %v1803, %v1823
        %v1870 = vmul.f32 %v1804, %v1822
        %v1871 = vmul.f32 %v1805, %v1823
        %v1872 = vmul.f32 %v1806, %v1822
        %v1873 = vmul.f32 %v1807, %v1823
        %v1874 = vmul.f32 %v1808, %v1822
        %v1875 = vmul.f32 %v1809, %v1823
        %v1876 = vmul.f32 %v1810, %v1822
        %v1877 = vmul.f32 %v1811, %v1823
        %v1878 = vmul.f32 %v1812, %v1822
        %v1879 = vmul.f32 %v1813, %v1823
        %v1880 = vmul.f32 %v1814, %v1822
        %v1881 = vmul.f32 %v1815, %v1823
        %v1882 = vmul.f32 %v1816, %v1822
        %v1883 = vmul.f32 %v1817, %v1823
        %v1884 = vmul.f32 %v1818, %v1822
        %v1885 = vmul.f32 %v1819, %v1823
        %v1886 = vmul.f32 %v1820, %v1822
        %v1887 = vmul.f32 %v1821, %v1823
        %v1888 = vadd.f32 %v1694, %v1824
        %v1889 = vadd.f32 %v1695, %v1825
        %v1890 = vadd.f32 %v1696, %v1826
        %v1891 = vadd.f32 %v1697, %v1827
        %v1892 = vadd.f32 %v1698, %v1828
        %v1893 = vadd.f32 %v1699, %v1829
        %v1894 = vadd.f32 %v1700, %v1830
        %v1895 = vadd.f32 %v1701, %v1831
        %v1896 = vadd.f32 %v1702, %v1832
        %v1897 = vadd.f32 %v1703, %v1833
        %v1898 = vadd.f32 %v1704, %v1834
        %v1899 = vadd.f32 %v1705, %v1835
        %v1900 = vadd.f32 %v1706, %v1836
        %v1901 = vadd.f32 %v1707, %v1837
        %v1902 = vadd.f32 %v1708, %v1838
        %v1903 = vadd.f32 %v1709, %v1839
        %v1904 = vadd.f32 %v1710, %v1840
        %v1905 = vadd.f32 %v1711, %v1841
        %v1906 = vadd.f32 %v1712, %v1842
        %v1907 = vadd.f32 %v1713, %v1843
        %v1908 = vadd.f32 %v1714, %v1844
        %v1909 = vadd.f32 %v1715, %v1845
        %v1910 = vadd.f32 %v1716, %v1846
        %v1911 = vadd.f32 %v1717, %v1847
        %v1912 = vadd.f32 %v1718, %v1848
        %v1913 = vadd.f32 %v1719, %v1849
        %v1914 = vadd.f32 %v1720, %v1850
        %v1915 = vadd.f32 %v1721, %v1851
        %v1916 = vadd.f32 %v1722, %v1852
        %v1917 = vadd.f32 %v1723, %v1853
        %v1918 = vadd.f32 %v1724, %v1854
        %v1919 = vadd.f32 %v1725, %v1855
        %v1920 = vadd.f32 %v1726, %v1856
        %v1921 = vadd.f32 %v1727, %v1857
        %v1922 = vadd.f32 %v1728, %v1858
        %v1923 = vadd.f32 %v1729, %v1859
        %v1924 = vadd.f32 %v1730, %v1860
        %v1925 = vadd.f32 %v1731, %v1861
        %v1926 = vadd.f32 %v1732, %v1862
        %v1927 = vadd.f32 %v1733, %v1863
        %v1928 = vadd.f32 %v1734, %v1864
        %v1929 = vadd.f32 %v1735, %v1865
        %v1930 = vadd.f32 %v1736, %v1866
        %v1931 = vadd.f32 %v1737, %v1867
        %v1932 = vadd.f32 %v1738, %v1868
        %v1933 = vadd.f32 %v1739, %v1869
        %v1934 = vadd.f32 %v1740, %v1870
        %v1935 = vadd.f32 %v1741, %v1871
        %v1936 = vadd.f32 %v1742, %v1872
        %v1937 = vadd.f32 %v1743, %v1873
        %v1938 = vadd.f32 %v1744, %v1874
        %v1939 = vadd.f32 %v1745, %v1875
        %v1940 = vadd.f32 %v1746, %v1876
        %v1941 = vadd.f32 %v1747, %v1877
        %v1942 = vadd.f32 %v1748, %v1878
        %v1943 = vadd.f32 %v1749, %v1879
        %v1944 = vadd.f32 %v1750, %v1880
        %v1945 = vadd.f32 %v1751, %v1881
        %v1946 = vadd.f32 %v1752, %v1882
        %v1947 = vadd.f32 %v1753, %v1883
        %v1948 = vadd.f32 %v1754, %v1884
        %v1949 = vadd.f32 %v1755, %v1885
        %v1950 = vadd.f32 %v1756, %v1886
        %v1951 = vadd.f32 %v1757, %v1887
        %v1952 = vld [vmem:[#allocation2 + $0x200] sm:$0xff]
        %v1953 = vld [vmem:[#allocation2 + $0x208] sm:$0xff]
        %v1954 = vld [vmem:[#allocation2 + $0x210] sm:$0xff]
        %v1955 = vld [vmem:[#allocation2 + $0x218] sm:$0xff]
        %v1956 = vrot.slane %v1952, 7
        %v1957 = vrot.slane %v1953, 7
        %v1958 = vrot.slane %v1954, 7
        %v1959 = vrot.slane %v1955, 7
        %v1960 = vsel %vm1240, %v1956, %v1958
        %v1961 = vsel %vm1240, %v1957, %v1959
        %v1962 = vsel %vm1240, %v1238, %v1956
        %v1963 = vsel %vm1240, %v1239, %v1957
        %v1964 = vsel %vm1240, %v1958, %v1180
        %v1965 = vsel %vm1240, %v1959, %v1181
        %v1966 = vrot.slane %v1952, 1
        %v1967 = vrot.slane %v1953, 1
        %v1968 = vrot.slane %v1954, 1
        %v1969 = vrot.slane %v1955, 1
        %v1970 = vsel %vm1369, %v1966, %v1968
        %v1971 = vsel %vm1369, %v1967, %v1969
        %v1972 = vsel %vm1369, %v1367, %v1966
        %v1973 = vsel %vm1369, %v1368, %v1967
        %v1974 = vsel %vm1369, %v1968, %v1309
        %v1975 = vsel %vm1369, %v1969, %v1310
        %v1976 = vmul.f32 %v972, %v1964
        %v1977 = vmul.f32 %v972, %v1965
        %v1978 = vmul.f32 %v973, %v1297
        %v1979 = vmul.f32 %v973, %v1298
        %v1980 = vmul.f32 %v974, %v1295
        %v1981 = vmul.f32 %v974, %v1296
        %v1982 = vmul.f32 %v975, %v1293
        %v1983 = vmul.f32 %v975, %v1294
        %v1984 = vmul.f32 %v976, %v1291
        %v1985 = vmul.f32 %v976, %v1292
        %v1986 = vmul.f32 %v977, %v1289
        %v1987 = vmul.f32 %v977, %v1290
        %v1988 = vmul.f32 %v978, %v1287
        %v1989 = vmul.f32 %v978, %v1288
        %v1990 = vmul.f32 %v979, %v1285
        %v1991 = vmul.f32 %v979, %v1286
        %v1992 = vmul.f32 %v980, %v1283
        %v1993 = vmul.f32 %v980, %v1284
        %v1994 = vmul.f32 %v981, %v1281
        %v1995 = vmul.f32 %v981, %v1282
        %v1996 = vmul.f32 %v982, %v1279
        %v1997 = vmul.f32 %v982, %v1280
        %v1998 = vmul.f32 %v983, %v1277
        %v1999 = vmul.f32 %v983, %v1278
        %v2000 = vmul.f32 %v984, %v1275
        %v2001 = vmul.f32 %v984, %v1276
        %v2002 = vmul.f32 %v985, %v1273
        %v2003 = vmul.f32 %v985, %v1274
        %v2004 = vmul.f32 %v986, %v1271
        %v2005 = vmul.f32 %v986, %v1272
        %v2006 = vmul.f32 %v987, %v1269
        %v2007 = vmul.f32 %v987, %v1270
        %v2008 = vmul.f32 %v988, %v1267
        %v2009 = vmul.f32 %v988, %v1268
        %v2010 = vmul.f32 %v989, %v1265
        %v2011 = vmul.f32 %v989, %v1266
        %v2012 = vmul.f32 %v990, %v1263
        %v2013 = vmul.f32 %v990, %v1264
        %v2014 = vmul.f32 %v991, %v1261
        %v2015 = vmul.f32 %v991, %v1262
        %v2016 = vmul.f32 %v992, %v1259
        %v2017 = vmul.f32 %v992, %v1260
        %v2018 = vmul.f32 %v993, %v1257
        %v2019 = vmul.f32 %v993, %v1258
        %v2020 = vmul.f32 %v994, %v1255
        %v2021 = vmul.f32 %v994, %v1256
        %v2022 = vmul.f32 %v995, %v1253
        %v2023 = vmul.f32 %v995, %v1254
        %v2024 = vmul.f32 %v996, %v1251
        %v2025 = vmul.f32 %v996, %v1252
        %v2026 = vmul.f32 %v997, %v1249
        %v2027 = vmul.f32 %v997, %v1250
        %v2028 = vmul.f32 %v998, %v1247
        %v2029 = vmul.f32 %v998, %v1248
        %v2030 = vmul.f32 %v999, %v1245
        %v2031 = vmul.f32 %v999, %v1246
        %v2032 = vmul.f32 %v1000, %v1243
        %v2033 = vmul.f32 %v1000, %v1244
        %v2034 = vmul.f32 %v1001, %v1241
        %v2035 = vmul.f32 %v1001, %v1242
        %v2036 = vmul.f32 %v1002, %v1962
        %v2037 = vmul.f32 %v1002, %v1963
        %v2038 = vmul.f32 %v1003, %v1960
        %v2039 = vmul.f32 %v1003, %v1961
        %v2040 = vperm.slane %v1100, 3
        %v2041 = vperm.slane %v1101, 3
        %v2042 = vmul.f32 %v1976, %v2040
        %v2043 = vmul.f32 %v1977, %v2041
        %v2044 = vmul.f32 %v1978, %v2040
        %v2045 = vmul.f32 %v1979, %v2041
        %v2046 = vmul.f32 %v1980, %v2040
        %v2047 = vmul.f32 %v1981, %v2041
        %v2048 = vmul.f32 %v1982, %v2040
        %v2049 = vmul.f32 %v1983, %v2041
        %v2050 = vmul.f32 %v1984, %v2040
        %v2051 = vmul.f32 %v1985, %v2041
        %v2052 = vmul.f32 %v1986, %v2040
        %v2053 = vmul.f32 %v1987, %v2041
        %v2054 = vmul.f32 %v1988, %v2040
        %v2055 = vmul.f32 %v1989, %v2041
        %v2056 = vmul.f32 %v1990, %v2040
        %v2057 = vmul.f32 %v1991, %v2041
        %v2058 = vmul.f32 %v1992, %v2040
        %v2059 = vmul.f32 %v1993, %v2041
        %v2060 = vmul.f32 %v1994, %v2040
        %v2061 = vmul.f32 %v1995, %v2041
        %v2062 = vmul.f32 %v1996, %v2040
        %v2063 = vmul.f32 %v1997, %v2041
        %v2064 = vmul.f32 %v1998, %v2040
        %v2065 = vmul.f32 %v1999, %v2041
        %v2066 = vmul.f32 %v2000, %v2040
        %v2067 = vmul.f32 %v2001, %v2041
        %v2068 = vmul.f32 %v2002, %v2040
        %v2069 = vmul.f32 %v2003, %v2041
        %v2070 = vmul.f32 %v2004, %v2040
        %v2071 = vmul.f32 %v2005, %v2041
        %v2072 = vmul.f32 %v2006, %v2040
        %v2073 = vmul.f32 %v2007, %v2041
        %v2074 = vmul.f32 %v2008, %v2040
        %v2075 = vmul.f32 %v2009, %v2041
        %v2076 = vmul.f32 %v2010, %v2040
        %v2077 = vmul.f32 %v2011, %v2041
        %v2078 = vmul.f32 %v2012, %v2040
        %v2079 = vmul.f32 %v2013, %v2041
        %v2080 = vmul.f32 %v2014, %v2040
        %v2081 = vmul.f32 %v2015, %v2041
        %v2082 = vmul.f32 %v2016, %v2040
        %v2083 = vmul.f32 %v2017, %v2041
        %v2084 = vmul.f32 %v2018, %v2040
        %v2085 = vmul.f32 %v2019, %v2041
        %v2086 = vmul.f32 %v2020, %v2040
        %v2087 = vmul.f32 %v2021, %v2041
        %v2088 = vmul.f32 %v2022, %v2040
        %v2089 = vmul.f32 %v2023, %v2041
        %v2090 = vmul.f32 %v2024, %v2040
        %v2091 = vmul.f32 %v2025, %v2041
        %v2092 = vmul.f32 %v2026, %v2040
        %v2093 = vmul.f32 %v2027, %v2041
        %v2094 = vmul.f32 %v2028, %v2040
        %v2095 = vmul.f32 %v2029, %v2041
        %v2096 = vmul.f32 %v2030, %v2040
        %v2097 = vmul.f32 %v2031, %v2041
        %v2098 = vmul.f32 %v2032, %v2040
        %v2099 = vmul.f32 %v2033, %v2041
        %v2100 = vmul.f32 %v2034, %v2040
        %v2101 = vmul.f32 %v2035, %v2041
        %v2102 = vmul.f32 %v2036, %v2040
        %v2103 = vmul.f32 %v2037, %v2041
        %v2104 = vmul.f32 %v2038, %v2040
        %v2105 = vmul.f32 %v2039, %v2041
        %v2106 = vadd.f32 %v1888, %v2042
        %v2107 = vadd.f32 %v1889, %v2043
        %v2108 = vadd.f32 %v1890, %v2044
        %v2109 = vadd.f32 %v1891, %v2045
        %v2110 = vadd.f32 %v1892, %v2046
        %v2111 = vadd.f32 %v1893, %v2047
        %v2112 = vadd.f32 %v1894, %v2048
        %v2113 = vadd.f32 %v1895, %v2049
        %v2114 = vadd.f32 %v1896, %v2050
        %v2115 = vadd.f32 %v1897, %v2051
        %v2116 = vadd.f32 %v1898, %v2052
        %v2117 = vadd.f32 %v1899, %v2053
        %v2118 = vadd.f32 %v1900, %v2054
        %v2119 = vadd.f32 %v1901, %v2055
        %v2120 = vadd.f32 %v1902, %v2056
        %v2121 = vadd.f32 %v1903, %v2057
        %v2122 = vadd.f32 %v1904, %v2058
        %v2123 = vadd.f32 %v1905, %v2059
        %v2124 = vadd.f32 %v1906, %v2060
        %v2125 = vadd.f32 %v1907, %v2061
        %v2126 = vadd.f32 %v1908, %v2062
        %v2127 = vadd.f32 %v1909, %v2063
        %v2128 = vadd.f32 %v1910, %v2064
        %v2129 = vadd.f32 %v1911, %v2065
        %v2130 = vadd.f32 %v1912, %v2066
        %v2131 = vadd.f32 %v1913, %v2067
        %v2132 = vadd.f32 %v1914, %v2068
        %v2133 = vadd.f32 %v1915, %v2069
        %v2134 = vadd.f32 %v1916, %v2070
        %v2135 = vadd.f32 %v1917, %v2071
        %v2136 = vadd.f32 %v1918, %v2072
        %v2137 = vadd.f32 %v1919, %v2073
        %v2138 = vadd.f32 %v1920, %v2074
        %v2139 = vadd.f32 %v1921, %v2075
        %v2140 = vadd.f32 %v1922, %v2076
        %v2141 = vadd.f32 %v1923, %v2077
        %v2142 = vadd.f32 %v1924, %v2078
        %v2143 = vadd.f32 %v1925, %v2079
        %v2144 = vadd.f32 %v1926, %v2080
        %v2145 = vadd.f32 %v1927, %v2081
        %v2146 = vadd.f32 %v1928, %v2082
        %v2147 = vadd.f32 %v1929, %v2083
        %v2148 = vadd.f32 %v1930, %v2084
        %v2149 = vadd.f32 %v1931, %v2085
        %v2150 = vadd.f32 %v1932, %v2086
        %v2151 = vadd.f32 %v1933, %v2087
        %v2152 = vadd.f32 %v1934, %v2088
        %v2153 = vadd.f32 %v1935, %v2089
        %v2154 = vadd.f32 %v1936, %v2090
        %v2155 = vadd.f32 %v1937, %v2091
        %v2156 = vadd.f32 %v1938, %v2092
        %v2157 = vadd.f32 %v1939, %v2093
        %v2158 = vadd.f32 %v1940, %v2094
        %v2159 = vadd.f32 %v1941, %v2095
        %v2160 = vadd.f32 %v1942, %v2096
        %v2161 = vadd.f32 %v1943, %v2097
        %v2162 = vadd.f32 %v1944, %v2098
        %v2163 = vadd.f32 %v1945, %v2099
        %v2164 = vadd.f32 %v1946, %v2100
        %v2165 = vadd.f32 %v1947, %v2101
        %v2166 = vadd.f32 %v1948, %v2102
        %v2167 = vadd.f32 %v1949, %v2103
        %v2168 = vadd.f32 %v1950, %v2104
        %v2169 = vadd.f32 %v1951, %v2105
        %v2170 = vperm.slane %v1100, 4
        %v2171 = vperm.slane %v1101, 4
        %v2172 = vmul.f32 %v1116, %v2170
        %v2173 = vmul.f32 %v1117, %v2171
        %v2174 = vmul.f32 %v1118, %v2170
        %v2175 = vmul.f32 %v1119, %v2171
        %v2176 = vmul.f32 %v1120, %v2170
        %v2177 = vmul.f32 %v1121, %v2171
        %v2178 = vmul.f32 %v1122, %v2170
        %v2179 = vmul.f32 %v1123, %v2171
        %v2180 = vmul.f32 %v1124, %v2170
        %v2181 = vmul.f32 %v1125, %v2171
        %v2182 = vmul.f32 %v1126, %v2170
        %v2183 = vmul.f32 %v1127, %v2171
        %v2184 = vmul.f32 %v1128, %v2170
        %v2185 = vmul.f32 %v1129, %v2171
        %v2186 = vmul.f32 %v1130, %v2170
        %v2187 = vmul.f32 %v1131, %v2171
        %v2188 = vmul.f32 %v1132, %v2170
        %v2189 = vmul.f32 %v1133, %v2171
        %v2190 = vmul.f32 %v1134, %v2170
        %v2191 = vmul.f32 %v1135, %v2171
        %v2192 = vmul.f32 %v1136, %v2170
        %v2193 = vmul.f32 %v1137, %v2171
        %v2194 = vmul.f32 %v1138, %v2170
        %v2195 = vmul.f32 %v1139, %v2171
        %v2196 = vmul.f32 %v1140, %v2170
        %v2197 = vmul.f32 %v1141, %v2171
        %v2198 = vmul.f32 %v1142, %v2170
        %v2199 = vmul.f32 %v1143, %v2171
        %v2200 = vmul.f32 %v1144, %v2170
        %v2201 = vmul.f32 %v1145, %v2171
        %v2202 = vmul.f32 %v1146, %v2170
        %v2203 = vmul.f32 %v1147, %v2171
        %v2204 = vmul.f32 %v1148, %v2170
        %v2205 = vmul.f32 %v1149, %v2171
        %v2206 = vmul.f32 %v1150, %v2170
        %v2207 = vmul.f32 %v1151, %v2171
        %v2208 = vmul.f32 %v1152, %v2170
        %v2209 = vmul.f32 %v1153, %v2171
        %v2210 = vmul.f32 %v1154, %v2170
        %v2211 = vmul.f32 %v1155, %v2171
        %v2212 = vmul.f32 %v1156, %v2170
        %v2213 = vmul.f32 %v1157, %v2171
        %v2214 = vmul.f32 %v1158, %v2170
        %v2215 = vmul.f32 %v1159, %v2171
        %v2216 = vmul.f32 %v1160, %v2170
        %v2217 = vmul.f32 %v1161, %v2171
        %v2218 = vmul.f32 %v1162, %v2170
        %v2219 = vmul.f32 %v1163, %v2171
        %v2220 = vmul.f32 %v1164, %v2170
        %v2221 = vmul.f32 %v1165, %v2171
        %v2222 = vmul.f32 %v1166, %v2170
        %v2223 = vmul.f32 %v1167, %v2171
        %v2224 = vmul.f32 %v1168, %v2170
        %v2225 = vmul.f32 %v1169, %v2171
        %v2226 = vmul.f32 %v1170, %v2170
        %v2227 = vmul.f32 %v1171, %v2171
        %v2228 = vmul.f32 %v1172, %v2170
        %v2229 = vmul.f32 %v1173, %v2171
        %v2230 = vmul.f32 %v1174, %v2170
        %v2231 = vmul.f32 %v1175, %v2171
        %v2232 = vmul.f32 %v1952, %v2170
        %v2233 = vmul.f32 %v1953, %v2171
        %v2234 = vmul.f32 %v1954, %v2170
        %v2235 = vmul.f32 %v1955, %v2171
        %v2236 = vadd.f32 %v2106, %v2172
        %v2237 = vadd.f32 %v2107, %v2173
        %v2238 = vadd.f32 %v2108, %v2174
        %v2239 = vadd.f32 %v2109, %v2175
        %v2240 = vadd.f32 %v2110, %v2176
        %v2241 = vadd.f32 %v2111, %v2177
        %v2242 = vadd.f32 %v2112, %v2178
        %v2243 = vadd.f32 %v2113, %v2179
        %v2244 = vadd.f32 %v2114, %v2180
        %v2245 = vadd.f32 %v2115, %v2181
        %v2246 = vadd.f32 %v2116, %v2182
        %v2247 = vadd.f32 %v2117, %v2183
        %v2248 = vadd.f32 %v2118, %v2184
        %v2249 = vadd.f32 %v2119, %v2185
        %v2250 = vadd.f32 %v2120, %v2186
        %v2251 = vadd.f32 %v2121, %v2187
        %v2252 = vadd.f32 %v2122, %v2188
        %v2253 = vadd.f32 %v2123, %v2189
        %v2254 = vadd.f32 %v2124, %v2190
        %v2255 = vadd.f32 %v2125, %v2191
        %v2256 = vadd.f32 %v2126, %v2192
        %v2257 = vadd.f32 %v2127, %v2193
        %v2258 = vadd.f32 %v2128, %v2194
        %v2259 = vadd.f32 %v2129, %v2195
        %v2260 = vadd.f32 %v2130, %v2196
        %v2261 = vadd.f32 %v2131, %v2197
        %v2262 = vadd.f32 %v2132, %v2198
        %v2263 = vadd.f32 %v2133, %v2199
        %v2264 = vadd.f32 %v2134, %v2200
        %v2265 = vadd.f32 %v2135, %v2201
        %v2266 = vadd.f32 %v2136, %v2202
        %v2267 = vadd.f32 %v2137, %v2203
        %v2268 = vadd.f32 %v2138, %v2204
        %v2269 = vadd.f32 %v2139, %v2205
        %v2270 = vadd.f32 %v2140, %v2206
        %v2271 = vadd.f32 %v2141, %v2207
        %v2272 = vadd.f32 %v2142, %v2208
        %v2273 = vadd.f32 %v2143, %v2209
        %v2274 = vadd.f32 %v2144, %v2210
        %v2275 = vadd.f32 %v2145, %v2211
        %v2276 = vadd.f32 %v2146, %v2212
        %v2277 = vadd.f32 %v2147, %v2213
        %v2278 = vadd.f32 %v2148, %v2214
        %v2279 = vadd.f32 %v2149, %v2215
        %v2280 = vadd.f32 %v2150, %v2216
        %v2281 = vadd.f32 %v2151, %v2217
        %v2282 = vadd.f32 %v2152, %v2218
        %v2283 = vadd.f32 %v2153, %v2219
        %v2284 = vadd.f32 %v2154, %v2220
        %v2285 = vadd.f32 %v2155, %v2221
        %v2286 = vadd.f32 %v2156, %v2222
        %v2287 = vadd.f32 %v2157, %v2223
        %v2288 = vadd.f32 %v2158, %v2224
        %v2289 = vadd.f32 %v2159, %v2225
        %v2290 = vadd.f32 %v2160, %v2226
        %v2291 = vadd.f32 %v2161, %v2227
        %v2292 = vadd.f32 %v2162, %v2228
        %v2293 = vadd.f32 %v2163, %v2229
        %v2294 = vadd.f32 %v2164, %v2230
        %v2295 = vadd.f32 %v2165, %v2231
        %v2296 = vadd.f32 %v2166, %v2232
        %v2297 = vadd.f32 %v2167, %v2233
        %v2298 = vadd.f32 %v2168, %v2234
        %v2299 = vadd.f32 %v2169, %v2235
        %v2300 = vmul.f32 %v1068, %v1426
        %v2301 = vmul.f32 %v1068, %v1427
        %v2302 = vmul.f32 %v1069, %v1424
        %v2303 = vmul.f32 %v1069, %v1425
        %v2304 = vmul.f32 %v1070, %v1422
        %v2305 = vmul.f32 %v1070, %v1423
        %v2306 = vmul.f32 %v1071, %v1420
        %v2307 = vmul.f32 %v1071, %v1421
        %v2308 = vmul.f32 %v1072, %v1418
        %v2309 = vmul.f32 %v1072, %v1419
        %v2310 = vmul.f32 %v1073, %v1416
        %v2311 = vmul.f32 %v1073, %v1417
        %v2312 = vmul.f32 %v1074, %v1414
        %v2313 = vmul.f32 %v1074, %v1415
        %v2314 = vmul.f32 %v1075, %v1412
        %v2315 = vmul.f32 %v1075, %v1413
        %v2316 = vmul.f32 %v1076, %v1410
        %v2317 = vmul.f32 %v1076, %v1411
        %v2318 = vmul.f32 %v1077, %v1408
        %v2319 = vmul.f32 %v1077, %v1409
        %v2320 = vmul.f32 %v1078, %v1406
        %v2321 = vmul.f32 %v1078, %v1407
        %v2322 = vmul.f32 %v1079, %v1404
        %v2323 = vmul.f32 %v1079, %v1405
        %v2324 = vmul.f32 %v1080, %v1402
        %v2325 = vmul.f32 %v1080, %v1403
        %v2326 = vmul.f32 %v1081, %v1400
        %v2327 = vmul.f32 %v1081, %v1401
        %v2328 = vmul.f32 %v1082, %v1398
        %v2329 = vmul.f32 %v1082, %v1399
        %v2330 = vmul.f32 %v1083, %v1396
        %v2331 = vmul.f32 %v1083, %v1397
        %v2332 = vmul.f32 %v1084, %v1394
        %v2333 = vmul.f32 %v1084, %v1395
        %v2334 = vmul.f32 %v1085, %v1392
        %v2335 = vmul.f32 %v1085, %v1393
        %v2336 = vmul.f32 %v1086, %v1390
        %v2337 = vmul.f32 %v1086, %v1391
        %v2338 = vmul.f32 %v1087, %v1388
        %v2339 = vmul.f32 %v1087, %v1389
        %v2340 = vmul.f32 %v1088, %v1386
        %v2341 = vmul.f32 %v1088, %v1387
        %v2342 = vmul.f32 %v1089, %v1384
        %v2343 = vmul.f32 %v1089, %v1385
        %v2344 = vmul.f32 %v1090, %v1382
        %v2345 = vmul.f32 %v1090, %v1383
        %v2346 = vmul.f32 %v1091, %v1380
        %v2347 = vmul.f32 %v1091, %v1381
        %v2348 = vmul.f32 %v1092, %v1378
        %v2349 = vmul.f32 %v1092, %v1379
        %v2350 = vmul.f32 %v1093, %v1376
        %v2351 = vmul.f32 %v1093, %v1377
        %v2352 = vmul.f32 %v1094, %v1374
        %v2353 = vmul.f32 %v1094, %v1375
        %v2354 = vmul.f32 %v1095, %v1372
        %v2355 = vmul.f32 %v1095, %v1373
        %v2356 = vmul.f32 %v1096, %v1370
        %v2357 = vmul.f32 %v1096, %v1371
        %v2358 = vmul.f32 %v1097, %v1972
        %v2359 = vmul.f32 %v1097, %v1973
        %v2360 = vmul.f32 %v1098, %v1970
        %v2361 = vmul.f32 %v1098, %v1971
        %v2362 = vmul.f32 %v1099, %v1974
        %v2363 = vmul.f32 %v1099, %v1975
        %v2364 = vperm.slane %v1100, 5
        %v2365 = vperm.slane %v1101, 5
        %v2366 = vmul.f32 %v2300, %v2364
        %v2367 = vmul.f32 %v2301, %v2365
        %v2368 = vmul.f32 %v2302, %v2364
        %v2369 = vmul.f32 %v2303, %v2365
        %v2370 = vmul.f32 %v2304, %v2364
        %v2371 = vmul.f32 %v2305, %v2365
        %v2372 = vmul.f32 %v2306, %v2364
        %v2373 = vmul.f32 %v2307, %v2365
        %v2374 = vmul.f32 %v2308, %v2364
        %v2375 = vmul.f32 %v2309, %v2365
        %v2376 = vmul.f32 %v2310, %v2364
        %v2377 = vmul.f32 %v2311, %v2365
        %v2378 = vmul.f32 %v2312, %v2364
        %v2379 = vmul.f32 %v2313, %v2365
        %v2380 = vmul.f32 %v2314, %v2364
        %v2381 = vmul.f32 %v2315, %v2365
        %v2382 = vmul.f32 %v2316, %v2364
        %v2383 = vmul.f32 %v2317, %v2365
        %v2384 = vmul.f32 %v2318, %v2364
        %v2385 = vmul.f32 %v2319, %v2365
        %v2386 = vmul.f32 %v2320, %v2364
        %v2387 = vmul.f32 %v2321, %v2365
        %v2388 = vmul.f32 %v2322, %v2364
        %v2389 = vmul.f32 %v2323, %v2365
        %v2390 = vmul.f32 %v2324, %v2364
        %v2391 = vmul.f32 %v2325, %v2365
        %v2392 = vmul.f32 %v2326, %v2364
        %v2393 = vmul.f32 %v2327, %v2365
        %v2394 = vmul.f32 %v2328, %v2364
        %v2395 = vmul.f32 %v2329, %v2365
        %v2396 = vmul.f32 %v2330, %v2364
        %v2397 = vmul.f32 %v2331, %v2365
        %v2398 = vmul.f32 %v2332, %v2364
        %v2399 = vmul.f32 %v2333, %v2365
        %v2400 = vmul.f32 %v2334, %v2364
        %v2401 = vmul.f32 %v2335, %v2365
        %v2402 = vmul.f32 %v2336, %v2364
        %v2403 = vmul.f32 %v2337, %v2365
        %v2404 = vmul.f32 %v2338, %v2364
        %v2405 = vmul.f32 %v2339, %v2365
        %v2406 = vmul.f32 %v2340, %v2364
        %v2407 = vmul.f32 %v2341, %v2365
        %v2408 = vmul.f32 %v2342, %v2364
        %v2409 = vmul.f32 %v2343, %v2365
        %v2410 = vmul.f32 %v2344, %v2364
        %v2411 = vmul.f32 %v2345, %v2365
        %v2412 = vmul.f32 %v2346, %v2364
        %v2413 = vmul.f32 %v2347, %v2365
        %v2414 = vmul.f32 %v2348, %v2364
        %v2415 = vmul.f32 %v2349, %v2365
        %v2416 = vmul.f32 %v2350, %v2364
        %v2417 = vmul.f32 %v2351, %v2365
        %v2418 = vmul.f32 %v2352, %v2364
        %v2419 = vmul.f32 %v2353, %v2365
        %v2420 = vmul.f32 %v2354, %v2364
        %v2421 = vmul.f32 %v2355, %v2365
        %v2422 = vmul.f32 %v2356, %v2364
        %v2423 = vmul.f32 %v2357, %v2365
        %v2424 = vmul.f32 %v2358, %v2364
        %v2425 = vmul.f32 %v2359, %v2365
        %v2426 = vmul.f32 %v2360, %v2364
        %v2427 = vmul.f32 %v2361, %v2365
        %v2428 = vmul.f32 %v2362, %v2364
        %v2429 = vmul.f32 %v2363, %v2365
        %v2430 = vadd.f32 %v2236, %v2366
        %v2431 = vadd.f32 %v2237, %v2367
        %v2432 = vadd.f32 %v2238, %v2368
        %v2433 = vadd.f32 %v2239, %v2369
        %v2434 = vadd.f32 %v2240, %v2370
        %v2435 = vadd.f32 %v2241, %v2371
        %v2436 = vadd.f32 %v2242, %v2372
        %v2437 = vadd.f32 %v2243, %v2373
        %v2438 = vadd.f32 %v2244, %v2374
        %v2439 = vadd.f32 %v2245, %v2375
        %v2440 = vadd.f32 %v2246, %v2376
        %v2441 = vadd.f32 %v2247, %v2377
        %v2442 = vadd.f32 %v2248, %v2378
        %v2443 = vadd.f32 %v2249, %v2379
        %v2444 = vadd.f32 %v2250, %v2380
        %v2445 = vadd.f32 %v2251, %v2381
        %v2446 = vadd.f32 %v2252, %v2382
        %v2447 = vadd.f32 %v2253, %v2383
        %v2448 = vadd.f32 %v2254, %v2384
        %v2449 = vadd.f32 %v2255, %v2385
        %v2450 = vadd.f32 %v2256, %v2386
        %v2451 = vadd.f32 %v2257, %v2387
        %v2452 = vadd.f32 %v2258, %v2388
        %v2453 = vadd.f32 %v2259, %v2389
        %v2454 = vadd.f32 %v2260, %v2390
        %v2455 = vadd.f32 %v2261, %v2391
        %v2456 = vadd.f32 %v2262, %v2392
        %v2457 = vadd.f32 %v2263, %v2393
        %v2458 = vadd.f32 %v2264, %v2394
        %v2459 = vadd.f32 %v2265, %v2395
        %v2460 = vadd.f32 %v2266, %v2396
        %v2461 = vadd.f32 %v2267, %v2397
        %v2462 = vadd.f32 %v2268, %v2398
        %v2463 = vadd.f32 %v2269, %v2399
        %v2464 = vadd.f32 %v2270, %v2400
        %v2465 = vadd.f32 %v2271, %v2401
        %v2466 = vadd.f32 %v2272, %v2402
        %v2467 = vadd.f32 %v2273, %v2403
        %v2468 = vadd.f32 %v2274, %v2404
        %v2469 = vadd.f32 %v2275, %v2405
        %v2470 = vadd.f32 %v2276, %v2406
        %v2471 = vadd.f32 %v2277, %v2407
        %v2472 = vadd.f32 %v2278, %v2408
        %v2473 = vadd.f32 %v2279, %v2409
        %v2474 = vadd.f32 %v2280, %v2410
        %v2475 = vadd.f32 %v2281, %v2411
        %v2476 = vadd.f32 %v2282, %v2412
        %v2477 = vadd.f32 %v2283, %v2413
        %v2478 = vadd.f32 %v2284, %v2414
        %v2479 = vadd.f32 %v2285, %v2415
        %v2480 = vadd.f32 %v2286, %v2416
        %v2481 = vadd.f32 %v2287, %v2417
        %v2482 = vadd.f32 %v2288, %v2418
        %v2483 = vadd.f32 %v2289, %v2419
        %v2484 = vadd.f32 %v2290, %v2420
        %v2485 = vadd.f32 %v2291, %v2421
        %v2486 = vadd.f32 %v2292, %v2422
        %v2487 = vadd.f32 %v2293, %v2423
        %v2488 = vadd.f32 %v2294, %v2424
        %v2489 = vadd.f32 %v2295, %v2425
        %v2490 = vadd.f32 %v2296, %v2426
        %v2491 = vadd.f32 %v2297, %v2427
        %v2492 = vadd.f32 %v2298, %v2428
        %v2493 = vadd.f32 %v2299, %v2429
        %v2494 = vld [vmem:[#allocation2 + $0x40] sm:$0xff]
        %v2495 = vld [vmem:[#allocation2 + $0x48] sm:$0xff]
        %v2496 = vld [vmem:[#allocation2 + $0x50] sm:$0xff]
        %v2497 = vld [vmem:[#allocation2 + $0x58] sm:$0xff]
        %v2498 = vld [vmem:[#allocation2 + $0x60] sm:$0xff]
        %v2499 = vld [vmem:[#allocation2 + $0x68] sm:$0xff]
        %v2500 = vld [vmem:[#allocation2 + $0x70] sm:$0xff]
        %v2501 = vld [vmem:[#allocation2 + $0x78] sm:$0xff]
        %v2502 = vld [vmem:[#allocation2 + $0x80] sm:$0xff]
        %v2503 = vld [vmem:[#allocation2 + $0x88] sm:$0xff]
        %v2504 = vld [vmem:[#allocation2 + $0x90] sm:$0xff]
        %v2505 = vld [vmem:[#allocation2 + $0x98] sm:$0xff]
        %v2506 = vld [vmem:[#allocation2 + $0xa0] sm:$0xff]
        %v2507 = vld [vmem:[#allocation2 + $0xa8] sm:$0xff]
        %v2508 = vld [vmem:[#allocation2 + $0xb0] sm:$0xff]
        %v2509 = vld [vmem:[#allocation2 + $0xb8] sm:$0xff]
        %v2510 = vld [vmem:[#allocation2 + $0xc0] sm:$0xff]
        %v2511 = vld [vmem:[#allocation2 + $0xc8] sm:$0xff]
        %v2512 = vld [vmem:[#allocation2 + $0xd0] sm:$0xff]
        %v2513 = vld [vmem:[#allocation2 + $0xd8] sm:$0xff]
        %v2514 = vld [vmem:[#allocation2 + $0xe0] sm:$0xff]
        %v2515 = vld [vmem:[#allocation2 + $0xe8] sm:$0xff]
        %v2516 = vld [vmem:[#allocation2 + $0xf0] sm:$0xff]
        %v2517 = vld [vmem:[#allocation2 + $0xf8] sm:$0xff]
        %v2518 = vld [vmem:[#allocation2 + $0x100] sm:$0xff]
        %v2519 = vld [vmem:[#allocation2 + $0x108] sm:$0xff]
        %v2520 = vld [vmem:[#allocation2 + $0x110] sm:$0xff]
        %v2521 = vld [vmem:[#allocation2 + $0x118] sm:$0xff]
        %v2522 = vld [vmem:[#allocation2 + $0x120] sm:$0xff]
        %v2523 = vld [vmem:[#allocation2 + $0x128] sm:$0xff]
        %v2524 = vld [vmem:[#allocation2 + $0x130] sm:$0xff]
        %v2525 = vld [vmem:[#allocation2 + $0x138] sm:$0xff]
        %v2526 = vld [vmem:[#allocation2 + $0x140] sm:$0xff]
        %v2527 = vld [vmem:[#allocation2 + $0x148] sm:$0xff]
        %v2528 = vld [vmem:[#allocation2 + $0x150] sm:$0xff]
        %v2529 = vld [vmem:[#allocation2 + $0x158] sm:$0xff]
        %v2530 = vld [vmem:[#allocation2 + $0x160] sm:$0xff]
        %v2531 = vld [vmem:[#allocation2 + $0x168] sm:$0xff]
        %v2532 = vld [vmem:[#allocation2 + $0x170] sm:$0xff]
        %v2533 = vld [vmem:[#allocation2 + $0x178] sm:$0xff]
        %v2534 = vld [vmem:[#allocation2 + $0x180] sm:$0xff]
        %v2535 = vld [vmem:[#allocation2 + $0x188] sm:$0xff]
        %v2536 = vld [vmem:[#allocation2 + $0x190] sm:$0xff]
        %v2537 = vld [vmem:[#allocation2 + $0x198] sm:$0xff]
        %v2538 = vld [vmem:[#allocation2 + $0x1a0] sm:$0xff]
        %v2539 = vld [vmem:[#allocation2 + $0x1a8] sm:$0xff]
        %v2540 = vld [vmem:[#allocation2 + $0x1b0] sm:$0xff]
        %v2541 = vld [vmem:[#allocation2 + $0x1b8] sm:$0xff]
        %v2542 = vld [vmem:[#allocation2 + $0x1c0] sm:$0xff]
        %v2543 = vld [vmem:[#allocation2 + $0x1c8] sm:$0xff]
        %v2544 = vld [vmem:[#allocation2 + $0x1d0] sm:$0xff]
        %v2545 = vld [vmem:[#allocation2 + $0x1d8] sm:$0xff]
        %v2546 = vld [vmem:[#allocation2 + $0x1e0] sm:$0xff]
        %v2547 = vld [vmem:[#allocation2 + $0x1e8] sm:$0xff]
        %v2548 = vld [vmem:[#allocation2 + $0x1f0] sm:$0xff]
        %v2549 = vld [vmem:[#allocation2 + $0x1f8] sm:$0xff]
        %v2550 = vld [vmem:[#allocation2 + $0x200] sm:$0xff]
        %v2551 = vld [vmem:[#allocation2 + $0x208] sm:$0xff]
        %v2552 = vld [vmem:[#allocation2 + $0x210] sm:$0xff]
        %v2553 = vld [vmem:[#allocation2 + $0x218] sm:$0xff]
        %v2554 = vld [vmem:[#allocation2 + $0x220] sm:$0xff]
        %v2555 = vld [vmem:[#allocation2 + $0x228] sm:$0xff]
        %v2556 = vld [vmem:[#allocation2 + $0x230] sm:$0xff]
        %v2557 = vld [vmem:[#allocation2 + $0x238] sm:$0xff]
        %v2558 = vrot.slane %v2494, 7
        %v2559 = vrot.slane %v2495, 7
        %v2560 = vrot.slane %v2496, 7
        %v2561 = vrot.slane %v2497, 7
        %v2562 = vrot.slane %v2498, 7
        %v2563 = vrot.slane %v2499, 7
        %v2564 = vrot.slane %v2500, 7
        %v2565 = vrot.slane %v2501, 7
        %v2566 = vrot.slane %v2502, 7
        %v2567 = vrot.slane %v2503, 7
        %v2568 = vrot.slane %v2504, 7
        %v2569 = vrot.slane %v2505, 7
        %v2570 = vrot.slane %v2506, 7
        %v2571 = vrot.slane %v2507, 7
        %v2572 = vrot.slane %v2508, 7
        %v2573 = vrot.slane %v2509, 7
        %v2574 = vrot.slane %v2510, 7
        %v2575 = vrot.slane %v2511, 7
        %v2576 = vrot.slane %v2512, 7
        %v2577 = vrot.slane %v2513, 7
        %v2578 = vrot.slane %v2514, 7
        %v2579 = vrot.slane %v2515, 7
        %v2580 = vrot.slane %v2516, 7
        %v2581 = vrot.slane %v2517, 7
        %v2582 = vrot.slane %v2518, 7
        %v2583 = vrot.slane %v2519, 7
        %v2584 = vrot.slane %v2520, 7
        %v2585 = vrot.slane %v2521, 7
        %v2586 = vrot.slane %v2522, 7
        %v2587 = vrot.slane %v2523, 7
        %v2588 = vrot.slane %v2524, 7
        %v2589 = vrot.slane %v2525, 7
        %v2590 = vrot.slane %v2526, 7
        %v2591 = vrot.slane %v2527, 7
        %v2592 = vrot.slane %v2528, 7
        %v2593 = vrot.slane %v2529, 7
        %v2594 = vrot.slane %v2530, 7
        %v2595 = vrot.slane %v2531, 7
        %v2596 = vrot.slane %v2532, 7
        %v2597 = vrot.slane %v2533, 7
        %v2598 = vrot.slane %v2534, 7
        %v2599 = vrot.slane %v2535, 7
        %v2600 = vrot.slane %v2536, 7
        %v2601 = vrot.slane %v2537, 7
        %v2602 = vrot.slane %v2538, 7
        %v2603 = vrot.slane %v2539, 7
        %v2604 = vrot.slane %v2540, 7
        %v2605 = vrot.slane %v2541, 7
        %v2606 = vrot.slane %v2542, 7
        %v2607 = vrot.slane %v2543, 7
        %v2608 = vrot.slane %v2544, 7
        %v2609 = vrot.slane %v2545, 7
        %v2610 = vrot.slane %v2546, 7
        %v2611 = vrot.slane %v2547, 7
        %v2612 = vrot.slane %v2548, 7
        %v2613 = vrot.slane %v2549, 7
        %v2614 = vrot.slane %v2550, 7
        %v2615 = vrot.slane %v2551, 7
        %v2616 = vrot.slane %v2552, 7
        %v2617 = vrot.slane %v2553, 7
        %v2618 = vrot.slane %v2554, 7
        %v2619 = vrot.slane %v2555, 7
        %v2620 = vrot.slane %v2556, 7
        %v2621 = vrot.slane %v2557, 7
        %v2622 = vsel %vm1240, %v2618, %v2620
        %v2623 = vsel %vm1240, %v2619, %v2621
        %v2624 = vsel %vm1240, %v2616, %v2618
        %v2625 = vsel %vm1240, %v2617, %v2619
        %v2626 = vsel %vm1240, %v2614, %v2616
        %v2627 = vsel %vm1240, %v2615, %v2617
        %v2628 = vsel %vm1240, %v2612, %v2614
        %v2629 = vsel %vm1240, %v2613, %v2615
        %v2630 = vsel %vm1240, %v2610, %v2612
        %v2631 = vsel %vm1240, %v2611, %v2613
        %v2632 = vsel %vm1240, %v2608, %v2610
        %v2633 = vsel %vm1240, %v2609, %v2611
        %v2634 = vsel %vm1240, %v2606, %v2608
        %v2635 = vsel %vm1240, %v2607, %v2609
        %v2636 = vsel %vm1240, %v2604, %v2606
        %v2637 = vsel %vm1240, %v2605, %v2607
        %v2638 = vsel %vm1240, %v2602, %v2604
        %v2639 = vsel %vm1240, %v2603, %v2605
        %v2640 = vsel %vm1240, %v2600, %v2602
        %v2641 = vsel %vm1240, %v2601, %v2603
        %v2642 = vsel %vm1240, %v2598, %v2600
        %v2643 = vsel %vm1240, %v2599, %v2601
        %v2644 = vsel %vm1240, %v2596, %v2598
        %v2645 = vsel %vm1240, %v2597, %v2599
        %v2646 = vsel %vm1240, %v2594, %v2596
        %v2647 = vsel %vm1240, %v2595, %v2597
        %v2648 = vsel %vm1240, %v2592, %v2594
        %v2649 = vsel %vm1240, %v2593, %v2595
        %v2650 = vsel %vm1240, %v2590, %v2592
        %v2651 = vsel %vm1240, %v2591, %v2593
        %v2652 = vsel %vm1240, %v2588, %v2590
        %v2653 = vsel %vm1240, %v2589, %v2591
        %v2654 = vsel %vm1240, %v2586, %v2588
        %v2655 = vsel %vm1240, %v2587, %v2589
        %v2656 = vsel %vm1240, %v2584, %v2586
        %v2657 = vsel %vm1240, %v2585, %v2587
        %v2658 = vsel %vm1240, %v2582, %v2584
        %v2659 = vsel %vm1240, %v2583, %v2585
        %v2660 = vsel %vm1240, %v2580, %v2582
        %v2661 = vsel %vm1240, %v2581, %v2583
        %v2662 = vsel %vm1240, %v2578, %v2580
        %v2663 = vsel %vm1240, %v2579, %v2581
        %v2664 = vsel %vm1240, %v2576, %v2578
        %v2665 = vsel %vm1240, %v2577, %v2579
        %v2666 = vsel %vm1240, %v2574, %v2576
        %v2667 = vsel %vm1240, %v2575, %v2577
        %v2668 = vsel %vm1240, %v2572, %v2574
        %v2669 = vsel %vm1240, %v2573, %v2575
        %v2670 = vsel %vm1240, %v2570, %v2572
        %v2671 = vsel %vm1240, %v2571, %v2573
        %v2672 = vsel %vm1240, %v2568, %v2570
        %v2673 = vsel %vm1240, %v2569, %v2571
        %v2674 = vsel %vm1240, %v2566, %v2568
        %v2675 = vsel %vm1240, %v2567, %v2569
        %v2676 = vsel %vm1240, %v2564, %v2566
        %v2677 = vsel %vm1240, %v2565, %v2567
        %v2678 = vsel %vm1240, %v2562, %v2564
        %v2679 = vsel %vm1240, %v2563, %v2565
        %v2680 = vsel %vm1240, %v2560, %v2562
        %v2681 = vsel %vm1240, %v2561, %v2563
        %v2682 = vsel %vm1240, %v2558, %v2560
        %v2683 = vsel %vm1240, %v2559, %v2561
        %v2684 = vsel %vm1240, %v2620, %v2558
        %v2685 = vsel %vm1240, %v2621, %v2559
        %v2686 = vrot.slane %v2494, 1
        %v2687 = vrot.slane %v2495, 1
        %v2688 = vrot.slane %v2496, 1
        %v2689 = vrot.slane %v2497, 1
        %v2690 = vrot.slane %v2498, 1
        %v2691 = vrot.slane %v2499, 1
        %v2692 = vrot.slane %v2500, 1
        %v2693 = vrot.slane %v2501, 1
        %v2694 = vrot.slane %v2502, 1
        %v2695 = vrot.slane %v2503, 1
        %v2696 = vrot.slane %v2504, 1
        %v2697 = vrot.slane %v2505, 1
        %v2698 = vrot.slane %v2506, 1
        %v2699 = vrot.slane %v2507, 1
        %v2700 = vrot.slane %v2508, 1
        %v2701 = vrot.slane %v2509, 1
        %v2702 = vrot.slane %v2510, 1
        %v2703 = vrot.slane %v2511, 1
        %v2704 = vrot.slane %v2512, 1
        %v2705 = vrot.slane %v2513, 1
        %v2706 = vrot.slane %v2514, 1
        %v2707 = vrot.slane %v2515, 1
        %v2708 = vrot.slane %v2516, 1
        %v2709 = vrot.slane %v2517, 1
        %v2710 = vrot.slane %v2518, 1
        %v2711 = vrot.slane %v2519, 1
        %v2712 = vrot.slane %v2520, 1
        %v2713 = vrot.slane %v2521, 1
        %v2714 = vrot.slane %v2522, 1
        %v2715 = vrot.slane %v2523, 1
        %v2716 = vrot.slane %v2524, 1
        %v2717 = vrot.slane %v2525, 1
        %v2718 = vrot.slane %v2526, 1
        %v2719 = vrot.slane %v2527, 1
        %v2720 = vrot.slane %v2528, 1
        %v2721 = vrot.slane %v2529, 1
        %v2722 = vrot.slane %v2530, 1
        %v2723 = vrot.slane %v2531, 1
        %v2724 = vrot.slane %v2532, 1
        %v2725 = vrot.slane %v2533, 1
        %v2726 = vrot.slane %v2534, 1
        %v2727 = vrot.slane %v2535, 1
        %v2728 = vrot.slane %v2536, 1
        %v2729 = vrot.slane %v2537, 1
        %v2730 = vrot.slane %v2538, 1
        %v2731 = vrot.slane %v2539, 1
        %v2732 = vrot.slane %v2540, 1
        %v2733 = vrot.slane %v2541, 1
        %v2734 = vrot.slane %v2542, 1
        %v2735 = vrot.slane %v2543, 1
        %v2736 = vrot.slane %v2544, 1
        %v2737 = vrot.slane %v2545, 1
        %v2738 = vrot.slane %v2546, 1
        %v2739 = vrot.slane %v2547, 1
        %v2740 = vrot.slane %v2548, 1
        %v2741 = vrot.slane %v2549, 1
        %v2742 = vrot.slane %v2550, 1
        %v2743 = vrot.slane %v2551, 1
        %v2744 = vrot.slane %v2552, 1
        %v2745 = vrot.slane %v2553, 1
        %v2746 = vrot.slane %v2554, 1
        %v2747 = vrot.slane %v2555, 1
        %v2748 = vrot.slane %v2556, 1
        %v2749 = vrot.slane %v2557, 1
        %v2750 = vsel %vm1369, %v2746, %v2748
        %v2751 = vsel %vm1369, %v2747, %v2749
        %v2752 = vsel %vm1369, %v2744, %v2746
        %v2753 = vsel %vm1369, %v2745, %v2747
        %v2754 = vsel %vm1369, %v2742, %v2744
        %v2755 = vsel %vm1369, %v2743, %v2745
        %v2756 = vsel %vm1369, %v2740, %v2742
        %v2757 = vsel %vm1369, %v2741, %v2743
        %v2758 = vsel %vm1369, %v2738, %v2740
        %v2759 = vsel %vm1369, %v2739, %v2741
        %v2760 = vsel %vm1369, %v2736, %v2738
        %v2761 = vsel %vm1369, %v2737, %v2739
        %v2762 = vsel %vm1369, %v2734, %v2736
        %v2763 = vsel %vm1369, %v2735, %v2737
        %v2764 = vsel %vm1369, %v2732, %v2734
        %v2765 = vsel %vm1369, %v2733, %v2735
        %v2766 = vsel %vm1369, %v2730, %v2732
        %v2767 = vsel %vm1369, %v2731, %v2733
        %v2768 = vsel %vm1369, %v2728, %v2730
        %v2769 = vsel %vm1369, %v2729, %v2731
        %v2770 = vsel %vm1369, %v2726, %v2728
        %v2771 = vsel %vm1369, %v2727, %v2729
        %v2772 = vsel %vm1369, %v2724, %v2726
        %v2773 = vsel %vm1369, %v2725, %v2727
        %v2774 = vsel %vm1369, %v2722, %v2724
        %v2775 = vsel %vm1369, %v2723, %v2725
        %v2776 = vsel %vm1369, %v2720, %v2722
        %v2777 = vsel %vm1369, %v2721, %v2723
        %v2778 = vsel %vm1369, %v2718, %v2720
        %v2779 = vsel %vm1369, %v2719, %v2721
        %v2780 = vsel %vm1369, %v2716, %v2718
        %v2781 = vsel %vm1369, %v2717, %v2719
        %v2782 = vsel %vm1369, %v2714, %v2716
        %v2783 = vsel %vm1369, %v2715, %v2717
        %v2784 = vsel %vm1369, %v2712, %v2714
        %v2785 = vsel %vm1369, %v2713, %v2715
        %v2786 = vsel %vm1369, %v2710, %v2712
        %v2787 = vsel %vm1369, %v2711, %v2713
        %v2788 = vsel %vm1369, %v2708, %v2710
        %v2789 = vsel %vm1369, %v2709, %v2711
        %v2790 = vsel %vm1369, %v2706, %v2708
        %v2791 = vsel %vm1369, %v2707, %v2709
        %v2792 = vsel %vm1369, %v2704, %v2706
        %v2793 = vsel %vm1369, %v2705, %v2707
        %v2794 = vsel %vm1369, %v2702, %v2704
        %v2795 = vsel %vm1369, %v2703, %v2705
        %v2796 = vsel %vm1369, %v2700, %v2702
        %v2797 = vsel %vm1369, %v2701, %v2703
        %v2798 = vsel %vm1369, %v2698, %v2700
        %v2799 = vsel %vm1369, %v2699, %v2701
        %v2800 = vsel %vm1369, %v2696, %v2698
        %v2801 = vsel %vm1369, %v2697, %v2699
        %v2802 = vsel %vm1369, %v2694, %v2696
        %v2803 = vsel %vm1369, %v2695, %v2697
        %v2804 = vsel %vm1369, %v2692, %v2694
        %v2805 = vsel %vm1369, %v2693, %v2695
        %v2806 = vsel %vm1369, %v2690, %v2692
        %v2807 = vsel %vm1369, %v2691, %v2693
        %v2808 = vsel %vm1369, %v2688, %v2690
        %v2809 = vsel %vm1369, %v2689, %v2691
        %v2810 = vsel %vm1369, %v2686, %v2688
        %v2811 = vsel %vm1369, %v2687, %v2689
        %v2812 = vsel %vm1369, %v2748, %v2686
        %v2813 = vsel %vm1369, %v2749, %v2687
        %v2814 = vmul.f32 %v972, %v2684
        %v2815 = vmul.f32 %v972, %v2685
        %v2816 = vmul.f32 %v973, %v2682
        %v2817 = vmul.f32 %v973, %v2683
        %v2818 = vmul.f32 %v974, %v2680
        %v2819 = vmul.f32 %v974, %v2681
        %v2820 = vmul.f32 %v975, %v2678
        %v2821 = vmul.f32 %v975, %v2679
        %v2822 = vmul.f32 %v976, %v2676
        %v2823 = vmul.f32 %v976, %v2677
        %v2824 = vmul.f32 %v977, %v2674
        %v2825 = vmul.f32 %v977, %v2675
        %v2826 = vmul.f32 %v978, %v2672
        %v2827 = vmul.f32 %v978, %v2673
        %v2828 = vmul.f32 %v979, %v2670
        %v2829 = vmul.f32 %v979, %v2671
        %v2830 = vmul.f32 %v980, %v2668
        %v2831 = vmul.f32 %v980, %v2669
        %v2832 = vmul.f32 %v981, %v2666
        %v2833 = vmul.f32 %v981, %v2667
        %v2834 = vmul.f32 %v982, %v2664
        %v2835 = vmul.f32 %v982, %v2665
        %v2836 = vmul.f32 %v983, %v2662
        %v2837 = vmul.f32 %v983, %v2663
        %v2838 = vmul.f32 %v984, %v2660
        %v2839 = vmul.f32 %v984, %v2661
        %v2840 = vmul.f32 %v985, %v2658
        %v2841 = vmul.f32 %v985, %v2659
        %v2842 = vmul.f32 %v986, %v2656
        %v2843 = vmul.f32 %v986, %v2657
        %v2844 = vmul.f32 %v987, %v2654
        %v2845 = vmul.f32 %v987, %v2655
        %v2846 = vmul.f32 %v988, %v2652
        %v2847 = vmul.f32 %v988, %v2653
        %v2848 = vmul.f32 %v989, %v2650
        %v2849 = vmul.f32 %v989, %v2651
        %v2850 = vmul.f32 %v990, %v2648
        %v2851 = vmul.f32 %v990, %v2649
        %v2852 = vmul.f32 %v991, %v2646
        %v2853 = vmul.f32 %v991, %v2647
        %v2854 = vmul.f32 %v992, %v2644
        %v2855 = vmul.f32 %v992, %v2645
        %v2856 = vmul.f32 %v993, %v2642
        %v2857 = vmul.f32 %v993, %v2643
        %v2858 = vmul.f32 %v994, %v2640
        %v2859 = vmul.f32 %v994, %v2641
        %v2860 = vmul.f32 %v995, %v2638
        %v2861 = vmul.f32 %v995, %v2639
        %v2862 = vmul.f32 %v996, %v2636
        %v2863 = vmul.f32 %v996, %v2637
        %v2864 = vmul.f32 %v997, %v2634
        %v2865 = vmul.f32 %v997, %v2635
        %v2866 = vmul.f32 %v998, %v2632
        %v2867 = vmul.f32 %v998, %v2633
        %v2868 = vmul.f32 %v999, %v2630
        %v2869 = vmul.f32 %v999, %v2631
        %v2870 = vmul.f32 %v1000, %v2628
        %v2871 = vmul.f32 %v1000, %v2629
        %v2872 = vmul.f32 %v1001, %v2626
        %v2873 = vmul.f32 %v1001, %v2627
        %v2874 = vmul.f32 %v1002, %v2624
        %v2875 = vmul.f32 %v1002, %v2625
        %v2876 = vmul.f32 %v1003, %v2622
        %v2877 = vmul.f32 %v1003, %v2623
        %v2878 = vperm.slane %v1100, 6
        %v2879 = vperm.slane %v1101, 6
        %v2880 = vmul.f32 %v2814, %v2878
        %v2881 = vmul.f32 %v2815, %v2879
        %v2882 = vmul.f32 %v2816, %v2878
        %v2883 = vmul.f32 %v2817, %v2879
        %v2884 = vmul.f32 %v2818, %v2878
        %v2885 = vmul.f32 %v2819, %v2879
        %v2886 = vmul.f32 %v2820, %v2878
        %v2887 = vmul.f32 %v2821, %v2879
        %v2888 = vmul.f32 %v2822, %v2878
        %v2889 = vmul.f32 %v2823, %v2879
        %v2890 = vmul.f32 %v2824, %v2878
        %v2891 = vmul.f32 %v2825, %v2879
        %v2892 = vmul.f32 %v2826, %v2878
        %v2893 = vmul.f32 %v2827, %v2879
        %v2894 = vmul.f32 %v2828, %v2878
        %v2895 = vmul.f32 %v2829, %v2879
        %v2896 = vmul.f32 %v2830, %v2878
        %v2897 = vmul.f32 %v2831, %v2879
        %v2898 = vmul.f32 %v2832, %v2878
        %v2899 = vmul.f32 %v2833, %v2879
        %v2900 = vmul.f32 %v2834, %v2878
        %v2901 = vmul.f32 %v2835, %v2879
        %v2902 = vmul.f32 %v2836, %v2878
        %v2903 = vmul.f32 %v2837, %v2879
        %v2904 = vmul.f32 %v2838, %v2878
        %v2905 = vmul.f32 %v2839, %v2879
        %v2906 = vmul.f32 %v2840, %v2878
        %v2907 = vmul.f32 %v2841, %v2879
        %v2908 = vmul.f32 %v2842, %v2878
        %v2909 = vmul.f32 %v2843, %v2879
        %v2910 = vmul.f32 %v2844, %v2878
        %v2911 = vmul.f32 %v2845, %v2879
        %v2912 = vmul.f32 %v2846, %v2878
        %v2913 = vmul.f32 %v2847, %v2879
        %v2914 = vmul.f32 %v2848, %v2878
        %v2915 = vmul.f32 %v2849, %v2879
        %v2916 = vmul.f32 %v2850, %v2878
        %v2917 = vmul.f32 %v2851, %v2879
        %v2918 = vmul.f32 %v2852, %v2878
        %v2919 = vmul.f32 %v2853, %v2879
        %v2920 = vmul.f32 %v2854, %v2878
        %v2921 = vmul.f32 %v2855, %v2879
        %v2922 = vmul.f32 %v2856, %v2878
        %v2923 = vmul.f32 %v2857, %v2879
        %v2924 = vmul.f32 %v2858, %v2878
        %v2925 = vmul.f32 %v2859, %v2879
        %v2926 = vmul.f32 %v2860, %v2878
        %v2927 = vmul.f32 %v2861, %v2879
        %v2928 = vmul.f32 %v2862, %v2878
        %v2929 = vmul.f32 %v2863, %v2879
        %v2930 = vmul.f32 %v2864, %v2878
        %v2931 = vmul.f32 %v2865, %v2879
        %v2932 = vmul.f32 %v2866, %v2878
        %v2933 = vmul.f32 %v2867, %v2879
        %v2934 = vmul.f32 %v2868, %v2878
        %v2935 = vmul.f32 %v2869, %v2879
        %v2936 = vmul.f32 %v2870, %v2878
        %v2937 = vmul.f32 %v2871, %v2879
        %v2938 = vmul.f32 %v2872, %v2878
        %v2939 = vmul.f32 %v2873, %v2879
        %v2940 = vmul.f32 %v2874, %v2878
        %v2941 = vmul.f32 %v2875, %v2879
        %v2942 = vmul.f32 %v2876, %v2878
        %v2943 = vmul.f32 %v2877, %v2879
        %v2944 = vadd.f32 %v2430, %v2880
        %v2945 = vadd.f32 %v2431, %v2881
        %v2946 = vadd.f32 %v2432, %v2882
        %v2947 = vadd.f32 %v2433, %v2883
        %v2948 = vadd.f32 %v2434, %v2884
        %v2949 = vadd.f32 %v2435, %v2885
        %v2950 = vadd.f32 %v2436, %v2886
        %v2951 = vadd.f32 %v2437, %v2887
        %v2952 = vadd.f32 %v2438, %v2888
        %v2953 = vadd.f32 %v2439, %v2889
        %v2954 = vadd.f32 %v2440, %v2890
        %v2955 = vadd.f32 %v2441, %v2891
        %v2956 = vadd.f32 %v2442, %v2892
        %v2957 = vadd.f32 %v2443, %v2893
        %v2958 = vadd.f32 %v2444, %v2894
        %v2959 = vadd.f32 %v2445, %v2895
        %v2960 = vadd.f32 %v2446, %v2896
        %v2961 = vadd.f32 %v2447, %v2897
        %v2962 = vadd.f32 %v2448, %v2898
        %v2963 = vadd.f32 %v2449, %v2899
        %v2964 = vadd.f32 %v2450, %v2900
        %v2965 = vadd.f32 %v2451, %v2901
        %v2966 = vadd.f32 %v2452, %v2902
        %v2967 = vadd.f32 %v2453, %v2903
        %v2968 = vadd.f32 %v2454, %v2904
        %v2969 = vadd.f32 %v2455, %v2905
        %v2970 = vadd.f32 %v2456, %v2906
        %v2971 = vadd.f32 %v2457, %v2907
        %v2972 = vadd.f32 %v2458, %v2908
        %v2973 = vadd.f32 %v2459, %v2909
        %v2974 = vadd.f32 %v2460, %v2910
        %v2975 = vadd.f32 %v2461, %v2911
        %v2976 = vadd.f32 %v2462, %v2912
        %v2977 = vadd.f32 %v2463, %v2913
        %v2978 = vadd.f32 %v2464, %v2914
        %v2979 = vadd.f32 %v2465, %v2915
        %v2980 = vadd.f32 %v2466, %v2916
        %v2981 = vadd.f32 %v2467, %v2917
        %v2982 = vadd.f32 %v2468, %v2918
        %v2983 = vadd.f32 %v2469, %v2919
        %v2984 = vadd.f32 %v2470, %v2920
        %v2985 = vadd.f32 %v2471, %v2921
        %v2986 = vadd.f32 %v2472, %v2922
        %v2987 = vadd.f32 %v2473, %v2923
        %v2988 = vadd.f32 %v2474, %v2924
        %v2989 = vadd.f32 %v2475, %v2925
        %v2990 = vadd.f32 %v2476, %v2926
        %v2991 = vadd.f32 %v2477, %v2927
        %v2992 = vadd.f32 %v2478, %v2928
        %v2993 = vadd.f32 %v2479, %v2929
        %v2994 = vadd.f32 %v2480, %v2930
        %v2995 = vadd.f32 %v2481, %v2931
        %v2996 = vadd.f32 %v2482, %v2932
        %v2997 = vadd.f32 %v2483, %v2933
        %v2998 = vadd.f32 %v2484, %v2934
        %v2999 = vadd.f32 %v2485, %v2935
        %v3000 = vadd.f32 %v2486, %v2936
        %v3001 = vadd.f32 %v2487, %v2937
        %v3002 = vadd.f32 %v2488, %v2938
        %v3003 = vadd.f32 %v2489, %v2939
        %v3004 = vadd.f32 %v2490, %v2940
        %v3005 = vadd.f32 %v2491, %v2941
        %v3006 = vadd.f32 %v2492, %v2942
        %v3007 = vadd.f32 %v2493, %v2943
        %v3008 = vperm.slane %v1100, 7
        %v3009 = vperm.slane %v1101, 7
        %v3010 = vmul.f32 %v2494, %v3008
        %v3011 = vmul.f32 %v2495, %v3009
        %v3012 = vmul.f32 %v2496, %v3008
        %v3013 = vmul.f32 %v2497, %v3009
        %v3014 = vmul.f32 %v2498, %v3008
        %v3015 = vmul.f32 %v2499, %v3009
        %v3016 = vmul.f32 %v2500, %v3008
        %v3017 = vmul.f32 %v2501, %v3009
        %v3018 = vmul.f32 %v2502, %v3008
        %v3019 = vmul.f32 %v2503, %v3009
        %v3020 = vmul.f32 %v2504, %v3008
        %v3021 = vmul.f32 %v2505, %v3009
        %v3022 = vmul.f32 %v2506, %v3008
        %v3023 = vmul.f32 %v2507, %v3009
        %v3024 = vmul.f32 %v2508, %v3008
        %v3025 = vmul.f32 %v2509, %v3009
        %v3026 = vmul.f32 %v2510, %v3008
        %v3027 = vmul.f32 %v2511, %v3009
        %v3028 = vmul.f32 %v2512, %v3008
        %v3029 = vmul.f32 %v2513, %v3009
        %v3030 = vmul.f32 %v2514, %v3008
        %v3031 = vmul.f32 %v2515, %v3009
        %v3032 = vmul.f32 %v2516, %v3008
        %v3033 = vmul.f32 %v2517, %v3009
        %v3034 = vmul.f32 %v2518, %v3008
        %v3035 = vmul.f32 %v2519, %v3009
        %v3036 = vmul.f32 %v2520, %v3008
        %v3037 = vmul.f32 %v2521, %v3009
        %v3038 = vmul.f32 %v2522, %v3008
        %v3039 = vmul.f32 %v2523, %v3009
        %v3040 = vmul.f32 %v2524, %v3008
        %v3041 = vmul.f32 %v2525, %v3009
        %v3042 = vmul.f32 %v2526, %v3008
        %v3043 = vmul.f32 %v2527, %v3009
        %v3044 = vmul.f32 %v2528, %v3008
        %v3045 = vmul.f32 %v2529, %v3009
        %v3046 = vmul.f32 %v2530, %v3008
        %v3047 = vmul.f32 %v2531, %v3009
        %v3048 = vmul.f32 %v2532, %v3008
        %v3049 = vmul.f32 %v2533, %v3009
        %v3050 = vmul.f32 %v2534, %v3008
        %v3051 = vmul.f32 %v2535, %v3009
        %v3052 = vmul.f32 %v2536, %v3008
        %v3053 = vmul.f32 %v2537, %v3009
        %v3054 = vmul.f32 %v2538, %v3008
        %v3055 = vmul.f32 %v2539, %v3009
        %v3056 = vmul.f32 %v2540, %v3008
        %v3057 = vmul.f32 %v2541, %v3009
        %v3058 = vmul.f32 %v2542, %v3008
        %v3059 = vmul.f32 %v2543, %v3009
        %v3060 = vmul.f32 %v2544, %v3008
        %v3061 = vmul.f32 %v2545, %v3009
        %v3062 = vmul.f32 %v2546, %v3008
        %v3063 = vmul.f32 %v2547, %v3009
        %v3064 = vmul.f32 %v2548, %v3008
        %v3065 = vmul.f32 %v2549, %v3009
        %v3066 = vmul.f32 %v2550, %v3008
        %v3067 = vmul.f32 %v2551, %v3009
        %v3068 = vmul.f32 %v2552, %v3008
        %v3069 = vmul.f32 %v2553, %v3009
        %v3070 = vmul.f32 %v2554, %v3008
        %v3071 = vmul.f32 %v2555, %v3009
        %v3072 = vmul.f32 %v2556, %v3008
        %v3073 = vmul.f32 %v2557, %v3009
        %v3074 = vadd.f32 %v2944, %v3010
        %v3075 = vadd.f32 %v2945, %v3011
        %v3076 = vadd.f32 %v2946, %v3012
        %v3077 = vadd.f32 %v2947, %v3013
        %v3078 = vadd.f32 %v2948, %v3014
        %v3079 = vadd.f32 %v2949, %v3015
        %v3080 = vadd.f32 %v2950, %v3016
        %v3081 = vadd.f32 %v2951, %v3017
        %v3082 = vadd.f32 %v2952, %v3018
        %v3083 = vadd.f32 %v2953, %v3019
        %v3084 = vadd.f32 %v2954, %v3020
        %v3085 = vadd.f32 %v2955, %v3021
        %v3086 = vadd.f32 %v2956, %v3022
        %v3087 = vadd.f32 %v2957, %v3023
        %v3088 = vadd.f32 %v2958, %v3024
        %v3089 = vadd.f32 %v2959, %v3025
        %v3090 = vadd.f32 %v2960, %v3026
        %v3091 = vadd.f32 %v2961, %v3027
        %v3092 = vadd.f32 %v2962, %v3028
        %v3093 = vadd.f32 %v2963, %v3029
        %v3094 = vadd.f32 %v2964, %v3030
        %v3095 = vadd.f32 %v2965, %v3031
        %v3096 = vadd.f32 %v2966, %v3032
        %v3097 = vadd.f32 %v2967, %v3033
        %v3098 = vadd.f32 %v2968, %v3034
        %v3099 = vadd.f32 %v2969, %v3035
        %v3100 = vadd.f32 %v2970, %v3036
        %v3101 = vadd.f32 %v2971, %v3037
        %v3102 = vadd.f32 %v2972, %v3038
        %v3103 = vadd.f32 %v2973, %v3039
        %v3104 = vadd.f32 %v2974, %v3040
        %v3105 = vadd.f32 %v2975, %v3041
        %v3106 = vadd.f32 %v2976, %v3042
        %v3107 = vadd.f32 %v2977, %v3043
        %v3108 = vadd.f32 %v2978, %v3044
        %v3109 = vadd.f32 %v2979, %v3045
        %v3110 = vadd.f32 %v2980, %v3046
        %v3111 = vadd.f32 %v2981, %v3047
        %v3112 = vadd.f32 %v2982, %v3048
        %v3113 = vadd.f32 %v2983, %v3049
        %v3114 = vadd.f32 %v2984, %v3050
        %v3115 = vadd.f32 %v2985, %v3051
        %v3116 = vadd.f32 %v2986, %v3052
        %v3117 = vadd.f32 %v2987, %v3053
        %v3118 = vadd.f32 %v2988, %v3054
        %v3119 = vadd.f32 %v2989, %v3055
        %v3120 = vadd.f32 %v2990, %v3056
        %v3121 = vadd.f32 %v2991, %v3057
        %v3122 = vadd.f32 %v2992, %v3058
        %v3123 = vadd.f32 %v2993, %v3059
        %v3124 = vadd.f32 %v2994, %v3060
        %v3125 = vadd.f32 %v2995, %v3061
        %v3126 = vadd.f32 %v2996, %v3062
        %v3127 = vadd.f32 %v2997, %v3063
        %v3128 = vadd.f32 %v2998, %v3064
        %v3129 = vadd.f32 %v2999, %v3065
        %v3130 = vadd.f32 %v3000, %v3066
        %v3131 = vadd.f32 %v3001, %v3067
        %v3132 = vadd.f32 %v3002, %v3068
        %v3133 = vadd.f32 %v3003, %v3069
        %v3134 = vadd.f32 %v3004, %v3070
        %v3135 = vadd.f32 %v3005, %v3071
        %v3136 = vadd.f32 %v3006, %v3072
        %v3137 = vadd.f32 %v3007, %v3073
        %v3138 = vmul.f32 %v1068, %v2810
        %v3139 = vmul.f32 %v1068, %v2811
        %v3140 = vmul.f32 %v1069, %v2808
        %v3141 = vmul.f32 %v1069, %v2809
        %v3142 = vmul.f32 %v1070, %v2806
        %v3143 = vmul.f32 %v1070, %v2807
        %v3144 = vmul.f32 %v1071, %v2804
        %v3145 = vmul.f32 %v1071, %v2805
        %v3146 = vmul.f32 %v1072, %v2802
        %v3147 = vmul.f32 %v1072, %v2803
        %v3148 = vmul.f32 %v1073, %v2800
        %v3149 = vmul.f32 %v1073, %v2801
        %v3150 = vmul.f32 %v1074, %v2798
        %v3151 = vmul.f32 %v1074, %v2799
        %v3152 = vmul.f32 %v1075, %v2796
        %v3153 = vmul.f32 %v1075, %v2797
        %v3154 = vmul.f32 %v1076, %v2794
        %v3155 = vmul.f32 %v1076, %v2795
        %v3156 = vmul.f32 %v1077, %v2792
        %v3157 = vmul.f32 %v1077, %v2793
        %v3158 = vmul.f32 %v1078, %v2790
        %v3159 = vmul.f32 %v1078, %v2791
        %v3160 = vmul.f32 %v1079, %v2788
        %v3161 = vmul.f32 %v1079, %v2789
        %v3162 = vmul.f32 %v1080, %v2786
        %v3163 = vmul.f32 %v1080, %v2787
        %v3164 = vmul.f32 %v1081, %v2784
        %v3165 = vmul.f32 %v1081, %v2785
        %v3166 = vmul.f32 %v1082, %v2782
        %v3167 = vmul.f32 %v1082, %v2783
        %v3168 = vmul.f32 %v1083, %v2780
        %v3169 = vmul.f32 %v1083, %v2781
        %v3170 = vmul.f32 %v1084, %v2778
        %v3171 = vmul.f32 %v1084, %v2779
        %v3172 = vmul.f32 %v1085, %v2776
        %v3173 = vmul.f32 %v1085, %v2777
        %v3174 = vmul.f32 %v1086, %v2774
        %v3175 = vmul.f32 %v1086, %v2775
        %v3176 = vmul.f32 %v1087, %v2772
        %v3177 = vmul.f32 %v1087, %v2773
        %v3178 = vmul.f32 %v1088, %v2770
        %v3179 = vmul.f32 %v1088, %v2771
        %v3180 = vmul.f32 %v1089, %v2768
        %v3181 = vmul.f32 %v1089, %v2769
        %v3182 = vmul.f32 %v1090, %v2766
        %v3183 = vmul.f32 %v1090, %v2767
        %v3184 = vmul.f32 %v1091, %v2764
        %v3185 = vmul.f32 %v1091, %v2765
        %v3186 = vmul.f32 %v1092, %v2762
        %v3187 = vmul.f32 %v1092, %v2763
        %v3188 = vmul.f32 %v1093, %v2760
        %v3189 = vmul.f32 %v1093, %v2761
        %v3190 = vmul.f32 %v1094, %v2758
        %v3191 = vmul.f32 %v1094, %v2759
        %v3192 = vmul.f32 %v1095, %v2756
        %v3193 = vmul.f32 %v1095, %v2757
        %v3194 = vmul.f32 %v1096, %v2754
        %v3195 = vmul.f32 %v1096, %v2755
        %v3196 = vmul.f32 %v1097, %v2752
        %v3197 = vmul.f32 %v1097, %v2753
        %v3198 = vmul.f32 %v1098, %v2750
        %v3199 = vmul.f32 %v1098, %v2751
        %v3200 = vmul.f32 %v1099, %v2812
        %v3201 = vmul.f32 %v1099, %v2813
        %v3202 = vperm.slane %v1102, 0
        %v3203 = vperm.slane %v1103, 0
        %v3204 = vmul.f32 %v3138, %v3202
        %v3205 = vmul.f32 %v3139, %v3203
        %v3206 = vmul.f32 %v3140, %v3202
        %v3207 = vmul.f32 %v3141, %v3203
        %v3208 = vmul.f32 %v3142, %v3202
        %v3209 = vmul.f32 %v3143, %v3203
        %v3210 = vmul.f32 %v3144, %v3202
        %v3211 = vmul.f32 %v3145, %v3203
        %v3212 = vmul.f32 %v3146, %v3202
        %v3213 = vmul.f32 %v3147, %v3203
        %v3214 = vmul.f32 %v3148, %v3202
        %v3215 = vmul.f32 %v3149, %v3203
        %v3216 = vmul.f32 %v3150, %v3202
        %v3217 = vmul.f32 %v3151, %v3203
        %v3218 = vmul.f32 %v3152, %v3202
        %v3219 = vmul.f32 %v3153, %v3203
        %v3220 = vmul.f32 %v3154, %v3202
        %v3221 = vmul.f32 %v3155, %v3203
        %v3222 = vmul.f32 %v3156, %v3202
        %v3223 = vmul.f32 %v3157, %v3203
        %v3224 = vmul.f32 %v3158, %v3202
        %v3225 = vmul.f32 %v3159, %v3203
        %v3226 = vmul.f32 %v3160, %v3202
        %v3227 = vmul.f32 %v3161, %v3203
        %v3228 = vmul.f32 %v3162, %v3202
        %v3229 = vmul.f32 %v3163, %v3203
        %v3230 = vmul.f32 %v3164, %v3202
        %v3231 = vmul.f32 %v3165, %v3203
        %v3232 = vmul.f32 %v3166, %v3202
        %v3233 = vmul.f32 %v3167, %v3203
        %v3234 = vmul.f32 %v3168, %v3202
        %v3235 = vmul.f32 %v3169, %v3203
        %v3236 = vmul.f32 %v3170, %v3202
        %v3237 = vmul.f32 %v3171, %v3203
        %v3238 = vmul.f32 %v3172, %v3202
        %v3239 = vmul.f32 %v3173, %v3203
        %v3240 = vmul.f32 %v3174, %v3202
        %v3241 = vmul.f32 %v3175, %v3203
        %v3242 = vmul.f32 %v3176, %v3202
        %v3243 = vmul.f32 %v3177, %v3203
        %v3244 = vmul.f32 %v3178, %v3202
        %v3245 = vmul.f32 %v3179, %v3203
        %v3246 = vmul.f32 %v3180, %v3202
        %v3247 = vmul.f32 %v3181, %v3203
        %v3248 = vmul.f32 %v3182, %v3202
        %v3249 = vmul.f32 %v3183, %v3203
        %v3250 = vmul.f32 %v3184, %v3202
        %v3251 = vmul.f32 %v3185, %v3203
        %v3252 = vmul.f32 %v3186, %v3202
        %v3253 = vmul.f32 %v3187, %v3203
        %v3254 = vmul.f32 %v3188, %v3202
        %v3255 = vmul.f32 %v3189, %v3203
        %v3256 = vmul.f32 %v3190, %v3202
        %v3257 = vmul.f32 %v3191, %v3203
        %v3258 = vmul.f32 %v3192, %v3202
        %v3259 = vmul.f32 %v3193, %v3203
        %v3260 = vmul.f32 %v3194, %v3202
        %v3261 = vmul.f32 %v3195, %v3203
        %v3262 = vmul.f32 %v3196, %v3202
        %v3263 = vmul.f32 %v3197, %v3203
        %v3264 = vmul.f32 %v3198, %v3202
        %v3265 = vmul.f32 %v3199, %v3203
        %v3266 = vmul.f32 %v3200, %v3202
        %v3267 = vmul.f32 %v3201, %v3203
        %v3268 = vadd.f32 %v3074, %v3204
        %v3269 = vadd.f32 %v3075, %v3205
        %v3270 = vadd.f32 %v3076, %v3206
        %v3271 = vadd.f32 %v3077, %v3207
        %v3272 = vadd.f32 %v3078, %v3208
        %v3273 = vadd.f32 %v3079, %v3209
        %v3274 = vadd.f32 %v3080, %v3210
        %v3275 = vadd.f32 %v3081, %v3211
        %v3276 = vadd.f32 %v3082, %v3212
        %v3277 = vadd.f32 %v3083, %v3213
        %v3278 = vadd.f32 %v3084, %v3214
        %v3279 = vadd.f32 %v3085, %v3215
        %v3280 = vadd.f32 %v3086, %v3216
        %v3281 = vadd.f32 %v3087, %v3217
        %v3282 = vadd.f32 %v3088, %v3218
        %v3283 = vadd.f32 %v3089, %v3219
        %v3284 = vadd.f32 %v3090, %v3220
        %v3285 = vadd.f32 %v3091, %v3221
        %v3286 = vadd.f32 %v3092, %v3222
        %v3287 = vadd.f32 %v3093, %v3223
        %v3288 = vadd.f32 %v3094, %v3224
        %v3289 = vadd.f32 %v3095, %v3225
        %v3290 = vadd.f32 %v3096, %v3226
        %v3291 = vadd.f32 %v3097, %v3227
        %v3292 = vadd.f32 %v3098, %v3228
        %v3293 = vadd.f32 %v3099, %v3229
        %v3294 = vadd.f32 %v3100, %v3230
        %v3295 = vadd.f32 %v3101, %v3231
        %v3296 = vadd.f32 %v3102, %v3232
        %v3297 = vadd.f32 %v3103, %v3233
        %v3298 = vadd.f32 %v3104, %v3234
        %v3299 = vadd.f32 %v3105, %v3235
        %v3300 = vadd.f32 %v3106, %v3236
        %v3301 = vadd.f32 %v3107, %v3237
        %v3302 = vadd.f32 %v3108, %v3238
        %v3303 = vadd.f32 %v3109, %v3239
        %v3304 = vadd.f32 %v3110, %v3240
        %v3305 = vadd.f32 %v3111, %v3241
        %v3306 = vadd.f32 %v3112, %v3242
        %v3307 = vadd.f32 %v3113, %v3243
        %v3308 = vadd.f32 %v3114, %v3244
        %v3309 = vadd.f32 %v3115, %v3245
        %v3310 = vadd.f32 %v3116, %v3246
        %v3311 = vadd.f32 %v3117, %v3247
        %v3312 = vadd.f32 %v3118, %v3248
        %v3313 = vadd.f32 %v3119, %v3249
        %v3314 = vadd.f32 %v3120, %v3250
        %v3315 = vadd.f32 %v3121, %v3251
        %v3316 = vadd.f32 %v3122, %v3252
        %v3317 = vadd.f32 %v3123, %v3253
        %v3318 = vadd.f32 %v3124, %v3254
        %v3319 = vadd.f32 %v3125, %v3255
        %v3320 = vadd.f32 %v3126, %v3256
        %v3321 = vadd.f32 %v3127, %v3257
        %v3322 = vadd.f32 %v3128, %v3258
        %v3323 = vadd.f32 %v3129, %v3259
        %v3324 = vadd.f32 %v3130, %v3260
        %v3325 = vadd.f32 %v3131, %v3261
        %v3326 = vadd.f32 %v3132, %v3262
        %v3327 = vadd.f32 %v3133, %v3263
        %v3328 = vadd.f32 %v3134, %v3264
        %v3329 = vadd.f32 %v3135, %v3265
        %v3330 = vadd.f32 %v3136, %v3266
        %v3331 = vadd.f32 %v3137, %v3267
        %v3332 = vadd.f32 %v3268, %v1116
        %v3333 = vadd.f32 %v3269, %v1117
        %v3334 = vadd.f32 %v3270, %v1118
        %v3335 = vadd.f32 %v3271, %v1119
        %v3336 = vadd.f32 %v3272, %v1120
        %v3337 = vadd.f32 %v3273, %v1121
        %v3338 = vadd.f32 %v3274, %v1122
        %v3339 = vadd.f32 %v3275, %v1123
        %v3340 = vadd.f32 %v3276, %v1124
        %v3341 = vadd.f32 %v3277, %v1125
        %v3342 = vadd.f32 %v3278, %v1126
        %v3343 = vadd.f32 %v3279, %v1127
        %v3344 = vadd.f32 %v3280, %v1128
        %v3345 = vadd.f32 %v3281, %v1129
        %v3346 = vadd.f32 %v3282, %v1130
        %v3347 = vadd.f32 %v3283, %v1131
        %v3348 = vadd.f32 %v3284, %v1132
        %v3349 = vadd.f32 %v3285, %v1133
        %v3350 = vadd.f32 %v3286, %v1134
        %v3351 = vadd.f32 %v3287, %v1135
        %v3352 = vadd.f32 %v3288, %v1136
        %v3353 = vadd.f32 %v3289, %v1137
        %v3354 = vadd.f32 %v3290, %v1138
        %v3355 = vadd.f32 %v3291, %v1139
        %v3356 = vadd.f32 %v3292, %v1140
        %v3357 = vadd.f32 %v3293, %v1141
        %v3358 = vadd.f32 %v3294, %v1142
        %v3359 = vadd.f32 %v3295, %v1143
        %v3360 = vadd.f32 %v3296, %v1144
        %v3361 = vadd.f32 %v3297, %v1145
        %v3362 = vadd.f32 %v3298, %v1146
        %v3363 = vadd.f32 %v3299, %v1147
        %v3364 = vadd.f32 %v3300, %v1148
        %v3365 = vadd.f32 %v3301, %v1149
        %v3366 = vadd.f32 %v3302, %v1150
        %v3367 = vadd.f32 %v3303, %v1151
        %v3368 = vadd.f32 %v3304, %v1152
        %v3369 = vadd.f32 %v3305, %v1153
        %v3370 = vadd.f32 %v3306, %v1154
        %v3371 = vadd.f32 %v3307, %v1155
        %v3372 = vadd.f32 %v3308, %v1156
        %v3373 = vadd.f32 %v3309, %v1157
        %v3374 = vadd.f32 %v3310, %v1158
        %v3375 = vadd.f32 %v3311, %v1159
        %v3376 = vadd.f32 %v3312, %v1160
        %v3377 = vadd.f32 %v3313, %v1161
        %v3378 = vadd.f32 %v3314, %v1162
        %v3379 = vadd.f32 %v3315, %v1163
        %v3380 = vadd.f32 %v3316, %v1164
        %v3381 = vadd.f32 %v3317, %v1165
        %v3382 = vadd.f32 %v3318, %v1166
        %v3383 = vadd.f32 %v3319, %v1167
        %v3384 = vadd.f32 %v3320, %v1168
        %v3385 = vadd.f32 %v3321, %v1169
        %v3386 = vadd.f32 %v3322, %v1170
        %v3387 = vadd.f32 %v3323, %v1171
        %v3388 = vadd.f32 %v3324, %v1172
        %v3389 = vadd.f32 %v3325, %v1173
        %v3390 = vadd.f32 %v3326, %v1174
        %v3391 = vadd.f32 %v3327, %v1175
        %v3392 = vadd.f32 %v3328, %v1952
        %v3393 = vadd.f32 %v3329, %v1953
        %v3394 = vadd.f32 %v3330, %v1954
        %v3395 = vadd.f32 %v3331, %v1955
        %v3396 = vmul.f32 %v3332, 0.5
        %v3397 = vmul.f32 %v3333, 0.5
        %v3398 = vmul.f32 %v3334, 0.5
        %v3399 = vmul.f32 %v3335, 0.5
        %v3400 = vmul.f32 %v3336, 0.5
        %v3401 = vmul.f32 %v3337, 0.5
        %v3402 = vmul.f32 %v3338, 0.5
        %v3403 = vmul.f32 %v3339, 0.5
        %v3404 = vmul.f32 %v3340, 0.5
        %v3405 = vmul.f32 %v3341, 0.5
        %v3406 = vmul.f32 %v3342, 0.5
        %v3407 = vmul.f32 %v3343, 0.5
        %v3408 = vmul.f32 %v3344, 0.5
        %v3409 = vmul.f32 %v3345, 0.5
        %v3410 = vmul.f32 %v3346, 0.5
        %v3411 = vmul.f32 %v3347, 0.5
        %v3412 = vmul.f32 %v3348, 0.5
        %v3413 = vmul.f32 %v3349, 0.5
        %v3414 = vmul.f32 %v3350, 0.5
        %v3415 = vmul.f32 %v3351, 0.5
        %v3416 = vmul.f32 %v3352, 0.5
        %v3417 = vmul.f32 %v3353, 0.5
        %v3418 = vmul.f32 %v3354, 0.5
        %v3419 = vmul.f32 %v3355, 0.5
        %v3420 = vmul.f32 %v3356, 0.5
        %v3421 = vmul.f32 %v3357, 0.5
        %v3422 = vmul.f32 %v3358, 0.5
        %v3423 = vmul.f32 %v3359, 0.5
        %v3424 = vmul.f32 %v3360, 0.5
        %v3425 = vmul.f32 %v3361, 0.5
        %v3426 = vmul.f32 %v3362, 0.5
        %v3427 = vmul.f32 %v3363, 0.5
        %v3428 = vmul.f32 %v3364, 0.5
        %v3429 = vmul.f32 %v3365, 0.5
        %v3430 = vmul.f32 %v3366, 0.5
        %v3431 = vmul.f32 %v3367, 0.5
        %v3432 = vmul.f32 %v3368, 0.5
        %v3433 = vmul.f32 %v3369, 0.5
        %v3434 = vmul.f32 %v3370, 0.5
        %v3435 = vmul.f32 %v3371, 0.5
        %v3436 = vmul.f32 %v3372, 0.5
        %v3437 = vmul.f32 %v3373, 0.5
        %v3438 = vmul.f32 %v3374, 0.5
        %v3439 = vmul.f32 %v3375, 0.5
        %v3440 = vmul.f32 %v3376, 0.5
        %v3441 = vmul.f32 %v3377, 0.5
        %v3442 = vmul.f32 %v3378, 0.5
        %v3443 = vmul.f32 %v3379, 0.5
        %v3444 = vmul.f32 %v3380, 0.5
        %v3445 = vmul.f32 %v3381, 0.5
        %v3446 = vmul.f32 %v3382, 0.5
        %v3447 = vmul.f32 %v3383, 0.5
        %v3448 = vmul.f32 %v3384, 0.5
        %v3449 = vmul.f32 %v3385, 0.5
        %v3450 = vmul.f32 %v3386, 0.5
        %v3451 = vmul.f32 %v3387, 0.5
        %v3452 = vmul.f32 %v3388, 0.5
        %v3453 = vmul.f32 %v3389, 0.5
        %v3454 = vmul.f32 %v3390, 0.5
        %v3455 = vmul.f32 %v3391, 0.5
        %v3456 = vmul.f32 %v3392, 0.5
        %v3457 = vmul.f32 %v3393, 0.5
        %v3458 = vmul.f32 %v3394, 0.5
        %v3459 = vmul.f32 %v3395, 0.5
        %v3460 = vmul.f32 %v3332, 0.044715
        %v3461 = vmul.f32 %v3333, 0.044715
        %v3462 = vmul.f32 %v3334, 0.044715
        %v3463 = vmul.f32 %v3335, 0.044715
        %v3464 = vmul.f32 %v3336, 0.044715
        %v3465 = vmul.f32 %v3337, 0.044715
        %v3466 = vmul.f32 %v3338, 0.044715
        %v3467 = vmul.f32 %v3339, 0.044715
        %v3468 = vmul.f32 %v3340, 0.044715
        %v3469 = vmul.f32 %v3341, 0.044715
        %v3470 = vmul.f32 %v3342, 0.044715
        %v3471 = vmul.f32 %v3343, 0.044715
        %v3472 = vmul.f32 %v3344, 0.044715
        %v3473 = vmul.f32 %v3345, 0.044715
        %v3474 = vmul.f32 %v3346, 0.044715
        %v3475 = vmul.f32 %v3347, 0.044715
        %v3476 = vmul.f32 %v3348, 0.044715
        %v3477 = vmul.f32 %v3349, 0.044715
        %v3478 = vmul.f32 %v3350, 0.044715
        %v3479 = vmul.f32 %v3351, 0.044715
        %v3480 = vmul.f32 %v3352, 0.044715
        %v3481 = vmul.f32 %v3353, 0.044715
        %v3482 = vmul.f32 %v3354, 0.044715
        %v3483 = vmul.f32 %v3355, 0.044715
        %v3484 = vmul.f32 %v3356, 0.044715
        %v3485 = vmul.f32 %v3357, 0.044715
        %v3486 = vmul.f32 %v3358, 0.044715
        %v3487 = vmul.f32 %v3359, 0.044715
        %v3488 = vmul.f32 %v3360, 0.044715
        %v3489 = vmul.f32 %v3361, 0.044715
        %v3490 = vmul.f32 %v3362, 0.044715
        %v3491 = vmul.f32 %v3363, 0.044715
        %v3492 = vmul.f32 %v3364, 0.044715
        %v3493 = vmul.f32 %v3365, 0.044715
        %v3494 = vmul.f32 %v3366, 0.044715
        %v3495 = vmul.f32 %v3367, 0.044715
        %v3496 = vmul.f32 %v3368, 0.044715
        %v3497 = vmul.f32 %v3369, 0.044715
        %v3498 = vmul.f32 %v3370, 0.044715
        %v3499 = vmul.f32 %v3371, 0.044715
        %v3500 = vmul.f32 %v3372, 0.044715
        %v3501 = vmul.f32 %v3373, 0.044715
        %v3502 = vmul.f32 %v3374, 0.044715
        %v3503 = vmul.f32 %v3375, 0.044715
        %v3504 = vmul.f32 %v3376, 0.044715
        %v3505 = vmul.f32 %v3377, 0.044715
        %v3506 = vmul.f32 %v3378, 0.044715
        %v3507 = vmul.f32 %v3379, 0.044715
        %v3508 = vmul.f32 %v3380, 0.044715
        %v3509 = vmul.f32 %v3381, 0.044715
        %v3510 = vmul.f32 %v3382, 0.044715
        %v3511 = vmul.f32 %v3383, 0.044715
        %v3512 = vmul.f32 %v3384, 0.044715
        %v3513 = vmul.f32 %v3385, 0.044715
        %v3514 = vmul.f32 %v3386, 0.044715
        %v3515 = vmul.f32 %v3387, 0.044715
        %v3516 = vmul.f32 %v3388, 0.044715
        %v3517 = vmul.f32 %v3389, 0.044715
        %v3518 = vmul.f32 %v3390, 0.044715
        %v3519 = vmul.f32 %v3391, 0.044715
        %v3520 = vmul.f32 %v3392, 0.044715
        %v3521 = vmul.f32 %v3393, 0.044715
        %v3522 = vmul.f32 %v3394, 0.044715
        %v3523 = vmul.f32 %v3395, 0.044715
        %v3524 = vmul.f32 %v3460, %v3332
        %v3525 = vmul.f32 %v3461, %v3333
        %v3526 = vmul.f32 %v3462, %v3334
        %v3527 = vmul.f32 %v3463, %v3335
        %v3528 = vmul.f32 %v3464, %v3336
        %v3529 = vmul.f32 %v3465, %v3337
        %v3530 = vmul.f32 %v3466, %v3338
        %v3531 = vmul.f32 %v3467, %v3339
        %v3532 = vmul.f32 %v3468, %v3340
        %v3533 = vmul.f32 %v3469, %v3341
        %v3534 = vmul.f32 %v3470, %v3342
        %v3535 = vmul.f32 %v3471, %v3343
        %v3536 = vmul.f32 %v3472, %v3344
        %v3537 = vmul.f32 %v3473, %v3345
        %v3538 = vmul.f32 %v3474, %v3346
        %v3539 = vmul.f32 %v3475, %v3347
        %v3540 = vmul.f32 %v3476, %v3348
        %v3541 = vmul.f32 %v3477, %v3349
        %v3542 = vmul.f32 %v3478, %v3350
        %v3543 = vmul.f32 %v3479, %v3351
        %v3544 = vmul.f32 %v3480, %v3352
        %v3545 = vmul.f32 %v3481, %v3353
        %v3546 = vmul.f32 %v3482, %v3354
        %v3547 = vmul.f32 %v3483, %v3355
        %v3548 = vmul.f32 %v3484, %v3356
        %v3549 = vmul.f32 %v3485, %v3357
        %v3550 = vmul.f32 %v3486, %v3358
        %v3551 = vmul.f32 %v3487, %v3359
        %v3552 = vmul.f32 %v3488, %v3360
        %v3553 = vmul.f32 %v3489, %v3361
        %v3554 = vmul.f32 %v3490, %v3362
        %v3555 = vmul.f32 %v3491, %v3363
        %v3556 = vmul.f32 %v3492, %v3364
        %v3557 = vmul.f32 %v3493, %v3365
        %v3558 = vmul.f32 %v3494, %v3366
        %v3559 = vmul.f32 %v3495, %v3367
        %v3560 = vmul.f32 %v3496, %v3368
        %v3561 = vmul.f32 %v3497, %v3369
        %v3562 = vmul.f32 %v3498, %v3370
        %v3563 = vmul.f32 %v3499, %v3371
        %v3564 = vmul.f32 %v3500, %v3372
        %v3565 = vmul.f32 %v3501, %v3373
        %v3566 = vmul.f32 %v3502, %v3374
        %v3567 = vmul.f32 %v3503, %v3375
        %v3568 = vmul.f32 %v3504, %v3376
        %v3569 = vmul.f32 %v3505, %v3377
        %v3570 = vmul.f32 %v3506, %v3378
        %v3571 = vmul.f32 %v3507, %v3379
        %v3572 = vmul.f32 %v3508, %v3380
        %v3573 = vmul.f32 %v3509, %v3381
        %v3574 = vmul.f32 %v3510, %v3382
        %v3575 = vmul.f32 %v3511, %v3383
        %v3576 = vmul.f32 %v3512, %v3384
        %v3577 = vmul.f32 %v3513, %v3385
        %v3578 = vmul.f32 %v3514, %v3386
        %v3579 = vmul.f32 %v3515, %v3387
        %v3580 = vmul.f32 %v3516, %v3388
        %v3581 = vmul.f32 %v3517, %v3389
        %v3582 = vmul.f32 %v3518, %v3390
        %v3583 = vmul.f32 %v3519, %v3391
        %v3584 = vmul.f32 %v3520, %v3392
        %v3585 = vmul.f32 %v3521, %v3393
        %v3586 = vmul.f32 %v3522, %v3394
        %v3587 = vmul.f32 %v3523, %v3395
        %v3588 = vmul.f32 %v3524, %v3332
        %v3589 = vmul.f32 %v3525, %v3333
        %v3590 = vmul.f32 %v3526, %v3334
        %v3591 = vmul.f32 %v3527, %v3335
        %v3592 = vmul.f32 %v3528, %v3336
        %v3593 = vmul.f32 %v3529, %v3337
        %v3594 = vmul.f32 %v3530, %v3338
        %v3595 = vmul.f32 %v3531, %v3339
        %v3596 = vmul.f32 %v3532, %v3340
        %v3597 = vmul.f32 %v3533, %v3341
        %v3598 = vmul.f32 %v3534, %v3342
        %v3599 = vmul.f32 %v3535, %v3343
        %v3600 = vmul.f32 %v3536, %v3344
        %v3601 = vmul.f32 %v3537, %v3345
        %v3602 = vmul.f32 %v3538, %v3346
        %v3603 = vmul.f32 %v3539, %v3347
        %v3604 = vmul.f32 %v3540, %v3348
        %v3605 = vmul.f32 %v3541, %v3349
        %v3606 = vmul.f32 %v3542, %v3350
        %v3607 = vmul.f32 %v3543, %v3351
        %v3608 = vmul.f32 %v3544, %v3352
        %v3609 = vmul.f32 %v3545, %v3353
        %v3610 = vmul.f32 %v3546, %v3354
        %v3611 = vmul.f32 %v3547, %v3355
        %v3612 = vmul.f32 %v3548, %v3356
        %v3613 = vmul.f32 %v3549, %v3357
        %v3614 = vmul.f32 %v3550, %v3358
        %v3615 = vmul.f32 %v3551, %v3359
        %v3616 = vmul.f32 %v3552, %v3360
        %v3617 = vmul.f32 %v3553, %v3361
        %v3618 = vmul.f32 %v3554, %v3362
        %v3619 = vmul.f32 %v3555, %v3363
        %v3620 = vmul.f32 %v3556, %v3364
        %v3621 = vmul.f32 %v3557, %v3365
        %v3622 = vmul.f32 %v3558, %v3366
        %v3623 = vmul.f32 %v3559, %v3367
        %v3624 = vmul.f32 %v3560, %v3368
        %v3625 = vmul.f32 %v3561, %v3369
        %v3626 = vmul.f32 %v3562, %v3370
        %v3627 = vmul.f32 %v3563, %v3371
        %v3628 = vmul.f32 %v3564, %v3372
        %v3629 = vmul.f32 %v3565, %v3373
        %v3630 = vmul.f32 %v3566, %v3374
        %v3631 = vmul.f32 %v3567, %v3375
        %v3632 = vmul.f32 %v3568, %v3376
        %v3633 = vmul.f32 %v3569, %v3377
        %v3634 = vmul.f32 %v3570, %v3378
        %v3635 = vmul.f32 %v3571, %v3379
        %v3636 = vmul.f32 %v3572, %v3380
        %v3637 = vmul.f32 %v3573, %v3381
        %v3638 = vmul.f32 %v3574, %v3382
        %v3639 = vmul.f32 %v3575, %v3383
        %v3640 = vmul.f32 %v3576, %v3384
        %v3641 = vmul.f32 %v3577, %v3385
        %v3642 = vmul.f32 %v3578, %v3386
        %v3643 = vmul.f32 %v3579, %v3387
        %v3644 = vmul.f32 %v3580, %v3388
        %v3645 = vmul.f32 %v3581, %v3389
        %v3646 = vmul.f32 %v3582, %v3390
        %v3647 = vmul.f32 %v3583, %v3391
        %v3648 = vmul.f32 %v3584, %v3392
        %v3649 = vmul.f32 %v3585, %v3393
        %v3650 = vmul.f32 %v3586, %v3394
        %v3651 = vmul.f32 %v3587, %v3395
        %v3652 = vadd.f32 %v3332, %v3588
        %v3653 = vadd.f32 %v3333, %v3589
        %v3654 = vadd.f32 %v3334, %v3590
        %v3655 = vadd.f32 %v3335, %v3591
        %v3656 = vadd.f32 %v3336, %v3592
        %v3657 = vadd.f32 %v3337, %v3593
        %v3658 = vadd.f32 %v3338, %v3594
        %v3659 = vadd.f32 %v3339, %v3595
        %v3660 = vadd.f32 %v3340, %v3596
        %v3661 = vadd.f32 %v3341, %v3597
        %v3662 = vadd.f32 %v3342, %v3598
        %v3663 = vadd.f32 %v3343, %v3599
        %v3664 = vadd.f32 %v3344, %v3600
        %v3665 = vadd.f32 %v3345, %v3601
        %v3666 = vadd.f32 %v3346, %v3602
        %v3667 = vadd.f32 %v3347, %v3603
        %v3668 = vadd.f32 %v3348, %v3604
        %v3669 = vadd.f32 %v3349, %v3605
        %v3670 = vadd.f32 %v3350, %v3606
        %v3671 = vadd.f32 %v3351, %v3607
        %v3672 = vadd.f32 %v3352, %v3608
        %v3673 = vadd.f32 %v3353, %v3609
        %v3674 = vadd.f32 %v3354, %v3610
        %v3675 = vadd.f32 %v3355, %v3611
        %v3676 = vadd.f32 %v3356, %v3612
        %v3677 = vadd.f32 %v3357, %v3613
        %v3678 = vadd.f32 %v3358, %v3614
        %v3679 = vadd.f32 %v3359, %v3615
        %v3680 = vadd.f32 %v3360, %v3616
        %v3681 = vadd.f32 %v3361, %v3617
        %v3682 = vadd.f32 %v3362, %v3618
        %v3683 = vadd.f32 %v3363, %v3619
        %v3684 = vadd.f32 %v3364, %v3620
        %v3685 = vadd.f32 %v3365, %v3621
        %v3686 = vadd.f32 %v3366, %v3622
        %v3687 = vadd.f32 %v3367, %v3623
        %v3688 = vadd.f32 %v3368, %v3624
        %v3689 = vadd.f32 %v3369, %v3625
        %v3690 = vadd.f32 %v3370, %v3626
        %v3691 = vadd.f32 %v3371, %v3627
        %v3692 = vadd.f32 %v3372, %v3628
        %v3693 = vadd.f32 %v3373, %v3629
        %v3694 = vadd.f32 %v3374, %v3630
        %v3695 = vadd.f32 %v3375, %v3631
        %v3696 = vadd.f32 %v3376, %v3632
        %v3697 = vadd.f32 %v3377, %v3633
        %v3698 = vadd.f32 %v3378, %v3634
        %v3699 = vadd.f32 %v3379, %v3635
        %v3700 = vadd.f32 %v3380, %v3636
        %v3701 = vadd.f32 %v3381, %v3637
        %v3702 = vadd.f32 %v3382, %v3638
        %v3703 = vadd.f32 %v3383, %v3639
        %v3704 = vadd.f32 %v3384, %v3640
        %v3705 = vadd.f32 %v3385, %v3641
        %v3706 = vadd.f32 %v3386, %v3642
        %v3707 = vadd.f32 %v3387, %v3643
        %v3708 = vadd.f32 %v3388, %v3644
        %v3709 = vadd.f32 %v3389, %v3645
        %v3710 = vadd.f32 %v3390, %v3646
        %v3711 = vadd.f32 %v3391, %v3647
        %v3712 = vadd.f32 %v3392, %v3648
        %v3713 = vadd.f32 %v3393, %v3649
        %v3714 = vadd.f32 %v3394, %v3650
        %v3715 = vadd.f32 %v3395, %v3651
        %v3716 = vmul.f32 %v3652, 0.7978846
        %v3717 = vmul.f32 %v3653, 0.7978846
        %v3718 = vmul.f32 %v3654, 0.7978846
        %v3719 = vmul.f32 %v3655, 0.7978846
        %v3720 = vmul.f32 %v3656, 0.7978846
        %v3721 = vmul.f32 %v3657, 0.7978846
        %v3722 = vmul.f32 %v3658, 0.7978846
        %v3723 = vmul.f32 %v3659, 0.7978846
        %v3724 = vmul.f32 %v3660, 0.7978846
        %v3725 = vmul.f32 %v3661, 0.7978846
        %v3726 = vmul.f32 %v3662, 0.7978846
        %v3727 = vmul.f32 %v3663, 0.7978846
        %v3728 = vmul.f32 %v3664, 0.7978846
        %v3729 = vmul.f32 %v3665, 0.7978846
        %v3730 = vmul.f32 %v3666, 0.7978846
        %v3731 = vmul.f32 %v3667, 0.7978846
        %v3732 = vmul.f32 %v3668, 0.7978846
        %v3733 = vmul.f32 %v3669, 0.7978846
        %v3734 = vmul.f32 %v3670, 0.7978846
        %v3735 = vmul.f32 %v3671, 0.7978846
        %v3736 = vmul.f32 %v3672, 0.7978846
        %v3737 = vmul.f32 %v3673, 0.7978846
        %v3738 = vmul.f32 %v3674, 0.7978846
        %v3739 = vmul.f32 %v3675, 0.7978846
        %v3740 = vmul.f32 %v3676, 0.7978846
        %v3741 = vmul.f32 %v3677, 0.7978846
        %v3742 = vmul.f32 %v3678, 0.7978846
        %v3743 = vmul.f32 %v3679, 0.7978846
        %v3744 = vmul.f32 %v3680, 0.7978846
        %v3745 = vmul.f32 %v3681, 0.7978846
        %v3746 = vmul.f32 %v3682, 0.7978846
        %v3747 = vmul.f32 %v3683, 0.7978846
        %v3748 = vmul.f32 %v3684, 0.7978846
        %v3749 = vmul.f32 %v3685, 0.7978846
        %v3750 = vmul.f32 %v3686, 0.7978846
        %v3751 = vmul.f32 %v3687, 0.7978846
        %v3752 = vmul.f32 %v3688, 0.7978846
        %v3753 = vmul.f32 %v3689, 0.7978846
        %v3754 = vmul.f32 %v3690, 0.7978846
        %v3755 = vmul.f32 %v3691, 0.7978846
        %v3756 = vmul.f32 %v3692, 0.7978846
        %v3757 = vmul.f32 %v3693, 0.7978846
        %v3758 = vmul.f32 %v3694, 0.7978846
        %v3759 = vmul.f32 %v3695, 0.7978846
        %v3760 = vmul.f32 %v3696, 0.7978846
        %v3761 = vmul.f32 %v3697, 0.7978846
        %v3762 = vmul.f32 %v3698, 0.7978846
        %v3763 = vmul.f32 %v3699, 0.7978846
        %v3764 = vmul.f32 %v3700, 0.7978846
        %v3765 = vmul.f32 %v3701, 0.7978846
        %v3766 = vmul.f32 %v3702, 0.7978846
        %v3767 = vmul.f32 %v3703, 0.7978846
        %v3768 = vmul.f32 %v3704, 0.7978846
        %v3769 = vmul.f32 %v3705, 0.7978846
        %v3770 = vmul.f32 %v3706, 0.7978846
        %v3771 = vmul.f32 %v3707, 0.7978846
        %v3772 = vmul.f32 %v3708, 0.7978846
        %v3773 = vmul.f32 %v3709, 0.7978846
        %v3774 = vmul.f32 %v3710, 0.7978846
        %v3775 = vmul.f32 %v3711, 0.7978846
        %v3776 = vmul.f32 %v3712, 0.7978846
        %v3777 = vmul.f32 %v3713, 0.7978846
        %v3778 = vmul.f32 %v3714, 0.7978846
        %v3779 = vmul.f32 %v3715, 0.7978846
        %v3780 = vtanh.pop %v3716
        %v3781 = vtanh.pop %v3717
        %v3782 = vtanh.pop %v3718
        %v3783 = vtanh.pop %v3719
        %v3784 = vtanh.pop %v3720
        %v3785 = vtanh.pop %v3721
        %v3786 = vtanh.pop %v3722
        %v3787 = vtanh.pop %v3723
        %v3788 = vtanh.pop %v3724
        %v3789 = vtanh.pop %v3725
        %v3790 = vtanh.pop %v3726
        %v3791 = vtanh.pop %v3727
        %v3792 = vtanh.pop %v3728
        %v3793 = vtanh.pop %v3729
        %v3794 = vtanh.pop %v3730
        %v3795 = vtanh.pop %v3731
        %v3796 = vtanh.pop %v3732
        %v3797 = vtanh.pop %v3733
        %v3798 = vtanh.pop %v3734
        %v3799 = vtanh.pop %v3735
        %v3800 = vtanh.pop %v3736
        %v3801 = vtanh.pop %v3737
        %v3802 = vtanh.pop %v3738
        %v3803 = vtanh.pop %v3739
        %v3804 = vtanh.pop %v3740
        %v3805 = vtanh.pop %v3741
        %v3806 = vtanh.pop %v3742
        %v3807 = vtanh.pop %v3743
        %v3808 = vtanh.pop %v3744
        %v3809 = vtanh.pop %v3745
        %v3810 = vtanh.pop %v3746
        %v3811 = vtanh.pop %v3747
        %v3812 = vtanh.pop %v3748
        %v3813 = vtanh.pop %v3749
        %v3814 = vtanh.pop %v3750
        %v3815 = vtanh.pop %v3751
        %v3816 = vtanh.pop %v3752
        %v3817 = vtanh.pop %v3753
        %v3818 = vtanh.pop %v3754
        %v3819 = vtanh.pop %v3755
        %v3820 = vtanh.pop %v3756
        %v3821 = vtanh.pop %v3757
        %v3822 = vtanh.pop %v3758
        %v3823 = vtanh.pop %v3759
        %v3824 = vtanh.pop %v3760
        %v3825 = vtanh.pop %v3761
        %v3826 = vtanh.pop %v3762
        %v3827 = vtanh.pop %v3763
        %v3828 = vtanh.pop %v3764
        %v3829 = vtanh.pop %v3765
        %v3830 = vtanh.pop %v3766
        %v3831 = vtanh.pop %v3767
        %v3832 = vtanh.pop %v3768
        %v3833 = vtanh.pop %v3769
        %v3834 = vtanh.pop %v3770
        %v3835 = vtanh.pop %v3771
        %v3836 = vtanh.pop %v3772
        %v3837 = vtanh.pop %v3773
        %v3838 = vtanh.pop %v3774
        %v3839 = vtanh.pop %v3775
        %v3840 = vtanh.pop %v3776
        %v3841 = vtanh.pop %v3777
        %v3842 = vtanh.pop %v3778
        %v3843 = vtanh.pop %v3779
        %v3844 = vadd.f32 %v3780, 1.0
        %v3845 = vadd.f32 %v3781, 1.0
        %v3846 = vadd.f32 %v3782, 1.0
        %v3847 = vadd.f32 %v3783, 1.0
        %v3848 = vadd.f32 %v3784, 1.0
        %v3849 = vadd.f32 %v3785, 1.0
        %v3850 = vadd.f32 %v3786, 1.0
        %v3851 = vadd.f32 %v3787, 1.0
        %v3852 = vadd.f32 %v3788, 1.0
        %v3853 = vadd.f32 %v3789, 1.0
        %v3854 = vadd.f32 %v3790, 1.0
        %v3855 = vadd.f32 %v3791, 1.0
        %v3856 = vadd.f32 %v3792, 1.0
        %v3857 = vadd.f32 %v3793, 1.0
        %v3858 = vadd.f32 %v3794, 1.0
        %v3859 = vadd.f32 %v3795, 1.0
        %v3860 = vadd.f32 %v3796, 1.0
        %v3861 = vadd.f32 %v3797, 1.0
        %v3862 = vadd.f32 %v3798, 1.0
        %v3863 = vadd.f32 %v3799, 1.0
        %v3864 = vadd.f32 %v3800, 1.0
        %v3865 = vadd.f32 %v3801, 1.0
        %v3866 = vadd.f32 %v3802, 1.0
        %v3867 = vadd.f32 %v3803, 1.0
        %v3868 = vadd.f32 %v3804, 1.0
        %v3869 = vadd.f32 %v3805, 1.0
        %v3870 = vadd.f32 %v3806, 1.0
        %v3871 = vadd.f32 %v3807, 1.0
        %v3872 = vadd.f32 %v3808, 1.0
        %v3873 = vadd.f32 %v3809, 1.0
        %v3874 = vadd.f32 %v3810, 1.0
        %v3875 = vadd.f32 %v3811, 1.0
        %v3876 = vadd.f32 %v3812, 1.0
        %v3877 = vadd.f32 %v3813, 1.0
        %v3878 = vadd.f32 %v3814, 1.0
        %v3879 = vadd.f32 %v3815, 1.0
        %v3880 = vadd.f32 %v3816, 1.0
        %v3881 = vadd.f32 %v3817, 1.0
        %v3882 = vadd.f32 %v3818, 1.0
        %v3883 = vadd.f32 %v3819, 1.0
        %v3884 = vadd.f32 %v3820, 1.0
        %v3885 = vadd.f32 %v3821, 1.0
        %v3886 = vadd.f32 %v3822, 1.0
        %v3887 = vadd.f32 %v3823, 1.0
        %v3888 = vadd.f32 %v3824, 1.0
        %v3889 = vadd.f32 %v3825, 1.0
        %v3890 = vadd.f32 %v3826, 1.0
        %v3891 = vadd.f32 %v3827, 1.0
        %v3892 = vadd.f32 %v3828, 1.0
        %v3893 = vadd.f32 %v3829, 1.0
        %v3894 = vadd.f32 %v3830, 1.0
        %v3895 = vadd.f32 %v3831, 1.0
        %v3896 = vadd.f32 %v3832, 1.0
        %v3897 = vadd.f32 %v3833, 1.0
        %v3898 = vadd.f32 %v3834, 1.0
        %v3899 = vadd.f32 %v3835, 1.0
        %v3900 = vadd.f32 %v3836, 1.0
        %v3901 = vadd.f32 %v3837, 1.0
        %v3902 = vadd.f32 %v3838, 1.0
        %v3903 = vadd.f32 %v3839, 1.0
        %v3904 = vadd.f32 %v3840, 1.0
        %v3905 = vadd.f32 %v3841, 1.0
        %v3906 = vadd.f32 %v3842, 1.0
        %v3907 = vadd.f32 %v3843, 1.0
        %v3908 = vmul.f32 %v3396, %v3844
        %v3909 = vmul.f32 %v3397, %v3845
        %v3910 = vmul.f32 %v3398, %v3846
        %v3911 = vmul.f32 %v3399, %v3847
        %v3912 = vmul.f32 %v3400, %v3848
        %v3913 = vmul.f32 %v3401, %v3849
        %v3914 = vmul.f32 %v3402, %v3850
        %v3915 = vmul.f32 %v3403, %v3851
        %v3916 = vmul.f32 %v3404, %v3852
        %v3917 = vmul.f32 %v3405, %v3853
        %v3918 = vmul.f32 %v3406, %v3854
        %v3919 = vmul.f32 %v3407, %v3855
        %v3920 = vmul.f32 %v3408, %v3856
        %v3921 = vmul.f32 %v3409, %v3857
        %v3922 = vmul.f32 %v3410, %v3858
        %v3923 = vmul.f32 %v3411, %v3859
        %v3924 = vmul.f32 %v3412, %v3860
        %v3925 = vmul.f32 %v3413, %v3861
        %v3926 = vmul.f32 %v3414, %v3862
        %v3927 = vmul.f32 %v3415, %v3863
        %v3928 = vmul.f32 %v3416, %v3864
        %v3929 = vmul.f32 %v3417, %v3865
        %v3930 = vmul.f32 %v3418, %v3866
        %v3931 = vmul.f32 %v3419, %v3867
        %v3932 = vmul.f32 %v3420, %v3868
        %v3933 = vmul.f32 %v3421, %v3869
        %v3934 = vmul.f32 %v3422, %v3870
        %v3935 = vmul.f32 %v3423, %v3871
        %v3936 = vmul.f32 %v3424, %v3872
        %v3937 = vmul.f32 %v3425, %v3873
        %v3938 = vmul.f32 %v3426, %v3874
        %v3939 = vmul.f32 %v3427, %v3875
        %v3940 = vmul.f32 %v3428, %v3876
        %v3941 = vmul.f32 %v3429, %v3877
        %v3942 = vmul.f32 %v3430, %v3878
        %v3943 = vmul.f32 %v3431, %v3879
        %v3944 = vmul.f32 %v3432, %v3880
        %v3945 = vmul.f32 %v3433, %v3881
        %v3946 = vmul.f32 %v3434, %v3882
        %v3947 = vmul.f32 %v3435, %v3883
        %v3948 = vmul.f32 %v3436, %v3884
        %v3949 = vmul.f32 %v3437, %v3885
        %v3950 = vmul.f32 %v3438, %v3886
        %v3951 = vmul.f32 %v3439, %v3887
        %v3952 = vmul.f32 %v3440, %v3888
        %v3953 = vmul.f32 %v3441, %v3889
        %v3954 = vmul.f32 %v3442, %v3890
        %v3955 = vmul.f32 %v3443, %v3891
        %v3956 = vmul.f32 %v3444, %v3892
        %v3957 = vmul.f32 %v3445, %v3893
        %v3958 = vmul.f32 %v3446, %v3894
        %v3959 = vmul.f32 %v3447, %v3895
        %v3960 = vmul.f32 %v3448, %v3896
        %v3961 = vmul.f32 %v3449, %v3897
        %v3962 = vmul.f32 %v3450, %v3898
        %v3963 = vmul.f32 %v3451, %v3899
        %v3964 = vmul.f32 %v3452, %v3900
        %v3965 = vmul.f32 %v3453, %v3901
        %v3966 = vmul.f32 %v3454, %v3902
        %v3967 = vmul.f32 %v3455, %v3903
        %v3968 = vmul.f32 %v3456, %v3904
        %v3969 = vmul.f32 %v3457, %v3905
        %v3970 = vmul.f32 %v3458, %v3906
        %v3971 = vmul.f32 %v3459, %v3907
        %v3972 = vpack.c.bf16 %v3910, %v3908
        %v3973 = vpack.c.bf16 %v3911, %v3909
        %v3974 = vpack.c.bf16 %v3914, %v3912
        %v3975 = vpack.c.bf16 %v3915, %v3913
        %v3976 = vpack.c.bf16 %v3918, %v3916
        %v3977 = vpack.c.bf16 %v3919, %v3917
        %v3978 = vpack.c.bf16 %v3922, %v3920
        %v3979 = vpack.c.bf16 %v3923, %v3921
        %v3980 = vpack.c.bf16 %v3926, %v3924
        %v3981 = vpack.c.bf16 %v3927, %v3925
        %v3982 = vpack.c.bf16 %v3930, %v3928
        %v3983 = vpack.c.bf16 %v3931, %v3929
        %v3984 = vpack.c.bf16 %v3934, %v3932
        %v3985 = vpack.c.bf16 %v3935, %v3933
        %v3986 = vpack.c.bf16 %v3938, %v3936
        %v3987 = vpack.c.bf16 %v3939, %v3937
        %v3988 = vpack.c.bf16 %v3942, %v3940
        %v3989 = vpack.c.bf16 %v3943, %v3941
        %v3990 = vpack.c.bf16 %v3946, %v3944
        %v3991 = vpack.c.bf16 %v3947, %v3945
        %v3992 = vpack.c.bf16 %v3950, %v3948
        %v3993 = vpack.c.bf16 %v3951, %v3949
        %v3994 = vpack.c.bf16 %v3954, %v3952
        %v3995 = vpack.c.bf16 %v3955, %v3953
        %v3996 = vpack.c.bf16 %v3958, %v3956
        %v3997 = vpack.c.bf16 %v3959, %v3957
        %v3998 = vpack.c.bf16 %v3962, %v3960
        %v3999 = vpack.c.bf16 %v3963, %v3961
        %v4000 = vpack.c.bf16 %v3966, %v3964
        %v4001 = vpack.c.bf16 %v3967, %v3965
        %v4002 = vpack.c.bf16 %v3970, %v3968
        %v4003 = vpack.c.bf16 %v3971, %v3969
        %v4004 = vld [vmem:[#allocation11] sm:$0xf]
        %v4005 = vld [vmem:[#allocation11 + $0x4] sm:$0xf]
        %v4006 = vld [vmem:[#allocation11 + $0x8] sm:$0xf]
        %v4007 = vld [vmem:[#allocation11 + $0xc] sm:$0xf]
        %v4008 = vld [vmem:[#allocation11 + $0x10] sm:$0xf]
        %v4009 = vld [vmem:[#allocation11 + $0x14] sm:$0xf]
        %v4010 = vld [vmem:[#allocation11 + $0x18] sm:$0xf]
        %v4011 = vld [vmem:[#allocation11 + $0x1c] sm:$0xf]
        %v4012 = vld [vmem:[#allocation11 + $0x20] sm:$0xf]
        %v4013 = vld [vmem:[#allocation11 + $0x24] sm:$0xf]
        %v4014 = vld [vmem:[#allocation11 + $0x28] sm:$0xf]
        %v4015 = vld [vmem:[#allocation11 + $0x2c] sm:$0xf]
        %v4016 = vld [vmem:[#allocation11 + $0x30] sm:$0xf]
        %v4017 = vld [vmem:[#allocation11 + $0x34] sm:$0xf]
        %v4018 = vld [vmem:[#allocation11 + $0x38] sm:$0xf]
        %v4019 = vld [vmem:[#allocation11 + $0x3c] sm:$0xf]
        %v4020 = vld [vmem:[#allocation11 + $0x40] sm:$0xf]
        %v4021 = vld [vmem:[#allocation11 + $0x44] sm:$0xf]
        %v4022 = vld [vmem:[#allocation11 + $0x48] sm:$0xf]
        %v4023 = vld [vmem:[#allocation11 + $0x4c] sm:$0xf]
        %v4024 = vld [vmem:[#allocation11 + $0x50] sm:$0xf]
        %v4025 = vld [vmem:[#allocation11 + $0x54] sm:$0xf]
        %v4026 = vld [vmem:[#allocation11 + $0x58] sm:$0xf]
        %v4027 = vld [vmem:[#allocation11 + $0x5c] sm:$0xf]
        %v4028 = vld [vmem:[#allocation11 + $0x60] sm:$0xf]
        %v4029 = vld [vmem:[#allocation11 + $0x64] sm:$0xf]
        %v4030 = vld [vmem:[#allocation11 + $0x68] sm:$0xf]
        %v4031 = vld [vmem:[#allocation11 + $0x6c] sm:$0xf]
        %v4032 = vld [vmem:[#allocation11 + $0x70] sm:$0xf]
        %v4033 = vld [vmem:[#allocation11 + $0x74] sm:$0xf]
        %v4034 = vld [vmem:[#allocation11 + $0x78] sm:$0xf]
        %v4035 = vld [vmem:[#allocation11 + $0x7c] sm:$0xf]
        %v4036 = vld [vmem:[%s6] sm:$0x1]
        %v4038 = vperm.slane %v4036, 0
        %v4072 = vunpack.c.l.b16 %v4004
        %v4073 = vunpack.c.l.b16 %v4005
        %v4074 = vunpack.c.l.b16 %v4006
        %v4075 = vunpack.c.l.b16 %v4007
        %v4076 = vunpack.c.l.b16 %v4008
        %v4077 = vunpack.c.l.b16 %v4009
        %v4078 = vunpack.c.l.b16 %v4010
        %v4079 = vunpack.c.l.b16 %v4011
        %v4080 = vunpack.c.l.b16 %v4012
        %v4081 = vunpack.c.l.b16 %v4013
        %v4082 = vunpack.c.l.b16 %v4014
        %v4083 = vunpack.c.l.b16 %v4015
        %v4084 = vunpack.c.l.b16 %v4016
        %v4085 = vunpack.c.l.b16 %v4017
        %v4086 = vunpack.c.l.b16 %v4018
        %v4087 = vunpack.c.l.b16 %v4019
        %v4088 = vunpack.c.l.b16 %v4020
        %v4089 = vunpack.c.l.b16 %v4021
        %v4090 = vunpack.c.l.b16 %v4022
        %v4091 = vunpack.c.l.b16 %v4023
        %v4092 = vunpack.c.l.b16 %v4024
        %v4093 = vunpack.c.l.b16 %v4025
        %v4094 = vunpack.c.l.b16 %v4026
        %v4095 = vunpack.c.l.b16 %v4027
        %v4096 = vunpack.c.l.b16 %v4028
        %v4097 = vunpack.c.l.b16 %v4029
        %v4098 = vunpack.c.l.b16 %v4030
        %v4099 = vunpack.c.l.b16 %v4031
        %v4100 = vunpack.c.l.b16 %v4032
        %v4101 = vunpack.c.l.b16 %v4033
        %v4102 = vunpack.c.l.b16 %v4034
        %v4103 = vunpack.c.l.b16 %v4035
        %v4104 = vpack.c.b16 %v4073, %v4072
        %v4105 = vpack.c.b16 %v4075, %v4074
        %v4106 = vpack.c.b16 %v4077, %v4076
        %v4107 = vpack.c.b16 %v4079, %v4078
        %v4108 = vpack.c.b16 %v4081, %v4080
        %v4109 = vpack.c.b16 %v4083, %v4082
        %v4110 = vpack.c.b16 %v4085, %v4084
        %v4111 = vpack.c.b16 %v4087, %v4086
        %v4112 = vpack.c.b16 %v4089, %v4088
        %v4113 = vpack.c.b16 %v4091, %v4090
        %v4114 = vpack.c.b16 %v4093, %v4092
        %v4115 = vpack.c.b16 %v4095, %v4094
        %v4116 = vpack.c.b16 %v4097, %v4096
        %v4117 = vpack.c.b16 %v4099, %v4098
        %v4118 = vpack.c.b16 %v4101, %v4100
        %v4119 = vpack.c.b16 %v4103, %v4102
        %4136 = vmatpush.bf16.msra.mxu0 %v4111
        %4137 = vmatpush.bf16.msra.mxu0 %v4110
        %4138 = vmatpush.bf16.msra.mxu0 %v4109
        %4139 = vmatpush.bf16.msra.mxu0 %v4108
        %4140 = vmatpush.bf16.msra.mxu0 %v4107
        %4141 = vmatpush.bf16.msra.mxu0 %v4106
        %4142 = vmatpush.bf16.msra.mxu0 %v4105
        %4143 = vmatpush.bf16.msra.mxu0 %v4104
        %4144 = vmatmul.bf16.gmra.mxu0 %v3972
        %v4145 = vpop.f32.mrf.mxu0
        %v4146 = vadd.f32 %v4038, %v4145
        %v4147 = vpop.f32.mrf.mxu0
        %v4148 = vadd.f32 %v4038, %v4147
        %4149 = vmatmul.bf16.gmra.mxu0 %v3974
        %v4150 = vpop.f32.mrf.mxu0
        %v4151 = vadd.f32 %v4038, %v4150
        %v4152 = vpop.f32.mrf.mxu0
        %v4153 = vadd.f32 %v4038, %v4152
        %4154 = vmatmul.bf16.gmra.mxu0 %v3976
        %v4155 = vpop.f32.mrf.mxu0
        %v4156 = vadd.f32 %v4038, %v4155
        %v4157 = vpop.f32.mrf.mxu0
        %v4158 = vadd.f32 %v4038, %v4157
        %4159 = vmatmul.bf16.gmra.mxu0 %v3978
        %v4160 = vpop.f32.mrf.mxu0
        %v4161 = vadd.f32 %v4038, %v4160
        %v4162 = vpop.f32.mrf.mxu0
        %v4163 = vadd.f32 %v4038, %v4162
        %4164 = vmatmul.bf16.gmra.mxu0 %v3980
        %v4165 = vpop.f32.mrf.mxu0
        %v4166 = vadd.f32 %v4038, %v4165
        %v4167 = vpop.f32.mrf.mxu0
        %v4168 = vadd.f32 %v4038, %v4167
        %4169 = vmatmul.bf16.gmra.mxu0 %v3982
        %v4170 = vpop.f32.mrf.mxu0
        %v4171 = vadd.f32 %v4038, %v4170
        %v4172 = vpop.f32.mrf.mxu0
        %v4173 = vadd.f32 %v4038, %v4172
        %4174 = vmatmul.bf16.gmra.mxu0 %v3984
        %v4175 = vpop.f32.mrf.mxu0
        %v4176 = vadd.f32 %v4038, %v4175
        %v4177 = vpop.f32.mrf.mxu0
        %v4178 = vadd.f32 %v4038, %v4177
        %4179 = vmatmul.bf16.gmra.mxu0 %v3986
        %v4180 = vpop.f32.mrf.mxu0
        %v4181 = vadd.f32 %v4038, %v4180
        %v4182 = vpop.f32.mrf.mxu0
        %v4183 = vadd.f32 %v4038, %v4182
        %4184 = vmatmul.bf16.gmra.mxu0 %v3988
        %v4185 = vpop.f32.mrf.mxu0
        %v4186 = vadd.f32 %v4038, %v4185
        %v4187 = vpop.f32.mrf.mxu0
        %v4188 = vadd.f32 %v4038, %v4187
        %4189 = vmatmul.bf16.gmra.mxu0 %v3990
        %v4190 = vpop.f32.mrf.mxu0
        %v4191 = vadd.f32 %v4038, %v4190
        %v4192 = vpop.f32.mrf.mxu0
        %v4193 = vadd.f32 %v4038, %v4192
        %4194 = vmatmul.bf16.gmra.mxu0 %v3992
        %v4195 = vpop.f32.mrf.mxu0
        %v4196 = vadd.f32 %v4038, %v4195
        %v4197 = vpop.f32.mrf.mxu0
        %v4198 = vadd.f32 %v4038, %v4197
        %4199 = vmatmul.bf16.gmra.mxu0 %v3994
        %v4200 = vpop.f32.mrf.mxu0
        %v4201 = vadd.f32 %v4038, %v4200
        %v4202 = vpop.f32.mrf.mxu0
        %v4203 = vadd.f32 %v4038, %v4202
        %4204 = vmatmul.bf16.gmra.mxu0 %v3996
        %v4205 = vpop.f32.mrf.mxu0
        %v4206 = vadd.f32 %v4038, %v4205
        %v4207 = vpop.f32.mrf.mxu0
        %v4208 = vadd.f32 %v4038, %v4207
        %4209 = vmatmul.bf16.gmra.mxu0 %v3998
        %v4210 = vpop.f32.mrf.mxu0
        %v4211 = vadd.f32 %v4038, %v4210
        %v4212 = vpop.f32.mrf.mxu0
        %v4213 = vadd.f32 %v4038, %v4212
        %4214 = vmatmul.bf16.gmra.mxu0 %v4000
        %v4215 = vpop.f32.mrf.mxu0
        %v4216 = vadd.f32 %v4038, %v4215
        %v4217 = vpop.f32.mrf.mxu0
        %v4218 = vadd.f32 %v4038, %v4217
        %4219 = vmatmul.bf16.gmra.mxu0 %v4002
        %v4220 = vpop.f32.mrf.mxu0
        %v4221 = vadd.f32 %v4038, %v4220
        %v4222 = vpop.f32.mrf.mxu0
        %v4223 = vadd.f32 %v4038, %v4222
        %4224 = vdwg.mxu0
        %4225 = vmatpush.bf16.msra.mxu0 %v4119
        %4226 = vmatpush.bf16.msra.mxu0 %v4118
        %4227 = vmatpush.bf16.msra.mxu0 %v4117
        %4228 = vmatpush.bf16.msra.mxu0 %v4116
        %4229 = vmatpush.bf16.msra.mxu0 %v4115
        %4230 = vmatpush.bf16.msra.mxu0 %v4114
        %4231 = vmatpush.bf16.msra.mxu0 %v4113
        %4232 = vmatpush.bf16.msra.mxu0 %v4112
        %4233 = vmatmul.bf16.gmra.mxu0 %v3973
        %v4234 = vpop.f32.mrf.mxu0
        %v4235 = vadd.f32 %v4146, %v4234
        %v4236 = vpop.f32.mrf.mxu0
        %v4237 = vadd.f32 %v4148, %v4236
        %4238 = vmatmul.bf16.gmra.mxu0 %v3975
        %v4239 = vpop.f32.mrf.mxu0
        %v4240 = vadd.f32 %v4151, %v4239
        %v4241 = vpop.f32.mrf.mxu0
        %v4242 = vadd.f32 %v4153, %v4241
        %4243 = vmatmul.bf16.gmra.mxu0 %v3977
        %v4244 = vpop.f32.mrf.mxu0
        %v4245 = vadd.f32 %v4156, %v4244
        %v4246 = vpop.f32.mrf.mxu0
        %v4247 = vadd.f32 %v4158, %v4246
        %4248 = vmatmul.bf16.gmra.mxu0 %v3979
        %v4249 = vpop.f32.mrf.mxu0
        %v4250 = vadd.f32 %v4161, %v4249
        %v4251 = vpop.f32.mrf.mxu0
        %v4252 = vadd.f32 %v4163, %v4251
        %4253 = vmatmul.bf16.gmra.mxu0 %v3981
        %v4254 = vpop.f32.mrf.mxu0
        %v4255 = vadd.f32 %v4166, %v4254
        %v4256 = vpop.f32.mrf.mxu0
        %v4257 = vadd.f32 %v4168, %v4256
        %4258 = vmatmul.bf16.gmra.mxu0 %v3983
        %v4259 = vpop.f32.mrf.mxu0
        %v4260 = vadd.f32 %v4171, %v4259
        %v4261 = vpop.f32.mrf.mxu0
        %v4262 = vadd.f32 %v4173, %v4261
        %4263 = vmatmul.bf16.gmra.mxu0 %v3985
        %v4264 = vpop.f32.mrf.mxu0
        %v4265 = vadd.f32 %v4176, %v4264
        %v4266 = vpop.f32.mrf.mxu0
        %v4267 = vadd.f32 %v4178, %v4266
        %4268 = vmatmul.bf16.gmra.mxu0 %v3987
        %v4269 = vpop.f32.mrf.mxu0
        %v4270 = vadd.f32 %v4181, %v4269
        %v4271 = vpop.f32.mrf.mxu0
        %v4272 = vadd.f32 %v4183, %v4271
        %4273 = vmatmul.bf16.gmra.mxu0 %v3989
        %v4274 = vpop.f32.mrf.mxu0
        %v4275 = vadd.f32 %v4186, %v4274
        %v4276 = vpop.f32.mrf.mxu0
        %v4277 = vadd.f32 %v4188, %v4276
        %4278 = vmatmul.bf16.gmra.mxu0 %v3991
        %v4279 = vpop.f32.mrf.mxu0
        %v4280 = vadd.f32 %v4191, %v4279
        %v4281 = vpop.f32.mrf.mxu0
        %v4282 = vadd.f32 %v4193, %v4281
        %4283 = vmatmul.bf16.gmra.mxu0 %v3993
        %v4284 = vpop.f32.mrf.mxu0
        %v4285 = vadd.f32 %v4196, %v4284
        %v4286 = vpop.f32.mrf.mxu0
        %v4287 = vadd.f32 %v4198, %v4286
        %4288 = vmatmul.bf16.gmra.mxu0 %v3995
        %v4289 = vpop.f32.mrf.mxu0
        %v4290 = vadd.f32 %v4201, %v4289
        %v4291 = vpop.f32.mrf.mxu0
        %v4292 = vadd.f32 %v4203, %v4291
        %4293 = vmatmul.bf16.gmra.mxu0 %v3997
        %v4294 = vpop.f32.mrf.mxu0
        %v4295 = vadd.f32 %v4206, %v4294
        %v4296 = vpop.f32.mrf.mxu0
        %v4297 = vadd.f32 %v4208, %v4296
        %4298 = vmatmul.bf16.gmra.mxu0 %v3999
        %v4299 = vpop.f32.mrf.mxu0
        %v4300 = vadd.f32 %v4211, %v4299
        %v4301 = vpop.f32.mrf.mxu0
        %v4302 = vadd.f32 %v4213, %v4301
        %4303 = vmatmul.bf16.gmra.mxu0 %v4001
        %v4304 = vpop.f32.mrf.mxu0
        %v4305 = vadd.f32 %v4216, %v4304
        %v4306 = vpop.f32.mrf.mxu0
        %v4307 = vadd.f32 %v4218, %v4306
        %4308 = vmatmul.bf16.gmra.mxu0 %v4003
        %v4309 = vpop.f32.mrf.mxu0
        %v4310 = vadd.f32 %v4221, %v4309
        %v4311 = vpop.f32.mrf.mxu0
        %v4312 = vadd.f32 %v4223, %v4311
        %4313 = vdwg.mxu0
        %4314 = vst [vmem:[%s362] sm:$0xff] %v4235
        %4315 = vst [vmem:[%s362 + $0x8] sm:$0xff] %v4237
        %4316 = vst [vmem:[%s362 + $0x10] sm:$0xff] %v4240
        %4317 = vst [vmem:[%s362 + $0x18] sm:$0xff] %v4242
        %4318 = vst [vmem:[%s362 + $0x20] sm:$0xff] %v4245
        %4319 = vst [vmem:[%s362 + $0x28] sm:$0xff] %v4247
        %4320 = vst [vmem:[%s362 + $0x30] sm:$0xff] %v4250
        %4321 = vst [vmem:[%s362 + $0x38] sm:$0xff] %v4252
        %4322 = vst [vmem:[%s362 + $0x40] sm:$0xff] %v4255
        %4323 = vst [vmem:[%s362 + $0x48] sm:$0xff] %v4257
        %4324 = vst [vmem:[%s362 + $0x50] sm:$0xff] %v4260
        %4325 = vst [vmem:[%s362 + $0x58] sm:$0xff] %v4262
        %4326 = vst [vmem:[%s362 + $0x60] sm:$0xff] %v4265
        %4327 = vst [vmem:[%s362 + $0x68] sm:$0xff] %v4267
        %4328 = vst [vmem:[%s362 + $0x70] sm:$0xff] %v4270
        %4329 = vst [vmem:[%s362 + $0x78] sm:$0xff] %v4272
        %4330 = vst [vmem:[%s362 + $0x80] sm:$0xff] %v4275
        %4331 = vst [vmem:[%s362 + $0x88] sm:$0xff] %v4277
        %4332 = vst [vmem:[%s362 + $0x90] sm:$0xff] %v4280
        %4333 = vst [vmem:[%s362 + $0x98] sm:$0xff] %v4282
        %4334 = vst [vmem:[%s362 + $0xa0] sm:$0xff] %v4285
        %4335 = vst [vmem:[%s362 + $0xa8] sm:$0xff] %v4287
        %4336 = vst [vmem:[%s362 + $0xb0] sm:$0xff] %v4290
        %4337 = vst [vmem:[%s362 + $0xb8] sm:$0xff] %v4292
        %4338 = vst [vmem:[%s362 + $0xc0] sm:$0xff] %v4295
        %4339 = vst [vmem:[%s362 + $0xc8] sm:$0xff] %v4297
        %4340 = vst [vmem:[%s362 + $0xd0] sm:$0xff] %v4300
        %4341 = vst [vmem:[%s362 + $0xd8] sm:$0xff] %v4302
        %4342 = vst [vmem:[%s362 + $0xe0] sm:$0xff] %v4305
        %4343 = vst [vmem:[%s362 + $0xe8] sm:$0xff] %v4307
        %4344 = vst [vmem:[%s362 + $0xf0] sm:$0xff] %v4310
        %4345 = vst [vmem:[%s362 + $0xf8] sm:$0xff] %v4312
        %s4346 = sand.u32 %s186, 1
        %s4347 = scalar_lea.sflag [#allocation5], %s4346
        %s4348 = sand.u32 %s186, 1
        %s4349 = smul.addr %s4348, 256
        %s4350 = scalar_lea.vmem [#allocation12], %s4349
        // Predicated region
        $region69: #{tpu_custom_call.1} parent=47 // pred_check
          %p4351 = pneg %p196
        $region70: #{tpu_custom_call.1} parent=47 // pred_check_branch
          %4353 = sbr.rel (%p4351) target = $region72
        $region71: #{tpu_custom_call.1} parent=47 // pred_region
          %4355 = vsyncadd %s4347, 0
          %s4356 = smul.addr %s26, 32
          %s4357 = smul.addr %s4356, 8
          %s4358 = scalar_lea.hbm %s7, %s4357
          %s4359 = sshll.u32 %s4350, 4
          %s4360 = int_to_ptr.vmem [resolvable:$true] %s4359
          %s4361 = sshll.u32 %s4358, 4
          %s4362 = int_to_ptr.hbm [resolvable:$true] %s4361
          %4367 = dma.vmem_to_hbm [thread:$0]  %s4360, 4096, %s4362, %s4347, 128, 128, 8
        $region72: #{tpu_custom_call.1} parent=47 // pred_fallthru
          _
      $region48: #{tpu_custom_call.1} parent=5 // pred_fallthru
        _
      %p4368 = scmp.le.s32.totalorder 2, %s21
      // Predicated region
      $region73: #{tpu_custom_call.1} parent=5 // pred_check
        %p4369 = pneg %p4368
      $region74: #{tpu_custom_call.1} parent=5 // pred_check_branch
        %4371 = sbr.rel (%p4369) target = $region76
      $region75: #{tpu_custom_call.1} parent=5 // pred_region
        %s4372 = ssub.s32 %s21, 2
        // Predicated region
        $region77: #{tpu_custom_call.1} parent=75 // pred_check
          %p4373 = pneg %p202
        $region78: #{tpu_custom_call.1} parent=75 // pred_check_branch
          %4375 = sbr.rel (%p4373) target = $region80
        $region79: #{tpu_custom_call.1} parent=75 // pred_region
          %s4376 = sand.u32 %s187, 1
          %s4377 = scalar_lea.sflag [#allocation5], %s4376
          %s4378 = sand.u32 %s187, 1
          %s4379 = smul.addr %s4378, 256
          %s4380 = scalar_lea.vmem [#allocation12], %s4379
          %4382 = dma.done %s4377, 4096
        $region80: #{tpu_custom_call.1} parent=75 // pred_fallthru
          _
      $region76: #{tpu_custom_call.1} parent=5 // pred_fallthru
        _
    $region6: #{tpu_custom_call.1} parent=1 // loop_footer
      %s25 = sadd.s32 1, %s21
    $region7: #{tpu_custom_call.1} parent=1 // loop_footer_branch
      %20 = sbr.rel target = $region3
    $region8: #{tpu_custom_call.1} parent=1 // loop_exit
      _
    %4383 = vsyncpa [#allocation4], 1
    %s4384 = scalar_lea.sflag [#allocation4], 1
    %4385 = vsyncpa %s4384, 1
    %4386 = vsyncpa [#allocation7], 1
    %4387 = vsyncpa [#allocation10], 1
    %4388 = vsyncpa [#allocation5], 1
    %s4389 = scalar_lea.sflag [#allocation5], 1
    %4390 = vsyncpa %s4389, 1

</llo_original>
